<compile_context>
chip_gen: v7x
topology: tpu7x:2x2x1
jax: 0.10.0
libtpu: 0.0.40
codegen_flags: <defaults>
</compile_context>

<pallas_src>
import math
from functools import partial

import jax
import jax.numpy as jnp
from jax.experimental import pallas as pl
from jax.experimental.pallas import tpu as pltpu


# ----------------------------------------------------------------------------
# Constants
# ----------------------------------------------------------------------------
SR = 16000
N_FFT = 256
WIN = 256
HOP = 128
N_FREQ_USED = N_FFT // 2          # 128 (Nyquist bin has zero mel weight -> dropped)
N_MELS = 32                       # power of two (used as a lane-block shift)
LOG_EPS = 2.0 ** -24
PREEMPH = 0.97

D_MODEL = 64
N_HEADS = 4
HEAD_DIM = D_MODEL // N_HEADS
FFN_DIM = 128
N_LAYERS = 2
SUBSAMPLE = 4


# ----------------------------------------------------------------------------
# The single fused kernel (one batch element per grid step)
# ----------------------------------------------------------------------------
def _nemo_kernel(audio_ref, wdft_ref, melfb_ref,
                 wsub_ref, bsub_ref, lng_ref, lnb_ref,
                 wqkv_ref, bqkv_ref, wo_ref, bo_ref,
                 ffw1_ref, ffb1_ref, ffw2_ref, ffb2_ref,
                 lnfg_ref, lnfb_ref, o_ref,
                 *, t_frames, t_sub, n_layers, n_heads, head_dim):
    r8 = audio_ref.shape[1]                                   # frame-group rows (= t_sub + 1)

    # ------------------ preprocessor (frame-stacked layout) ------------------
    a = audio_ref[0]                                          # (r8, 4*HOP) f32
    y = a.astype(jnp.bfloat16)
    # First HOP samples of the *next* row (last row wraps to row 0: it only
    # feeds the one invalid frame, which is masked and never used).
    nxt = jnp.roll(a[:, :HOP], -1, axis=0).astype(jnp.bfloat16)

    powers = []
    for j in range(SUBSAMPLE):                                # static unroll
        lo = j * HOP
        if j < SUBSAMPLE - 1:
            fr = y[:, lo:lo + WIN]                            # lane-aligned (r8, WIN)
        else:
            fr = jnp.concatenate([y[:, lo:], nxt], axis=1)    # frame crossing a row
        # windowed DFT with pre-emphasis folded in; output = re(128) || im(128)
        spec = jnp.dot(fr, wdft_ref[...], preferred_element_type=jnp.float32)
        re = spec[:, :N_FREQ_USED]
        im = spec[:, N_FREQ_USED:]
        powers.append(re * re + im * im)                      # (r8, 128) f32
    power = jnp.concatenate(powers, axis=1)                   # (r8, 4*128)

    # block-diagonal mel filterbank keeps the frame-stacked layout: (r8, 4*32)
    mel = jnp.dot(power.astype(jnp.bfloat16), melfb_ref[...],
                  preferred_element_type=jnp.float32)
    logmel = jnp.log(mel + LOG_EPS)                           # (r8, 128) f32

    # per-feature normalization over the t_frames valid frames (unbiased var).
    # Element [r, l] is frame 4*r + (l >> log2(N_MELS)), mel feature l % N_MELS.
    # TODO(synk): NeMo normalizes over the per-sample valid length; full length assumed.
    row_i = jax.lax.broadcasted_iota(jnp.int32, logmel.shape, 0)
    lane_i = jax.lax.broadcasted_iota(jnp.int32, logmel.shape, 1)
    frame_i = SUBSAMPLE * row_i + jax.lax.shift_right_logical(
        lane_i, int(math.log2(N_MELS)))
    maskf = (frame_i < t_frames).astype(jnp.float32)

    def per_feature_total(v):
        # Sum the four 32-lane blocks of a (1, 128) vector; the result is the
        # per-feature total already tiled across all four blocks (broadcast-ready).
        u = v + pltpu.roll(v, 2 * N_MELS, axis=1)
        return u + pltpu.roll(u, N_MELS, axis=1)

    s = per_feature_total(jnp.sum(logmel * maskf, axis=0, keepdims=True))
    mean = s * (1.0 / t_frames)
    d = (logmel - mean) * maskf
    ssq = per_feature_total(jnp.sum(d * d, axis=0, keepdims=True))
    var = ssq * (1.0 / (t_frames - 1))
    x0 = (logmel - mean) * jax.lax.rsqrt(var + 1e-5)          # (r8, 128) f32

    # ------------------ simplified Conformer encoder -------------------------
    def layernorm(v, g, b):
        mu = jnp.mean(v, axis=-1, keepdims=True)
        va = jnp.mean((v - mu) ** 2, axis=-1, keepdims=True)
        return (v - mu) * jax.lax.rsqrt(va + 1e-5) * g + b

    def mm(u, w_bf16):                                        # bf16 MXU, f32 acc
        return jnp.dot(u.astype(jnp.bfloat16), w_bf16,
                       preferred_element_type=jnp.float32)

    def silu(v):
        return v * jax.nn.sigmoid(v)

    # frame-stacking subsample projection: x0 is already the lane-dense slab
    x = mm(x0, wsub_ref[...]) + bsub_ref[...]                 # (r8, D) f32

    # padded rows (>= t_sub) must never be attended to
    kcol = jax.lax.broadcasted_iota(jnp.int32, (r8, r8), 1)
    key_bias = jnp.where(kcol < t_sub, 0.0, -1e30)            # (r8, r8) f32

    d_model = n_heads * head_dim
    for l in range(n_layers):                                 # static unroll
        # ---- half-step FFN 1 ----
        yn = layernorm(x, lng_ref[l, 0], lnb_ref[l, 0])
        h = silu(mm(yn, ffw1_ref[l, 0]) + ffb1_ref[l, 0])
        x = x + 0.5 * (mm(h, ffw2_ref[l, 0]) + ffb2_ref[l, 0])

        # ---- multi-head self-attention (per-batch, fused QKV, one out-proj) ----
        yn = layernorm(x, lng_ref[l, 1], lnb_ref[l, 1])
        qkv = (mm(yn, wqkv_ref[l]) + bqkv_ref[l]).astype(jnp.bfloat16)   # (r8, 3D)
        heads = []
        for hi in range(n_heads):                             # static unroll
            qh = qkv[:, hi * head_dim:(hi + 1) * head_dim]    # scale folded in wqkv
            kh = qkv[:, d_model + hi * head_dim:d_model + (hi + 1) * head_dim]
            vh = qkv[:, 2 * d_model + hi * head_dim:2 * d_model + (hi + 1) * head_dim]
            sc = jax.lax.dot_general(qh, kh, (((1,), (1,)), ((), ())),
                                     preferred_element_type=jnp.float32)
            sc = sc + key_bias
            sc = sc - jnp.max(sc, axis=-1, keepdims=True)
            p = jnp.exp(sc)
            # approximate reciprocal (EUP) in the softmax denominator
            p = p * pl.reciprocal(jnp.sum(p, axis=-1, keepdims=True), approx=True)
            heads.append(jnp.dot(p.astype(jnp.bfloat16), vh,
                                 preferred_element_type=jnp.float32))
        ctx = jnp.concatenate(heads, axis=1)                  # (r8, D)
        x = x + mm(ctx, wo_ref[l]) + bo_ref[l]

        # TODO(synk): Conformer depthwise-conv module and relative positional
        # encoding omitted.

        # ---- half-step FFN 2 ----
        yn = layernorm(x, lng_ref[l, 2], lnb_ref[l, 2])
        h = silu(mm(yn, ffw1_ref[l, 1]) + ffb1_ref[l, 1])
        x = x + 0.5 * (mm(h, ffw2_ref[l, 1]) + ffb2_ref[l, 1])

    o_ref[0] = layernorm(x, lnfg_ref[...], lnfb_ref[...])[:t_sub]


def _fused_forward(audio_rows, params, preproc_weights, *, t_frames, t_sub):
    """audio_rows: (B, r8, 4*HOP) f32 -> encoder output (B, t_sub, D_MODEL) f32."""
    B, r8, row_len = audio_rows.shape
    wdft, melfb = preproc_weights
    weights = (wdft, melfb,
               params["w_sub"], params["b_sub"],
               params["ln_g"], params["ln_b"],
               params["wqkv"], params["bqkv"], params["wo"], params["bo"],
               params["ff_w1"], params["ff_b1"], params["ff_w2"], params["ff_b2"],
               params["ln_final_g"], params["ln_final_b"])

    def const_spec(w):        # full-array block, re-used (not re-fetched) per grid step
        return pl.BlockSpec(w.shape, lambda b, _nd=w.ndim: (0,) * _nd)

    kernel = partial(_nemo_kernel, t_frames=t_frames, t_sub=t_sub,
                     n_layers=N_LAYERS, n_heads=N_HEADS, head_dim=HEAD_DIM)
    return pl.pallas_call(
        kernel,
        out_shape=jax.ShapeDtypeStruct((B, t_sub, D_MODEL), jnp.float32),
        grid=(B,),
        in_specs=[pl.BlockSpec((1, r8, row_len), lambda b: (b, 0, 0))]
                 + [const_spec(w) for w in weights],
        out_specs=pl.BlockSpec((1, t_sub, D_MODEL), lambda b: (b, 0, 0)),
        compiler_params=pltpu.CompilerParams(
            dimension_semantics=("parallel",)),
    )(audio_rows, *weights)


# ----------------------------------------------------------------------------
# Static preprocessor weights (window + pre-emphasis folded into the DFT matrix)
# ----------------------------------------------------------------------------
def mel_filterbank(sr, n_fft, n_mels):
    # TODO(synk): Slaney area normalization of NeMo's FilterbankFeatures omitted.
    def hz_to_mel(f):
        return 2595.0 * jnp.log10(1.0 + f / 700.0)

    def mel_to_hz(m):
        return 700.0 * (10.0 ** (m / 2595.0) - 1.0)

    fmax = sr / 2.0
    mels = jnp.linspace(hz_to_mel(jnp.float32(0.0)), hz_to_mel(jnp.float32(fmax)),
                        n_mels + 2)
    hz = mel_to_hz(mels)
    freqs = jnp.linspace(0.0, fmax, n_fft // 2 + 1)
    fb = []
    for m in range(1, n_mels + 1):
        left, center, right = hz[m - 1], hz[m], hz[m + 1]
        up = (freqs - left) / (center - left)
        down = (right - freqs) / (right - center)
        fb.append(jnp.clip(jnp.minimum(up, down), 0.0, None))
    return jnp.stack(fb, axis=1).astype(jnp.float32)          # (n_freq, n_mels)


def make_preproc_weights():
    n = jnp.arange(N_FFT, dtype=jnp.float32)[:, None]
    k = jnp.arange(N_FREQ_USED, dtype=jnp.float32)[None, :]
    ang = 2.0 * jnp.pi * n * k / N_FFT
    dft = jnp.concatenate([jnp.cos(ang), -jnp.sin(ang)], axis=1)   # (256, 256) re||im
    window = 0.5 * (1.0 - jnp.cos(
        2.0 * jnp.pi * jnp.arange(WIN, dtype=jnp.float32) / WIN))  # periodic Hann
    wd = window[:, None] * dft                                     # window folded in
    # Fold pre-emphasis y[i] = x[i] - 0.97*x[i-1] into the per-frame weight:
    #   E[i] = wd[i] - 0.97*wd[i+1]  (i < WIN-1),   E[WIN-1] = wd[WIN-1].
    # Exact because the periodic Hann window has w[0] == 0, so the sample just
    # before each frame (and the y[0] = x[0] special case) contributes nothing.
    wdft = wd.at[:-1].add(-PREEMPH * wd[1:])                       # (256, 256)

    # Block-diagonal, frame-stacked mel filterbank: (4*128, 4*32).
    fb = mel_filterbank(SR, N_FFT, N_MELS)[:N_FREQ_USED]           # (128, 32)
    mb = jnp.zeros((SUBSAMPLE * N_FREQ_USED, SUBSAMPLE * N_MELS), jnp.float32)
    for j in range(SUBSAMPLE):
        mb = mb.at[j * N_FREQ_USED:(j + 1) * N_FREQ_USED,
                   j * N_MELS:(j + 1) * N_MELS].set(fb)
    return wdft.astype(jnp.bfloat16), mb.astype(jnp.bfloat16)


# ----------------------------------------------------------------------------
# Synthetic encoder parameters (packed / stacked / bf16-cast once)
# ----------------------------------------------------------------------------
def init_params(key):
    def nrm(k, shape, scale=0.02):
        return (scale * jax.random.normal(k, shape)).astype(jnp.float32)

    keys = iter(jax.random.split(key, 64))
    wqkv = jnp.stack([
        jnp.concatenate([nrm(next(keys), (D_MODEL, D_MODEL)) for _ in range(3)],
                        axis=1)
        for _ in range(N_LAYERS)])                              # (L, D, 3D)
    # fold the attention scale 1/sqrt(head_dim) into the Q output columns
    wqkv = wqkv.at[:, :, :D_MODEL].multiply(1.0 / math.sqrt(HEAD_DIM))
    wo = jnp.stack([nrm(next(keys), (D_MODEL, D_MODEL))
                    for _ in range(N_LAYERS)])                  # (L, D, D)
    ff_w1 = jnp.stack([jnp.stack([nrm(next(keys), (D_MODEL, FFN_DIM))
                                  for _ in range(2)])
                       for _ in range(N_LAYERS)])               # (L, 2, D, F)
    ff_w2 = jnp.stack([jnp.stack([nrm(next(keys), (FFN_DIM, D_MODEL))
                                  for _ in range(2)])
                       for _ in range(N_LAYERS)])               # (L, 2, F, D)
    w_sub = nrm(next(keys), (SUBSAMPLE * N_MELS, D_MODEL))      # (128, D)

    return {
        # MXU weights stored in bf16 once (no per-call host casting / padding).
        "w_sub": w_sub.astype(jnp.bfloat16),
        "wqkv": wqkv.astype(jnp.bfloat16),
        "wo": wo.astype(jnp.bfloat16),
        "ff_w1": ff_w1.astype(jnp.bfloat16),
        "ff_w2": ff_w2.astype(jnp.bfloat16),
        # Biases / layernorm params stay f32 (VPU / EUP math is f32).
        "b_sub": jnp.zeros((1, D_MODEL), jnp.float32),
        "bqkv": jnp.zeros((N_LAYERS, 1, 3 * D_MODEL), jnp.float32),
        "bo": jnp.zeros((N_LAYERS, 1, D_MODEL), jnp.float32),
        "ff_b1": jnp.zeros((N_LAYERS, 2, 1, FFN_DIM), jnp.float32),
        "ff_b2": jnp.zeros((N_LAYERS, 2, 1, D_MODEL), jnp.float32),
        "ln_g": jnp.ones((N_LAYERS, 3, 1, D_MODEL), jnp.float32),
        "ln_b": jnp.zeros((N_LAYERS, 3, 1, D_MODEL), jnp.float32),
        "ln_final_g": jnp.ones((1, D_MODEL), jnp.float32),
        "ln_final_b": jnp.zeros((1, D_MODEL), jnp.float32),
    }


# ----------------------------------------------------------------------------
# Forward pass (mirrors NeMoEncoder.forward) — a single Pallas launch
# ----------------------------------------------------------------------------
def nemo_encoder_forward(audio, length, params, preproc_weights):
    """(audio (B, S), fractional length (B,)) -> encoder output (B, T_sub, D)."""
    B, S = audio.shape
    assert WIN == 2 * HOP and S % (SUBSAMPLE * HOP) == 0
    length_samples = (length * S).astype(jnp.int32)             # == .long() in torch

    T = 1 + (S - WIN) // HOP                                     # valid STFT frames
    t_sub = T // SUBSAMPLE                                       # encoder frames

    # valid spectrogram length (as NeMo computes it).
    # TODO(synk): length-dependent masking (featnorm & attention) omitted.
    _spec_len = 1 + jnp.maximum(length_samples - WIN, 0) // HOP

    # Contiguous reshape only — no overlapping-frame gather, no pre-emphasis op:
    # framing, pre-emphasis (folded into the DFT weight), STFT, mel, norm and
    # frame-stack subsampling all happen inside the fused kernel.
    # TODO(synk): STFT center-padding of the NeMo featurizer omitted.
    audio_rows = audio.reshape(B, S // (SUBSAMPLE * HOP), SUBSAMPLE * HOP)

    # NeMo emits (B, D, T) and the module transposes back to (B, T, D);
    # the transpose pair cancels, so return (B, T_sub, D) directly.
    return _fused_forward(audio_rows, params, preproc_weights,
                          t_frames=T, t_sub=t_sub)


# ----------------------------------------------------------------------------
if __name__ == "__main__":
    key = jax.random.PRNGKey(0)
    k_audio, k_params = jax.random.split(key)

    B, S = 2, 4096
    audio = jax.random.normal(k_audio, (B, S), dtype=jnp.float32)
    length = jnp.array([1.0, 0.75], dtype=jnp.float32)          # fractional lengths

    params = init_params(k_params)
    preproc_weights = make_preproc_weights()

    fwd = jax.jit(nemo_encoder_forward)
    out = fwd(audio, length, params, preproc_weights)
    out = jax.block_until_ready(out)

    T = 1 + (S - WIN) // HOP
    assert out.shape == (B, T // SUBSAMPLE, D_MODEL), out.shape
    assert bool(jnp.all(jnp.isfinite(out)))
    print("KERNEL_OK")
</pallas_src>

<mosaic_0001>
module attributes {stable_mosaic.version = 11 : i64} {
  func.func @_nemo_kernel(%arg0: i32, %arg1: memref<1x8x512xf32, #tpu.memory_space<vmem>>, %arg2: memref<256x256xbf16, #tpu.memory_space<vmem>>, %arg3: memref<512x128xbf16, #tpu.memory_space<vmem>>, %arg4: memref<128x64xbf16, #tpu.memory_space<vmem>>, %arg5: memref<1x64xf32, #tpu.memory_space<vmem>>, %arg6: memref<2x3x1x64xf32, #tpu.memory_space<vmem>>, %arg7: memref<2x3x1x64xf32, #tpu.memory_space<vmem>>, %arg8: memref<2x64x192xbf16, #tpu.memory_space<vmem>>, %arg9: memref<2x1x192xf32, #tpu.memory_space<vmem>>, %arg10: memref<2x64x64xbf16, #tpu.memory_space<vmem>>, %arg11: memref<2x1x64xf32, #tpu.memory_space<vmem>>, %arg12: memref<2x2x64x128xbf16, #tpu.memory_space<vmem>>, %arg13: memref<2x2x1x128xf32, #tpu.memory_space<vmem>>, %arg14: memref<2x2x128x64xbf16, #tpu.memory_space<vmem>>, %arg15: memref<2x2x1x64xf32, #tpu.memory_space<vmem>>, %arg16: memref<1x64xf32, #tpu.memory_space<vmem>>, %arg17: memref<1x64xf32, #tpu.memory_space<vmem>>, %arg18: memref<1x7x64xf32, #tpu.memory_space<vmem>>) attributes {dimension_semantics = [#tpu.dimension_semantics<parallel>], iteration_bounds = array<i64: 2>, scalar_prefetch = 0 : i64, scratch_operands = 0 : i64, tpu.core_type = #tpu.core_type<tc>, window_params = [{transform_indices = @transform_0, window_bounds = array<i64: 1, 8, 512>}, {pipeline_mode = #tpu.pipeline_mode<synchronous>, transform_indices = @transform_1, window_bounds = array<i64: 256, 256>}, {pipeline_mode = #tpu.pipeline_mode<synchronous>, transform_indices = @transform_2, window_bounds = array<i64: 512, 128>}, {pipeline_mode = #tpu.pipeline_mode<synchronous>, transform_indices = @transform_3, window_bounds = array<i64: 128, 64>}, {pipeline_mode = #tpu.pipeline_mode<synchronous>, transform_indices = @transform_4, window_bounds = array<i64: 1, 64>}, {pipeline_mode = #tpu.pipeline_mode<synchronous>, transform_indices = @transform_5, window_bounds = array<i64: 2, 3, 1, 64>}, {pipeline_mode = #tpu.pipeline_mode<synchronous>, transform_indices = @transform_6, window_bounds = array<i64: 2, 3, 1, 64>}, {pipeline_mode = #tpu.pipeline_mode<synchronous>, transform_indices = @transform_7, window_bounds = array<i64: 2, 64, 192>}, {pipeline_mode = #tpu.pipeline_mode<synchronous>, transform_indices = @transform_8, window_bounds = array<i64: 2, 1, 192>}, {pipeline_mode = #tpu.pipeline_mode<synchronous>, transform_indices = @transform_9, window_bounds = array<i64: 2, 64, 64>}, {pipeline_mode = #tpu.pipeline_mode<synchronous>, transform_indices = @transform_10, window_bounds = array<i64: 2, 1, 64>}, {pipeline_mode = #tpu.pipeline_mode<synchronous>, transform_indices = @transform_11, window_bounds = array<i64: 2, 2, 64, 128>}, {pipeline_mode = #tpu.pipeline_mode<synchronous>, transform_indices = @transform_12, window_bounds = array<i64: 2, 2, 1, 128>}, {pipeline_mode = #tpu.pipeline_mode<synchronous>, transform_indices = @transform_13, window_bounds = array<i64: 2, 2, 128, 64>}, {pipeline_mode = #tpu.pipeline_mode<synchronous>, transform_indices = @transform_14, window_bounds = array<i64: 2, 2, 1, 64>}, {pipeline_mode = #tpu.pipeline_mode<synchronous>, transform_indices = @transform_15, window_bounds = array<i64: 1, 64>}, {pipeline_mode = #tpu.pipeline_mode<synchronous>, transform_indices = @transform_16, window_bounds = array<i64: 1, 64>}, {transform_indices = @transform_17, window_bounds = array<i64: 1, 7, 64>}]} {
    %c0 = arith.constant 0 : index
    %c0_0 = arith.constant 0 : index
    %c0_1 = arith.constant 0 : index
    %0 = vector.load %arg1[%c0, %c0_0, %c0_1] : memref<1x8x512xf32, #tpu.memory_space<vmem>>, vector<1x8x512xf32>
    %1 = vector.shape_cast %0 : vector<1x8x512xf32> to vector<8x512xf32>
    %2 = arith.truncf %1 : vector<8x512xf32> to vector<8x512xbf16>
    %3 = vector.extract_strided_slice %1 {offsets = [0, 0], sizes = [8, 128], strides = [1, 1]} : vector<8x512xf32> to vector<8x128xf32>
    %4 = vector.extract_strided_slice %3 {offsets = [1, 0], sizes = [7, 128], strides = [1, 1]} : vector<8x128xf32> to vector<7x128xf32>
    %5 = vector.extract_strided_slice %3 {offsets = [0, 0], sizes = [1, 128], strides = [1, 1]} : vector<8x128xf32> to vector<1x128xf32>
    %6 = tpu.concatenate %4, %5 in 0 : vector<7x128xf32>, vector<1x128xf32> -> vector<8x128xf32>
    %7 = arith.truncf %6 : vector<8x128xf32> to vector<8x128xbf16>
    %8 = vector.extract_strided_slice %2 {offsets = [0, 0], sizes = [8, 256], strides = [1, 1]} : vector<8x512xbf16> to vector<8x256xbf16>
    %c0_2 = arith.constant 0 : index
    %c0_3 = arith.constant 0 : index
    %9 = vector.load %arg2[%c0_2, %c0_3] : memref<256x256xbf16, #tpu.memory_space<vmem>>, vector<256x256xbf16>
    %cst = arith.constant dense<0.000000e+00> : vector<8x256xf32>
    %10 = tpu.matmul %8, %9, %cst {dimension_numbers = #tpu.dot_dimension_numbers<[1], [0], [0], [1], [0, 0, 1, 1], [], []>} : vector<8x256xbf16>, vector<256x256xbf16>, vector<8x256xf32> -> vector<8x256xf32>
    %11 = vector.extract_strided_slice %10 {offsets = [0, 0], sizes = [8, 128], strides = [1, 1]} : vector<8x256xf32> to vector<8x128xf32>
    %12 = vector.extract_strided_slice %10 {offsets = [0, 128], sizes = [8, 128], strides = [1, 1]} : vector<8x256xf32> to vector<8x128xf32>
    %13 = arith.mulf %11, %11 : vector<8x128xf32>
    %14 = arith.mulf %12, %12 : vector<8x128xf32>
    %15 = arith.addf %13, %14 : vector<8x128xf32>
    %16 = vector.extract_strided_slice %2 {offsets = [0, 128], sizes = [8, 256], strides = [1, 1]} : vector<8x512xbf16> to vector<8x256xbf16>
    %c0_4 = arith.constant 0 : index
    %c0_5 = arith.constant 0 : index
    %17 = vector.load %arg2[%c0_4, %c0_5] : memref<256x256xbf16, #tpu.memory_space<vmem>>, vector<256x256xbf16>
    %cst_6 = arith.constant dense<0.000000e+00> : vector<8x256xf32>
    %18 = tpu.matmul %16, %17, %cst_6 {dimension_numbers = #tpu.dot_dimension_numbers<[1], [0], [0], [1], [0, 0, 1, 1], [], []>} : vector<8x256xbf16>, vector<256x256xbf16>, vector<8x256xf32> -> vector<8x256xf32>
    %19 = vector.extract_strided_slice %18 {offsets = [0, 0], sizes = [8, 128], strides = [1, 1]} : vector<8x256xf32> to vector<8x128xf32>
    %20 = vector.extract_strided_slice %18 {offsets = [0, 128], sizes = [8, 128], strides = [1, 1]} : vector<8x256xf32> to vector<8x128xf32>
    %21 = arith.mulf %19, %19 : vector<8x128xf32>
    %22 = arith.mulf %20, %20 : vector<8x128xf32>
    %23 = arith.addf %21, %22 : vector<8x128xf32>
    %24 = vector.extract_strided_slice %2 {offsets = [0, 256], sizes = [8, 256], strides = [1, 1]} : vector<8x512xbf16> to vector<8x256xbf16>
    %c0_7 = arith.constant 0 : index
    %c0_8 = arith.constant 0 : index
    %25 = vector.load %arg2[%c0_7, %c0_8] : memref<256x256xbf16, #tpu.memory_space<vmem>>, vector<256x256xbf16>
    %cst_9 = arith.constant dense<0.000000e+00> : vector<8x256xf32>
    %26 = tpu.matmul %24, %25, %cst_9 {dimension_numbers = #tpu.dot_dimension_numbers<[1], [0], [0], [1], [0, 0, 1, 1], [], []>} : vector<8x256xbf16>, vector<256x256xbf16>, vector<8x256xf32> -> vector<8x256xf32>
    %27 = vector.extract_strided_slice %26 {offsets = [0, 0], sizes = [8, 128], strides = [1, 1]} : vector<8x256xf32> to vector<8x128xf32>
    %28 = vector.extract_strided_slice %26 {offsets = [0, 128], sizes = [8, 128], strides = [1, 1]} : vector<8x256xf32> to vector<8x128xf32>
    %29 = arith.mulf %27, %27 : vector<8x128xf32>
    %30 = arith.mulf %28, %28 : vector<8x128xf32>
    %31 = arith.addf %29, %30 : vector<8x128xf32>
    %32 = vector.extract_strided_slice %2 {offsets = [0, 384], sizes = [8, 128], strides = [1, 1]} : vector<8x512xbf16> to vector<8x128xbf16>
    %33 = tpu.concatenate %32, %7 in 1 : vector<8x128xbf16>, vector<8x128xbf16> -> vector<8x256xbf16>
    %c0_10 = arith.constant 0 : index
    %c0_11 = arith.constant 0 : index
    %34 = vector.load %arg2[%c0_10, %c0_11] : memref<256x256xbf16, #tpu.memory_space<vmem>>, vector<256x256xbf16>
    %cst_12 = arith.constant dense<0.000000e+00> : vector<8x256xf32>
    %35 = tpu.matmul %33, %34, %cst_12 {dimension_numbers = #tpu.dot_dimension_numbers<[1], [0], [0], [1], [0, 0, 1, 1], [], []>} : vector<8x256xbf16>, vector<256x256xbf16>, vector<8x256xf32> -> vector<8x256xf32>
    %36 = vector.extract_strided_slice %35 {offsets = [0, 0], sizes = [8, 128], strides = [1, 1]} : vector<8x256xf32> to vector<8x128xf32>
    %37 = vector.extract_strided_slice %35 {offsets = [0, 128], sizes = [8, 128], strides = [1, 1]} : vector<8x256xf32> to vector<8x128xf32>
    %38 = arith.mulf %36, %36 : vector<8x128xf32>
    %39 = arith.mulf %37, %37 : vector<8x128xf32>
    %40 = arith.addf %38, %39 : vector<8x128xf32>
    %41 = tpu.concatenate %15, %23, %31, %40 in 1 : vector<8x128xf32>, vector<8x128xf32>, vector<8x128xf32>, vector<8x128xf32> -> vector<8x512xf32>
    %42 = arith.truncf %41 : vector<8x512xf32> to vector<8x512xbf16>
    %c0_13 = arith.constant 0 : index
    %c0_14 = arith.constant 0 : index
    %43 = vector.load %arg3[%c0_13, %c0_14] : memref<512x128xbf16, #tpu.memory_space<vmem>>, vector<512x128xbf16>
    %cst_15 = arith.constant dense<0.000000e+00> : vector<8x128xf32>
    %44 = tpu.matmul %42, %43, %cst_15 {dimension_numbers = #tpu.dot_dimension_numbers<[1], [0], [0], [1], [0, 0, 1, 1], [], []>} : vector<8x512xbf16>, vector<512x128xbf16>, vector<8x128xf32> -> vector<8x128xf32>
    %cst_16 = arith.constant 5.96046448E-8 : f32
    %45 = vector.broadcast %cst_16 : f32 to vector<8x128xf32>
    %46 = arith.addf %44, %45 : vector<8x128xf32>
    %47 = math.log %46 : vector<8x128xf32>
    %48 = tpu.iota {dimensions = array<i32: 0>} : vector<8x128xi32>
    %49 = tpu.iota {dimensions = array<i32: 1>} : vector<8x128xi32>
    %c4_i32 = arith.constant 4 : i32
    %50 = vector.broadcast %c4_i32 : i32 to vector<8x128xi32>
    %51 = arith.muli %50, %48 : vector<8x128xi32>
    %c5_i32 = arith.constant 5 : i32
    %52 = vector.broadcast %c5_i32 : i32 to vector<8x128xi32>
    %53 = arith.shrui %49, %52 : vector<8x128xi32>
    %54 = arith.addi %51, %53 : vector<8x128xi32>
    %c31_i32 = arith.constant 31 : i32
    %55 = vector.broadcast %c31_i32 : i32 to vector<8x128xi32>
    %56 = arith.cmpi slt, %54, %55 : vector<8x128xi32>
    %57 = arith.extui %56 : vector<8x128xi1> to vector<8x128xi32>
    %58 = arith.sitofp %57 : vector<8x128xi32> to vector<8x128xf32>
    %59 = arith.mulf %47, %58 : vector<8x128xf32>
    %cst_17 = arith.constant dense<0.000000e+00> : vector<128xf32>
    %60 = vector.multi_reduction <add>, %59, %cst_17 [0] : vector<8x128xf32> to vector<128xf32>
    %61 = vector.shape_cast %60 : vector<128xf32> to vector<1x128xf32>
    %c64_i32 = arith.constant 64 : i32
    %62 = tpu.dynamic_rotate %61 by %c64_i32 dim 1 : vector<1x128xf32>, i32 -> vector<1x128xf32>
    %63 = arith.addf %61, %62 : vector<1x128xf32>
    %c32_i32 = arith.constant 32 : i32
    %64 = tpu.dynamic_rotate %63 by %c32_i32 dim 1 : vector<1x128xf32>, i32 -> vector<1x128xf32>
    %65 = arith.addf %63, %64 : vector<1x128xf32>
    %cst_18 = arith.constant 0.0322580636 : f32
    %66 = vector.broadcast %cst_18 : f32 to vector<1x128xf32>
    %67 = arith.mulf %65, %66 : vector<1x128xf32>
    %68 = vector.broadcast %67 : vector<1x128xf32> to vector<8x128xf32>
    %69 = arith.subf %47, %68 : vector<8x128xf32>
    %70 = arith.mulf %69, %58 : vector<8x128xf32>
    %71 = arith.mulf %70, %70 : vector<8x128xf32>
    %cst_19 = arith.constant dense<0.000000e+00> : vector<128xf32>
    %72 = vector.multi_reduction <add>, %71, %cst_19 [0] : vector<8x128xf32> to vector<128xf32>
    %73 = vector.shape_cast %72 : vector<128xf32> to vector<1x128xf32>
    %c64_i32_20 = arith.constant 64 : i32
    %74 = tpu.dynamic_rotate %73 by %c64_i32_20 dim 1 : vector<1x128xf32>, i32 -> vector<1x128xf32>
    %75 = arith.addf %73, %74 : vector<1x128xf32>
    %c32_i32_21 = arith.constant 32 : i32
    %76 = tpu.dynamic_rotate %75 by %c32_i32_21 dim 1 : vector<1x128xf32>, i32 -> vector<1x128xf32>
    %77 = arith.addf %75, %76 : vector<1x128xf32>
    %cst_22 = arith.constant 0.0333333351 : f32
    %78 = vector.broadcast %cst_22 : f32 to vector<1x128xf32>
    %79 = arith.mulf %77, %78 : vector<1x128xf32>
    %80 = vector.broadcast %67 : vector<1x128xf32> to vector<8x128xf32>
    %81 = arith.subf %47, %80 : vector<8x128xf32>
    %cst_23 = arith.constant 9.99999974E-6 : f32
    %82 = vector.broadcast %cst_23 : f32 to vector<1x128xf32>
    %83 = arith.addf %79, %82 : vector<1x128xf32>
    %84 = math.rsqrt %83 : vector<1x128xf32>
    %85 = vector.broadcast %84 : vector<1x128xf32> to vector<8x128xf32>
    %86 = arith.mulf %81, %85 : vector<8x128xf32>
    %c0_24 = arith.constant 0 : index
    %c0_25 = arith.constant 0 : index
    %87 = vector.load %arg4[%c0_24, %c0_25] : memref<128x64xbf16, #tpu.memory_space<vmem>>, vector<128x64xbf16>
    %88 = arith.truncf %86 : vector<8x128xf32> to vector<8x128xbf16>
    %cst_26 = arith.constant dense<0.000000e+00> : vector<8x64xf32>
    %89 = tpu.matmul %88, %87, %cst_26 {dimension_numbers = #tpu.dot_dimension_numbers<[1], [0], [0], [1], [0, 0, 1, 1], [], []>} : vector<8x128xbf16>, vector<128x64xbf16>, vector<8x64xf32> -> vector<8x64xf32>
    %c0_27 = arith.constant 0 : index
    %c0_28 = arith.constant 0 : index
    %90 = vector.load %arg5[%c0_27, %c0_28] : memref<1x64xf32, #tpu.memory_space<vmem>>, vector<1x64xf32>
    %91 = vector.broadcast %90 : vector<1x64xf32> to vector<8x64xf32>
    %92 = arith.addf %89, %91 : vector<8x64xf32>
    %93 = tpu.iota {dimensions = array<i32: 1>} : vector<8x8xi32>
    %c7_i32 = arith.constant 7 : i32
    %94 = vector.broadcast %c7_i32 : i32 to vector<8x8xi32>
    %95 = arith.cmpi slt, %93, %94 : vector<8x8xi32>
    %cst_29 = arith.constant 0.000000e+00 : f32
    %cst_30 = arith.constant -1.000000e+30 : f32
    %96 = vector.broadcast %cst_29 : f32 to vector<8x8xf32>
    %97 = vector.broadcast %cst_30 : f32 to vector<8x8xf32>
    %98 = arith.select %95, %96, %97 : vector<8x8xi1>, vector<8x8xf32>
    %c0_31 = arith.constant 0 : index
    %c0_32 = arith.constant 0 : index
    %c0_33 = arith.constant 0 : index
    %c0_34 = arith.constant 0 : index
    %99 = vector.load %arg6[%c0_31, %c0_32, %c0_33, %c0_34] : memref<2x3x1x64xf32, #tpu.memory_space<vmem>>, vector<1x1x1x64xf32>
    %100 = vector.shape_cast %99 : vector<1x1x1x64xf32> to vector<1x64xf32>
    %c0_35 = arith.constant 0 : index
    %c0_36 = arith.constant 0 : index
    %c0_37 = arith.constant 0 : index
    %c0_38 = arith.constant 0 : index
    %101 = vector.load %arg7[%c0_35, %c0_36, %c0_37, %c0_38] : memref<2x3x1x64xf32, #tpu.memory_space<vmem>>, vector<1x1x1x64xf32>
    %102 = vector.shape_cast %101 : vector<1x1x1x64xf32> to vector<1x64xf32>
    %cst_39 = arith.constant dense<0.000000e+00> : vector<8xf32>
    %103 = vector.multi_reduction <add>, %92, %cst_39 [1] : vector<8x64xf32> to vector<8xf32>
    %104 = vector.shape_cast %103 : vector<8xf32> to vector<8x1xf32>
    %cst_40 = arith.constant 6.400000e+01 : f32
    %105 = vector.broadcast %cst_40 : f32 to vector<8x1xf32>
    %106 = arith.divf %104, %105 : vector<8x1xf32>
    %107 = vector.broadcast %106 : vector<8x1xf32> to vector<8x64xf32>
    %108 = arith.subf %92, %107 : vector<8x64xf32>
    %109 = arith.mulf %108, %108 : vector<8x64xf32>
    %cst_41 = arith.constant dense<0.000000e+00> : vector<8xf32>
    %110 = vector.multi_reduction <add>, %109, %cst_41 [1] : vector<8x64xf32> to vector<8xf32>
    %111 = vector.shape_cast %110 : vector<8xf32> to vector<8x1xf32>
    %cst_42 = arith.constant 6.400000e+01 : f32
    %112 = vector.broadcast %cst_42 : f32 to vector<8x1xf32>
    %113 = arith.divf %111, %112 : vector<8x1xf32>
    %114 = vector.broadcast %106 : vector<8x1xf32> to vector<8x64xf32>
    %115 = arith.subf %92, %114 : vector<8x64xf32>
    %cst_43 = arith.constant 9.99999974E-6 : f32
    %116 = vector.broadcast %cst_43 : f32 to vector<8x1xf32>
    %117 = arith.addf %113, %116 : vector<8x1xf32>
    %118 = math.rsqrt %117 : vector<8x1xf32>
    %119 = vector.broadcast %118 : vector<8x1xf32> to vector<8x64xf32>
    %120 = arith.mulf %115, %119 : vector<8x64xf32>
    %121 = vector.broadcast %100 : vector<1x64xf32> to vector<8x64xf32>
    %122 = arith.mulf %120, %121 : vector<8x64xf32>
    %123 = vector.broadcast %102 : vector<1x64xf32> to vector<8x64xf32>
    %124 = arith.addf %122, %123 : vector<8x64xf32>
    %c0_44 = arith.constant 0 : index
    %c0_45 = arith.constant 0 : index
    %c0_46 = arith.constant 0 : index
    %c0_47 = arith.constant 0 : index
    %125 = vector.load %arg12[%c0_44, %c0_45, %c0_46, %c0_47] : memref<2x2x64x128xbf16, #tpu.memory_space<vmem>>, vector<1x1x64x128xbf16>
    %126 = vector.shape_cast %125 : vector<1x1x64x128xbf16> to vector<64x128xbf16>
    %127 = arith.truncf %124 : vector<8x64xf32> to vector<8x64xbf16>
    %cst_48 = arith.constant dense<0.000000e+00> : vector<8x128xf32>
    %128 = tpu.matmul %127, %126, %cst_48 {dimension_numbers = #tpu.dot_dimension_numbers<[1], [0], [0], [1], [0, 0, 1, 1], [], []>} : vector<8x64xbf16>, vector<64x128xbf16>, vector<8x128xf32> -> vector<8x128xf32>
    %c0_49 = arith.constant 0 : index
    %c0_50 = arith.constant 0 : index
    %c0_51 = arith.constant 0 : index
    %c0_52 = arith.constant 0 : index
    %129 = vector.load %arg13[%c0_49, %c0_50, %c0_51, %c0_52] : memref<2x2x1x128xf32, #tpu.memory_space<vmem>>, vector<1x1x1x128xf32>
    %130 = vector.shape_cast %129 : vector<1x1x1x128xf32> to vector<1x128xf32>
    %131 = vector.broadcast %130 : vector<1x128xf32> to vector<8x128xf32>
    %132 = arith.addf %128, %131 : vector<8x128xf32>
    %133 = arith.negf %132 : vector<8x128xf32>
    %134 = math.exp %133 : vector<8x128xf32>
    %cst_53 = arith.constant 1.000000e+00 : f32
    %135 = vector.broadcast %cst_53 : f32 to vector<8x128xf32>
    %136 = arith.addf %135, %134 : vector<8x128xf32>
    %137 = arith.divf %135, %136 : vector<8x128xf32>
    %138 = arith.mulf %132, %137 : vector<8x128xf32>
    %c0_54 = arith.constant 0 : index
    %c0_55 = arith.constant 0 : index
    %c0_56 = arith.constant 0 : index
    %c0_57 = arith.constant 0 : index
    %139 = vector.load %arg14[%c0_54, %c0_55, %c0_56, %c0_57] : memref<2x2x128x64xbf16, #tpu.memory_space<vmem>>, vector<1x1x128x64xbf16>
    %140 = vector.shape_cast %139 : vector<1x1x128x64xbf16> to vector<128x64xbf16>
    %141 = arith.truncf %138 : vector<8x128xf32> to vector<8x128xbf16>
    %cst_58 = arith.constant dense<0.000000e+00> : vector<8x64xf32>
    %142 = tpu.matmul %141, %140, %cst_58 {dimension_numbers = #tpu.dot_dimension_numbers<[1], [0], [0], [1], [0, 0, 1, 1], [], []>} : vector<8x128xbf16>, vector<128x64xbf16>, vector<8x64xf32> -> vector<8x64xf32>
    %c0_59 = arith.constant 0 : index
    %c0_60 = arith.constant 0 : index
    %c0_61 = arith.constant 0 : index
    %c0_62 = arith.constant 0 : index
    %143 = vector.load %arg15[%c0_59, %c0_60, %c0_61, %c0_62] : memref<2x2x1x64xf32, #tpu.memory_space<vmem>>, vector<1x1x1x64xf32>
    %144 = vector.shape_cast %143 : vector<1x1x1x64xf32> to vector<1x64xf32>
    %145 = vector.broadcast %144 : vector<1x64xf32> to vector<8x64xf32>
    %146 = arith.addf %142, %145 : vector<8x64xf32>
    %cst_63 = arith.constant 5.000000e-01 : f32
    %147 = vector.broadcast %cst_63 : f32 to vector<8x64xf32>
    %148 = arith.mulf %147, %146 : vector<8x64xf32>
    %149 = arith.addf %92, %148 : vector<8x64xf32>
    %c0_64 = arith.constant 0 : index
    %c1 = arith.constant 1 : index
    %c0_65 = arith.constant 0 : index
    %c0_66 = arith.constant 0 : index
    %150 = vector.load %arg6[%c0_64, %c1, %c0_65, %c0_66] : memref<2x3x1x64xf32, #tpu.memory_space<vmem>>, vector<1x1x1x64xf32>
    %151 = vector.shape_cast %150 : vector<1x1x1x64xf32> to vector<1x64xf32>
    %c0_67 = arith.constant 0 : index
    %c1_68 = arith.constant 1 : index
    %c0_69 = arith.constant 0 : index
    %c0_70 = arith.constant 0 : index
    %152 = vector.load %arg7[%c0_67, %c1_68, %c0_69, %c0_70] : memref<2x3x1x64xf32, #tpu.memory_space<vmem>>, vector<1x1x1x64xf32>
    %153 = vector.shape_cast %152 : vector<1x1x1x64xf32> to vector<1x64xf32>
    %cst_71 = arith.constant dense<0.000000e+00> : vector<8xf32>
    %154 = vector.multi_reduction <add>, %149, %cst_71 [1] : vector<8x64xf32> to vector<8xf32>
    %155 = vector.shape_cast %154 : vector<8xf32> to vector<8x1xf32>
    %cst_72 = arith.constant 6.400000e+01 : f32
    %156 = vector.broadcast %cst_72 : f32 to vector<8x1xf32>
    %157 = arith.divf %155, %156 : vector<8x1xf32>
    %158 = vector.broadcast %157 : vector<8x1xf32> to vector<8x64xf32>
    %159 = arith.subf %149, %158 : vector<8x64xf32>
    %160 = arith.mulf %159, %159 : vector<8x64xf32>
    %cst_73 = arith.constant dense<0.000000e+00> : vector<8xf32>
    %161 = vector.multi_reduction <add>, %160, %cst_73 [1] : vector<8x64xf32> to vector<8xf32>
    %162 = vector.shape_cast %161 : vector<8xf32> to vector<8x1xf32>
    %cst_74 = arith.constant 6.400000e+01 : f32
    %163 = vector.broadcast %cst_74 : f32 to vector<8x1xf32>
    %164 = arith.divf %162, %163 : vector<8x1xf32>
    %165 = vector.broadcast %157 : vector<8x1xf32> to vector<8x64xf32>
    %166 = arith.subf %149, %165 : vector<8x64xf32>
    %cst_75 = arith.constant 9.99999974E-6 : f32
    %167 = vector.broadcast %cst_75 : f32 to vector<8x1xf32>
    %168 = arith.addf %164, %167 : vector<8x1xf32>
    %169 = math.rsqrt %168 : vector<8x1xf32>
    %170 = vector.broadcast %169 : vector<8x1xf32> to vector<8x64xf32>
    %171 = arith.mulf %166, %170 : vector<8x64xf32>
    %172 = vector.broadcast %151 : vector<1x64xf32> to vector<8x64xf32>
    %173 = arith.mulf %171, %172 : vector<8x64xf32>
    %174 = vector.broadcast %153 : vector<1x64xf32> to vector<8x64xf32>
    %175 = arith.addf %173, %174 : vector<8x64xf32>
    %c0_76 = arith.constant 0 : index
    %c0_77 = arith.constant 0 : index
    %c0_78 = arith.constant 0 : index
    %176 = vector.load %arg8[%c0_76, %c0_77, %c0_78] : memref<2x64x192xbf16, #tpu.memory_space<vmem>>, vector<1x64x192xbf16>
    %177 = vector.shape_cast %176 : vector<1x64x192xbf16> to vector<64x192xbf16>
    %178 = arith.truncf %175 : vector<8x64xf32> to vector<8x64xbf16>
    %cst_79 = arith.constant dense<0.000000e+00> : vector<8x192xf32>
    %179 = tpu.matmul %178, %177, %cst_79 {dimension_numbers = #tpu.dot_dimension_numbers<[1], [0], [0], [1], [0, 0, 1, 1], [], []>} : vector<8x64xbf16>, vector<64x192xbf16>, vector<8x192xf32> -> vector<8x192xf32>
    %c0_80 = arith.constant 0 : index
    %c0_81 = arith.constant 0 : index
    %c0_82 = arith.constant 0 : index
    %180 = vector.load %arg9[%c0_80, %c0_81, %c0_82] : memref<2x1x192xf32, #tpu.memory_space<vmem>>, vector<1x1x192xf32>
    %181 = vector.shape_cast %180 : vector<1x1x192xf32> to vector<1x192xf32>
    %182 = vector.broadcast %181 : vector<1x192xf32> to vector<8x192xf32>
    %183 = arith.addf %179, %182 : vector<8x192xf32>
    %184 = arith.truncf %183 : vector<8x192xf32> to vector<8x192xbf16>
    %185 = vector.extract_strided_slice %184 {offsets = [0, 0], sizes = [8, 16], strides = [1, 1]} : vector<8x192xbf16> to vector<8x16xbf16>
    %186 = vector.extract_strided_slice %184 {offsets = [0, 64], sizes = [8, 16], strides = [1, 1]} : vector<8x192xbf16> to vector<8x16xbf16>
    %187 = vector.extract_strided_slice %184 {offsets = [0, 128], sizes = [8, 16], strides = [1, 1]} : vector<8x192xbf16> to vector<8x16xbf16>
    %cst_83 = arith.constant dense<0.000000e+00> : vector<8x8xf32>
    %188 = tpu.matmul %185, %186, %cst_83 {dimension_numbers = #tpu.dot_dimension_numbers<[1], [1], [0], [0], [0, 0, 1, 0], [], []>} : vector<8x16xbf16>, vector<8x16xbf16>, vector<8x8xf32> -> vector<8x8xf32>
    %189 = arith.addf %188, %98 : vector<8x8xf32>
    %cst_84 = arith.constant dense<0xFF800000> : vector<8xf32>
    %190 = vector.multi_reduction <maximumf>, %189, %cst_84 [1] : vector<8x8xf32> to vector<8xf32>
    %191 = vector.shape_cast %190 : vector<8xf32> to vector<8x1xf32>
    %192 = vector.broadcast %191 : vector<8x1xf32> to vector<8x8xf32>
    %193 = arith.subf %189, %192 : vector<8x8xf32>
    %194 = math.exp %193 : vector<8x8xf32>
    %cst_85 = arith.constant dense<0.000000e+00> : vector<8xf32>
    %195 = vector.multi_reduction <add>, %194, %cst_85 [1] : vector<8x8xf32> to vector<8xf32>
    %196 = vector.shape_cast %195 : vector<8xf32> to vector<8x1xf32>
    %197 = tpu.reciprocal %196 {approx = true} : vector<8x1xf32> -> vector<8x1xf32>
    %198 = vector.broadcast %197 : vector<8x1xf32> to vector<8x8xf32>
    %199 = arith.mulf %194, %198 : vector<8x8xf32>
    %200 = arith.truncf %199 : vector<8x8xf32> to vector<8x8xbf16>
    %cst_86 = arith.constant dense<0.000000e+00> : vector<8x16xf32>
    %201 = tpu.matmul %200, %187, %cst_86 {dimension_numbers = #tpu.dot_dimension_numbers<[1], [0], [0], [1], [0, 0, 1, 1], [], []>} : vector<8x8xbf16>, vector<8x16xbf16>, vector<8x16xf32> -> vector<8x16xf32>
    %202 = vector.extract_strided_slice %184 {offsets = [0, 16], sizes = [8, 16], strides = [1, 1]} : vector<8x192xbf16> to vector<8x16xbf16>
    %203 = vector.extract_strided_slice %184 {offsets = [0, 80], sizes = [8, 16], strides = [1, 1]} : vector<8x192xbf16> to vector<8x16xbf16>
    %204 = vector.extract_strided_slice %184 {offsets = [0, 144], sizes = [8, 16], strides = [1, 1]} : vector<8x192xbf16> to vector<8x16xbf16>
    %cst_87 = arith.constant dense<0.000000e+00> : vector<8x8xf32>
    %205 = tpu.matmul %202, %203, %cst_87 {dimension_numbers = #tpu.dot_dimension_numbers<[1], [1], [0], [0], [0, 0, 1, 0], [], []>} : vector<8x16xbf16>, vector<8x16xbf16>, vector<8x8xf32> -> vector<8x8xf32>
    %206 = arith.addf %205, %98 : vector<8x8xf32>
    %cst_88 = arith.constant dense<0xFF800000> : vector<8xf32>
    %207 = vector.multi_reduction <maximumf>, %206, %cst_88 [1] : vector<8x8xf32> to vector<8xf32>
    %208 = vector.shape_cast %207 : vector<8xf32> to vector<8x1xf32>
    %209 = vector.broadcast %208 : vector<8x1xf32> to vector<8x8xf32>
    %210 = arith.subf %206, %209 : vector<8x8xf32>
    %211 = math.exp %210 : vector<8x8xf32>
    %cst_89 = arith.constant dense<0.000000e+00> : vector<8xf32>
    %212 = vector.multi_reduction <add>, %211, %cst_89 [1] : vector<8x8xf32> to vector<8xf32>
    %213 = vector.shape_cast %212 : vector<8xf32> to vector<8x1xf32>
    %214 = tpu.reciprocal %213 {approx = true} : vector<8x1xf32> -> vector<8x1xf32>
    %215 = vector.broadcast %214 : vector<8x1xf32> to vector<8x8xf32>
    %216 = arith.mulf %211, %215 : vector<8x8xf32>
    %217 = arith.truncf %216 : vector<8x8xf32> to vector<8x8xbf16>
    %cst_90 = arith.constant dense<0.000000e+00> : vector<8x16xf32>
    %218 = tpu.matmul %217, %204, %cst_90 {dimension_numbers = #tpu.dot_dimension_numbers<[1], [0], [0], [1], [0, 0, 1, 1], [], []>} : vector<8x8xbf16>, vector<8x16xbf16>, vector<8x16xf32> -> vector<8x16xf32>
    %219 = vector.extract_strided_slice %184 {offsets = [0, 32], sizes = [8, 16], strides = [1, 1]} : vector<8x192xbf16> to vector<8x16xbf16>
    %220 = vector.extract_strided_slice %184 {offsets = [0, 96], sizes = [8, 16], strides = [1, 1]} : vector<8x192xbf16> to vector<8x16xbf16>
    %221 = vector.extract_strided_slice %184 {offsets = [0, 160], sizes = [8, 16], strides = [1, 1]} : vector<8x192xbf16> to vector<8x16xbf16>
    %cst_91 = arith.constant dense<0.000000e+00> : vector<8x8xf32>
    %222 = tpu.matmul %219, %220, %cst_91 {dimension_numbers = #tpu.dot_dimension_numbers<[1], [1], [0], [0], [0, 0, 1, 0], [], []>} : vector<8x16xbf16>, vector<8x16xbf16>, vector<8x8xf32> -> vector<8x8xf32>
    %223 = arith.addf %222, %98 : vector<8x8xf32>
    %cst_92 = arith.constant dense<0xFF800000> : vector<8xf32>
    %224 = vector.multi_reduction <maximumf>, %223, %cst_92 [1] : vector<8x8xf32> to vector<8xf32>
    %225 = vector.shape_cast %224 : vector<8xf32> to vector<8x1xf32>
    %226 = vector.broadcast %225 : vector<8x1xf32> to vector<8x8xf32>
    %227 = arith.subf %223, %226 : vector<8x8xf32>
    %228 = math.exp %227 : vector<8x8xf32>
    %cst_93 = arith.constant dense<0.000000e+00> : vector<8xf32>
    %229 = vector.multi_reduction <add>, %228, %cst_93 [1] : vector<8x8xf32> to vector<8xf32>
    %230 = vector.shape_cast %229 : vector<8xf32> to vector<8x1xf32>
    %231 = tpu.reciprocal %230 {approx = true} : vector<8x1xf32> -> vector<8x1xf32>
    %232 = vector.broadcast %231 : vector<8x1xf32> to vector<8x8xf32>
    %233 = arith.mulf %228, %232 : vector<8x8xf32>
    %234 = arith.truncf %233 : vector<8x8xf32> to vector<8x8xbf16>
    %cst_94 = arith.constant dense<0.000000e+00> : vector<8x16xf32>
    %235 = tpu.matmul %234, %221, %cst_94 {dimension_numbers = #tpu.dot_dimension_numbers<[1], [0], [0], [1], [0, 0, 1, 1], [], []>} : vector<8x8xbf16>, vector<8x16xbf16>, vector<8x16xf32> -> vector<8x16xf32>
    %236 = vector.extract_strided_slice %184 {offsets = [0, 48], sizes = [8, 16], strides = [1, 1]} : vector<8x192xbf16> to vector<8x16xbf16>
    %237 = vector.extract_strided_slice %184 {offsets = [0, 112], sizes = [8, 16], strides = [1, 1]} : vector<8x192xbf16> to vector<8x16xbf16>
    %238 = vector.extract_strided_slice %184 {offsets = [0, 176], sizes = [8, 16], strides = [1, 1]} : vector<8x192xbf16> to vector<8x16xbf16>
    %cst_95 = arith.constant dense<0.000000e+00> : vector<8x8xf32>
    %239 = tpu.matmul %236, %237, %cst_95 {dimension_numbers = #tpu.dot_dimension_numbers<[1], [1], [0], [0], [0, 0, 1, 0], [], []>} : vector<8x16xbf16>, vector<8x16xbf16>, vector<8x8xf32> -> vector<8x8xf32>
    %240 = arith.addf %239, %98 : vector<8x8xf32>
    %cst_96 = arith.constant dense<0xFF800000> : vector<8xf32>
    %241 = vector.multi_reduction <maximumf>, %240, %cst_96 [1] : vector<8x8xf32> to vector<8xf32>
    %242 = vector.shape_cast %241 : vector<8xf32> to vector<8x1xf32>
    %243 = vector.broadcast %242 : vector<8x1xf32> to vector<8x8xf32>
    %244 = arith.subf %240, %243 : vector<8x8xf32>
    %245 = math.exp %244 : vector<8x8xf32>
    %cst_97 = arith.constant dense<0.000000e+00> : vector<8xf32>
    %246 = vector.multi_reduction <add>, %245, %cst_97 [1] : vector<8x8xf32> to vector<8xf32>
    %247 = vector.shape_cast %246 : vector<8xf32> to vector<8x1xf32>
    %248 = tpu.reciprocal %247 {approx = true} : vector<8x1xf32> -> vector<8x1xf32>
    %249 = vector.broadcast %248 : vector<8x1xf32> to vector<8x8xf32>
    %250 = arith.mulf %245, %249 : vector<8x8xf32>
    %251 = arith.truncf %250 : vector<8x8xf32> to vector<8x8xbf16>
    %cst_98 = arith.constant dense<0.000000e+00> : vector<8x16xf32>
    %252 = tpu.matmul %251, %238, %cst_98 {dimension_numbers = #tpu.dot_dimension_numbers<[1], [0], [0], [1], [0, 0, 1, 1], [], []>} : vector<8x8xbf16>, vector<8x16xbf16>, vector<8x16xf32> -> vector<8x16xf32>
    %253 = tpu.concatenate %201, %218, %235, %252 in 1 : vector<8x16xf32>, vector<8x16xf32>, vector<8x16xf32>, vector<8x16xf32> -> vector<8x64xf32>
    %c0_99 = arith.constant 0 : index
    %c0_100 = arith.constant 0 : index
    %c0_101 = arith.constant 0 : index
    %254 = vector.load %arg10[%c0_99, %c0_100, %c0_101] : memref<2x64x64xbf16, #tpu.memory_space<vmem>>, vector<1x64x64xbf16>
    %255 = vector.shape_cast %254 : vector<1x64x64xbf16> to vector<64x64xbf16>
    %256 = arith.truncf %253 : vector<8x64xf32> to vector<8x64xbf16>
    %cst_102 = arith.constant dense<0.000000e+00> : vector<8x64xf32>
    %257 = tpu.matmul %256, %255, %cst_102 {dimension_numbers = #tpu.dot_dimension_numbers<[1], [0], [0], [1], [0, 0, 1, 1], [], []>} : vector<8x64xbf16>, vector<64x64xbf16>, vector<8x64xf32> -> vector<8x64xf32>
    %258 = arith.addf %149, %257 : vector<8x64xf32>
    %c0_103 = arith.constant 0 : index
    %c0_104 = arith.constant 0 : index
    %c0_105 = arith.constant 0 : index
    %259 = vector.load %arg11[%c0_103, %c0_104, %c0_105] : memref<2x1x64xf32, #tpu.memory_space<vmem>>, vector<1x1x64xf32>
    %260 = vector.shape_cast %259 : vector<1x1x64xf32> to vector<1x64xf32>
    %261 = vector.broadcast %260 : vector<1x64xf32> to vector<8x64xf32>
    %262 = arith.addf %258, %261 : vector<8x64xf32>
    %c0_106 = arith.constant 0 : index
    %c2 = arith.constant 2 : index
    %c0_107 = arith.constant 0 : index
    %c0_108 = arith.constant 0 : index
    %263 = vector.load %arg6[%c0_106, %c2, %c0_107, %c0_108] : memref<2x3x1x64xf32, #tpu.memory_space<vmem>>, vector<1x1x1x64xf32>
    %264 = vector.shape_cast %263 : vector<1x1x1x64xf32> to vector<1x64xf32>
    %c0_109 = arith.constant 0 : index
    %c2_110 = arith.constant 2 : index
    %c0_111 = arith.constant 0 : index
    %c0_112 = arith.constant 0 : index
    %265 = vector.load %arg7[%c0_109, %c2_110, %c0_111, %c0_112] : memref<2x3x1x64xf32, #tpu.memory_space<vmem>>, vector<1x1x1x64xf32>
    %266 = vector.shape_cast %265 : vector<1x1x1x64xf32> to vector<1x64xf32>
    %cst_113 = arith.constant dense<0.000000e+00> : vector<8xf32>
    %267 = vector.multi_reduction <add>, %262, %cst_113 [1] : vector<8x64xf32> to vector<8xf32>
    %268 = vector.shape_cast %267 : vector<8xf32> to vector<8x1xf32>
    %cst_114 = arith.constant 6.400000e+01 : f32
    %269 = vector.broadcast %cst_114 : f32 to vector<8x1xf32>
    %270 = arith.divf %268, %269 : vector<8x1xf32>
    %271 = vector.broadcast %270 : vector<8x1xf32> to vector<8x64xf32>
    %272 = arith.subf %262, %271 : vector<8x64xf32>
    %273 = arith.mulf %272, %272 : vector<8x64xf32>
    %cst_115 = arith.constant dense<0.000000e+00> : vector<8xf32>
    %274 = vector.multi_reduction <add>, %273, %cst_115 [1] : vector<8x64xf32> to vector<8xf32>
    %275 = vector.shape_cast %274 : vector<8xf32> to vector<8x1xf32>
    %cst_116 = arith.constant 6.400000e+01 : f32
    %276 = vector.broadcast %cst_116 : f32 to vector<8x1xf32>
    %277 = arith.divf %275, %276 : vector<8x1xf32>
    %278 = vector.broadcast %270 : vector<8x1xf32> to vector<8x64xf32>
    %279 = arith.subf %262, %278 : vector<8x64xf32>
    %cst_117 = arith.constant 9.99999974E-6 : f32
    %280 = vector.broadcast %cst_117 : f32 to vector<8x1xf32>
    %281 = arith.addf %277, %280 : vector<8x1xf32>
    %282 = math.rsqrt %281 : vector<8x1xf32>
    %283 = vector.broadcast %282 : vector<8x1xf32> to vector<8x64xf32>
    %284 = arith.mulf %279, %283 : vector<8x64xf32>
    %285 = vector.broadcast %264 : vector<1x64xf32> to vector<8x64xf32>
    %286 = arith.mulf %284, %285 : vector<8x64xf32>
    %287 = vector.broadcast %266 : vector<1x64xf32> to vector<8x64xf32>
    %288 = arith.addf %286, %287 : vector<8x64xf32>
    %c0_118 = arith.constant 0 : index
    %c1_119 = arith.constant 1 : index
    %c0_120 = arith.constant 0 : index
    %c0_121 = arith.constant 0 : index
    %289 = vector.load %arg12[%c0_118, %c1_119, %c0_120, %c0_121] : memref<2x2x64x128xbf16, #tpu.memory_space<vmem>>, vector<1x1x64x128xbf16>
    %290 = vector.shape_cast %289 : vector<1x1x64x128xbf16> to vector<64x128xbf16>
    %291 = arith.truncf %288 : vector<8x64xf32> to vector<8x64xbf16>
    %cst_122 = arith.constant dense<0.000000e+00> : vector<8x128xf32>
    %292 = tpu.matmul %291, %290, %cst_122 {dimension_numbers = #tpu.dot_dimension_numbers<[1], [0], [0], [1], [0, 0, 1, 1], [], []>} : vector<8x64xbf16>, vector<64x128xbf16>, vector<8x128xf32> -> vector<8x128xf32>
    %c0_123 = arith.constant 0 : index
    %c1_124 = arith.constant 1 : index
    %c0_125 = arith.constant 0 : index
    %c0_126 = arith.constant 0 : index
    %293 = vector.load %arg13[%c0_123, %c1_124, %c0_125, %c0_126] : memref<2x2x1x128xf32, #tpu.memory_space<vmem>>, vector<1x1x1x128xf32>
    %294 = vector.shape_cast %293 : vector<1x1x1x128xf32> to vector<1x128xf32>
    %295 = vector.broadcast %294 : vector<1x128xf32> to vector<8x128xf32>
    %296 = arith.addf %292, %295 : vector<8x128xf32>
    %297 = arith.negf %296 : vector<8x128xf32>
    %298 = math.exp %297 : vector<8x128xf32>
    %cst_127 = arith.constant 1.000000e+00 : f32
    %299 = vector.broadcast %cst_127 : f32 to vector<8x128xf32>
    %300 = arith.addf %299, %298 : vector<8x128xf32>
    %301 = arith.divf %299, %300 : vector<8x128xf32>
    %302 = arith.mulf %296, %301 : vector<8x128xf32>
    %c0_128 = arith.constant 0 : index
    %c1_129 = arith.constant 1 : index
    %c0_130 = arith.constant 0 : index
    %c0_131 = arith.constant 0 : index
    %303 = vector.load %arg14[%c0_128, %c1_129, %c0_130, %c0_131] : memref<2x2x128x64xbf16, #tpu.memory_space<vmem>>, vector<1x1x128x64xbf16>
    %304 = vector.shape_cast %303 : vector<1x1x128x64xbf16> to vector<128x64xbf16>
    %305 = arith.truncf %302 : vector<8x128xf32> to vector<8x128xbf16>
    %cst_132 = arith.constant dense<0.000000e+00> : vector<8x64xf32>
    %306 = tpu.matmul %305, %304, %cst_132 {dimension_numbers = #tpu.dot_dimension_numbers<[1], [0], [0], [1], [0, 0, 1, 1], [], []>} : vector<8x128xbf16>, vector<128x64xbf16>, vector<8x64xf32> -> vector<8x64xf32>
    %c0_133 = arith.constant 0 : index
    %c1_134 = arith.constant 1 : index
    %c0_135 = arith.constant 0 : index
    %c0_136 = arith.constant 0 : index
    %307 = vector.load %arg15[%c0_133, %c1_134, %c0_135, %c0_136] : memref<2x2x1x64xf32, #tpu.memory_space<vmem>>, vector<1x1x1x64xf32>
    %308 = vector.shape_cast %307 : vector<1x1x1x64xf32> to vector<1x64xf32>
    %309 = vector.broadcast %308 : vector<1x64xf32> to vector<8x64xf32>
    %310 = arith.addf %306, %309 : vector<8x64xf32>
    %cst_137 = arith.constant 5.000000e-01 : f32
    %311 = vector.broadcast %cst_137 : f32 to vector<8x64xf32>
    %312 = arith.mulf %311, %310 : vector<8x64xf32>
    %313 = arith.addf %262, %312 : vector<8x64xf32>
    %c1_138 = arith.constant 1 : index
    %c0_139 = arith.constant 0 : index
    %c0_140 = arith.constant 0 : index
    %c0_141 = arith.constant 0 : index
    %314 = vector.load %arg6[%c1_138, %c0_139, %c0_140, %c0_141] : memref<2x3x1x64xf32, #tpu.memory_space<vmem>>, vector<1x1x1x64xf32>
    %315 = vector.shape_cast %314 : vector<1x1x1x64xf32> to vector<1x64xf32>
    %c1_142 = arith.constant 1 : index
    %c0_143 = arith.constant 0 : index
    %c0_144 = arith.constant 0 : index
    %c0_145 = arith.constant 0 : index
    %316 = vector.load %arg7[%c1_142, %c0_143, %c0_144, %c0_145] : memref<2x3x1x64xf32, #tpu.memory_space<vmem>>, vector<1x1x1x64xf32>
    %317 = vector.shape_cast %316 : vector<1x1x1x64xf32> to vector<1x64xf32>
    %cst_146 = arith.constant dense<0.000000e+00> : vector<8xf32>
    %318 = vector.multi_reduction <add>, %313, %cst_146 [1] : vector<8x64xf32> to vector<8xf32>
    %319 = vector.shape_cast %318 : vector<8xf32> to vector<8x1xf32>
    %cst_147 = arith.constant 6.400000e+01 : f32
    %320 = vector.broadcast %cst_147 : f32 to vector<8x1xf32>
    %321 = arith.divf %319, %320 : vector<8x1xf32>
    %322 = vector.broadcast %321 : vector<8x1xf32> to vector<8x64xf32>
    %323 = arith.subf %313, %322 : vector<8x64xf32>
    %324 = arith.mulf %323, %323 : vector<8x64xf32>
    %cst_148 = arith.constant dense<0.000000e+00> : vector<8xf32>
    %325 = vector.multi_reduction <add>, %324, %cst_148 [1] : vector<8x64xf32> to vector<8xf32>
    %326 = vector.shape_cast %325 : vector<8xf32> to vector<8x1xf32>
    %cst_149 = arith.constant 6.400000e+01 : f32
    %327 = vector.broadcast %cst_149 : f32 to vector<8x1xf32>
    %328 = arith.divf %326, %327 : vector<8x1xf32>
    %329 = vector.broadcast %321 : vector<8x1xf32> to vector<8x64xf32>
    %330 = arith.subf %313, %329 : vector<8x64xf32>
    %cst_150 = arith.constant 9.99999974E-6 : f32
    %331 = vector.broadcast %cst_150 : f32 to vector<8x1xf32>
    %332 = arith.addf %328, %331 : vector<8x1xf32>
    %333 = math.rsqrt %332 : vector<8x1xf32>
    %334 = vector.broadcast %333 : vector<8x1xf32> to vector<8x64xf32>
    %335 = arith.mulf %330, %334 : vector<8x64xf32>
    %336 = vector.broadcast %315 : vector<1x64xf32> to vector<8x64xf32>
    %337 = arith.mulf %335, %336 : vector<8x64xf32>
    %338 = vector.broadcast %317 : vector<1x64xf32> to vector<8x64xf32>
    %339 = arith.addf %337, %338 : vector<8x64xf32>
    %c1_151 = arith.constant 1 : index
    %c0_152 = arith.constant 0 : index
    %c0_153 = arith.constant 0 : index
    %c0_154 = arith.constant 0 : index
    %340 = vector.load %arg12[%c1_151, %c0_152, %c0_153, %c0_154] : memref<2x2x64x128xbf16, #tpu.memory_space<vmem>>, vector<1x1x64x128xbf16>
    %341 = vector.shape_cast %340 : vector<1x1x64x128xbf16> to vector<64x128xbf16>
    %342 = arith.truncf %339 : vector<8x64xf32> to vector<8x64xbf16>
    %cst_155 = arith.constant dense<0.000000e+00> : vector<8x128xf32>
    %343 = tpu.matmul %342, %341, %cst_155 {dimension_numbers = #tpu.dot_dimension_numbers<[1], [0], [0], [1], [0, 0, 1, 1], [], []>} : vector<8x64xbf16>, vector<64x128xbf16>, vector<8x128xf32> -> vector<8x128xf32>
    %c1_156 = arith.constant 1 : index
    %c0_157 = arith.constant 0 : index
    %c0_158 = arith.constant 0 : index
    %c0_159 = arith.constant 0 : index
    %344 = vector.load %arg13[%c1_156, %c0_157, %c0_158, %c0_159] : memref<2x2x1x128xf32, #tpu.memory_space<vmem>>, vector<1x1x1x128xf32>
    %345 = vector.shape_cast %344 : vector<1x1x1x128xf32> to vector<1x128xf32>
    %346 = vector.broadcast %345 : vector<1x128xf32> to vector<8x128xf32>
    %347 = arith.addf %343, %346 : vector<8x128xf32>
    %348 = arith.negf %347 : vector<8x128xf32>
    %349 = math.exp %348 : vector<8x128xf32>
    %cst_160 = arith.constant 1.000000e+00 : f32
    %350 = vector.broadcast %cst_160 : f32 to vector<8x128xf32>
    %351 = arith.addf %350, %349 : vector<8x128xf32>
    %352 = arith.divf %350, %351 : vector<8x128xf32>
    %353 = arith.mulf %347, %352 : vector<8x128xf32>
    %c1_161 = arith.constant 1 : index
    %c0_162 = arith.constant 0 : index
    %c0_163 = arith.constant 0 : index
    %c0_164 = arith.constant 0 : index
    %354 = vector.load %arg14[%c1_161, %c0_162, %c0_163, %c0_164] : memref<2x2x128x64xbf16, #tpu.memory_space<vmem>>, vector<1x1x128x64xbf16>
    %355 = vector.shape_cast %354 : vector<1x1x128x64xbf16> to vector<128x64xbf16>
    %356 = arith.truncf %353 : vector<8x128xf32> to vector<8x128xbf16>
    %cst_165 = arith.constant dense<0.000000e+00> : vector<8x64xf32>
    %357 = tpu.matmul %356, %355, %cst_165 {dimension_numbers = #tpu.dot_dimension_numbers<[1], [0], [0], [1], [0, 0, 1, 1], [], []>} : vector<8x128xbf16>, vector<128x64xbf16>, vector<8x64xf32> -> vector<8x64xf32>
    %c1_166 = arith.constant 1 : index
    %c0_167 = arith.constant 0 : index
    %c0_168 = arith.constant 0 : index
    %c0_169 = arith.constant 0 : index
    %358 = vector.load %arg15[%c1_166, %c0_167, %c0_168, %c0_169] : memref<2x2x1x64xf32, #tpu.memory_space<vmem>>, vector<1x1x1x64xf32>
    %359 = vector.shape_cast %358 : vector<1x1x1x64xf32> to vector<1x64xf32>
    %360 = vector.broadcast %359 : vector<1x64xf32> to vector<8x64xf32>
    %361 = arith.addf %357, %360 : vector<8x64xf32>
    %cst_170 = arith.constant 5.000000e-01 : f32
    %362 = vector.broadcast %cst_170 : f32 to vector<8x64xf32>
    %363 = arith.mulf %362, %361 : vector<8x64xf32>
    %364 = arith.addf %313, %363 : vector<8x64xf32>
    %c1_171 = arith.constant 1 : index
    %c1_172 = arith.constant 1 : index
    %c0_173 = arith.constant 0 : index
    %c0_174 = arith.constant 0 : index
    %365 = vector.load %arg6[%c1_171, %c1_172, %c0_173, %c0_174] : memref<2x3x1x64xf32, #tpu.memory_space<vmem>>, vector<1x1x1x64xf32>
    %366 = vector.shape_cast %365 : vector<1x1x1x64xf32> to vector<1x64xf32>
    %c1_175 = arith.constant 1 : index
    %c1_176 = arith.constant 1 : index
    %c0_177 = arith.constant 0 : index
    %c0_178 = arith.constant 0 : index
    %367 = vector.load %arg7[%c1_175, %c1_176, %c0_177, %c0_178] : memref<2x3x1x64xf32, #tpu.memory_space<vmem>>, vector<1x1x1x64xf32>
    %368 = vector.shape_cast %367 : vector<1x1x1x64xf32> to vector<1x64xf32>
    %cst_179 = arith.constant dense<0.000000e+00> : vector<8xf32>
    %369 = vector.multi_reduction <add>, %364, %cst_179 [1] : vector<8x64xf32> to vector<8xf32>
    %370 = vector.shape_cast %369 : vector<8xf32> to vector<8x1xf32>
    %cst_180 = arith.constant 6.400000e+01 : f32
    %371 = vector.broadcast %cst_180 : f32 to vector<8x1xf32>
    %372 = arith.divf %370, %371 : vector<8x1xf32>
    %373 = vector.broadcast %372 : vector<8x1xf32> to vector<8x64xf32>
    %374 = arith.subf %364, %373 : vector<8x64xf32>
    %375 = arith.mulf %374, %374 : vector<8x64xf32>
    %cst_181 = arith.constant dense<0.000000e+00> : vector<8xf32>
    %376 = vector.multi_reduction <add>, %375, %cst_181 [1] : vector<8x64xf32> to vector<8xf32>
    %377 = vector.shape_cast %376 : vector<8xf32> to vector<8x1xf32>
    %cst_182 = arith.constant 6.400000e+01 : f32
    %378 = vector.broadcast %cst_182 : f32 to vector<8x1xf32>
    %379 = arith.divf %377, %378 : vector<8x1xf32>
    %380 = vector.broadcast %372 : vector<8x1xf32> to vector<8x64xf32>
    %381 = arith.subf %364, %380 : vector<8x64xf32>
    %cst_183 = arith.constant 9.99999974E-6 : f32
    %382 = vector.broadcast %cst_183 : f32 to vector<8x1xf32>
    %383 = arith.addf %379, %382 : vector<8x1xf32>
    %384 = math.rsqrt %383 : vector<8x1xf32>
    %385 = vector.broadcast %384 : vector<8x1xf32> to vector<8x64xf32>
    %386 = arith.mulf %381, %385 : vector<8x64xf32>
    %387 = vector.broadcast %366 : vector<1x64xf32> to vector<8x64xf32>
    %388 = arith.mulf %386, %387 : vector<8x64xf32>
    %389 = vector.broadcast %368 : vector<1x64xf32> to vector<8x64xf32>
    %390 = arith.addf %388, %389 : vector<8x64xf32>
    %c1_184 = arith.constant 1 : index
    %c0_185 = arith.constant 0 : index
    %c0_186 = arith.constant 0 : index
    %391 = vector.load %arg8[%c1_184, %c0_185, %c0_186] : memref<2x64x192xbf16, #tpu.memory_space<vmem>>, vector<1x64x192xbf16>
    %392 = vector.shape_cast %391 : vector<1x64x192xbf16> to vector<64x192xbf16>
    %393 = arith.truncf %390 : vector<8x64xf32> to vector<8x64xbf16>
    %cst_187 = arith.constant dense<0.000000e+00> : vector<8x192xf32>
    %394 = tpu.matmul %393, %392, %cst_187 {dimension_numbers = #tpu.dot_dimension_numbers<[1], [0], [0], [1], [0, 0, 1, 1], [], []>} : vector<8x64xbf16>, vector<64x192xbf16>, vector<8x192xf32> -> vector<8x192xf32>
    %c1_188 = arith.constant 1 : index
    %c0_189 = arith.constant 0 : index
    %c0_190 = arith.constant 0 : index
    %395 = vector.load %arg9[%c1_188, %c0_189, %c0_190] : memref<2x1x192xf32, #tpu.memory_space<vmem>>, vector<1x1x192xf32>
    %396 = vector.shape_cast %395 : vector<1x1x192xf32> to vector<1x192xf32>
    %397 = vector.broadcast %396 : vector<1x192xf32> to vector<8x192xf32>
    %398 = arith.addf %394, %397 : vector<8x192xf32>
    %399 = arith.truncf %398 : vector<8x192xf32> to vector<8x192xbf16>
    %400 = vector.extract_strided_slice %399 {offsets = [0, 0], sizes = [8, 16], strides = [1, 1]} : vector<8x192xbf16> to vector<8x16xbf16>
    %401 = vector.extract_strided_slice %399 {offsets = [0, 64], sizes = [8, 16], strides = [1, 1]} : vector<8x192xbf16> to vector<8x16xbf16>
    %402 = vector.extract_strided_slice %399 {offsets = [0, 128], sizes = [8, 16], strides = [1, 1]} : vector<8x192xbf16> to vector<8x16xbf16>
    %cst_191 = arith.constant dense<0.000000e+00> : vector<8x8xf32>
    %403 = tpu.matmul %400, %401, %cst_191 {dimension_numbers = #tpu.dot_dimension_numbers<[1], [1], [0], [0], [0, 0, 1, 0], [], []>} : vector<8x16xbf16>, vector<8x16xbf16>, vector<8x8xf32> -> vector<8x8xf32>
    %404 = arith.addf %403, %98 : vector<8x8xf32>
    %cst_192 = arith.constant dense<0xFF800000> : vector<8xf32>
    %405 = vector.multi_reduction <maximumf>, %404, %cst_192 [1] : vector<8x8xf32> to vector<8xf32>
    %406 = vector.shape_cast %405 : vector<8xf32> to vector<8x1xf32>
    %407 = vector.broadcast %406 : vector<8x1xf32> to vector<8x8xf32>
    %408 = arith.subf %404, %407 : vector<8x8xf32>
    %409 = math.exp %408 : vector<8x8xf32>
    %cst_193 = arith.constant dense<0.000000e+00> : vector<8xf32>
    %410 = vector.multi_reduction <add>, %409, %cst_193 [1] : vector<8x8xf32> to vector<8xf32>
    %411 = vector.shape_cast %410 : vector<8xf32> to vector<8x1xf32>
    %412 = tpu.reciprocal %411 {approx = true} : vector<8x1xf32> -> vector<8x1xf32>
    %413 = vector.broadcast %412 : vector<8x1xf32> to vector<8x8xf32>
    %414 = arith.mulf %409, %413 : vector<8x8xf32>
    %415 = arith.truncf %414 : vector<8x8xf32> to vector<8x8xbf16>
    %cst_194 = arith.constant dense<0.000000e+00> : vector<8x16xf32>
    %416 = tpu.matmul %415, %402, %cst_194 {dimension_numbers = #tpu.dot_dimension_numbers<[1], [0], [0], [1], [0, 0, 1, 1], [], []>} : vector<8x8xbf16>, vector<8x16xbf16>, vector<8x16xf32> -> vector<8x16xf32>
    %417 = vector.extract_strided_slice %399 {offsets = [0, 16], sizes = [8, 16], strides = [1, 1]} : vector<8x192xbf16> to vector<8x16xbf16>
    %418 = vector.extract_strided_slice %399 {offsets = [0, 80], sizes = [8, 16], strides = [1, 1]} : vector<8x192xbf16> to vector<8x16xbf16>
    %419 = vector.extract_strided_slice %399 {offsets = [0, 144], sizes = [8, 16], strides = [1, 1]} : vector<8x192xbf16> to vector<8x16xbf16>
    %cst_195 = arith.constant dense<0.000000e+00> : vector<8x8xf32>
    %420 = tpu.matmul %417, %418, %cst_195 {dimension_numbers = #tpu.dot_dimension_numbers<[1], [1], [0], [0], [0, 0, 1, 0], [], []>} : vector<8x16xbf16>, vector<8x16xbf16>, vector<8x8xf32> -> vector<8x8xf32>
    %421 = arith.addf %420, %98 : vector<8x8xf32>
    %cst_196 = arith.constant dense<0xFF800000> : vector<8xf32>
    %422 = vector.multi_reduction <maximumf>, %421, %cst_196 [1] : vector<8x8xf32> to vector<8xf32>
    %423 = vector.shape_cast %422 : vector<8xf32> to vector<8x1xf32>
    %424 = vector.broadcast %423 : vector<8x1xf32> to vector<8x8xf32>
    %425 = arith.subf %421, %424 : vector<8x8xf32>
    %426 = math.exp %425 : vector<8x8xf32>
    %cst_197 = arith.constant dense<0.000000e+00> : vector<8xf32>
    %427 = vector.multi_reduction <add>, %426, %cst_197 [1] : vector<8x8xf32> to vector<8xf32>
    %428 = vector.shape_cast %427 : vector<8xf32> to vector<8x1xf32>
    %429 = tpu.reciprocal %428 {approx = true} : vector<8x1xf32> -> vector<8x1xf32>
    %430 = vector.broadcast %429 : vector<8x1xf32> to vector<8x8xf32>
    %431 = arith.mulf %426, %430 : vector<8x8xf32>
    %432 = arith.truncf %431 : vector<8x8xf32> to vector<8x8xbf16>
    %cst_198 = arith.constant dense<0.000000e+00> : vector<8x16xf32>
    %433 = tpu.matmul %432, %419, %cst_198 {dimension_numbers = #tpu.dot_dimension_numbers<[1], [0], [0], [1], [0, 0, 1, 1], [], []>} : vector<8x8xbf16>, vector<8x16xbf16>, vector<8x16xf32> -> vector<8x16xf32>
    %434 = vector.extract_strided_slice %399 {offsets = [0, 32], sizes = [8, 16], strides = [1, 1]} : vector<8x192xbf16> to vector<8x16xbf16>
    %435 = vector.extract_strided_slice %399 {offsets = [0, 96], sizes = [8, 16], strides = [1, 1]} : vector<8x192xbf16> to vector<8x16xbf16>
    %436 = vector.extract_strided_slice %399 {offsets = [0, 160], sizes = [8, 16], strides = [1, 1]} : vector<8x192xbf16> to vector<8x16xbf16>
    %cst_199 = arith.constant dense<0.000000e+00> : vector<8x8xf32>
    %437 = tpu.matmul %434, %435, %cst_199 {dimension_numbers = #tpu.dot_dimension_numbers<[1], [1], [0], [0], [0, 0, 1, 0], [], []>} : vector<8x16xbf16>, vector<8x16xbf16>, vector<8x8xf32> -> vector<8x8xf32>
    %438 = arith.addf %437, %98 : vector<8x8xf32>
    %cst_200 = arith.constant dense<0xFF800000> : vector<8xf32>
    %439 = vector.multi_reduction <maximumf>, %438, %cst_200 [1] : vector<8x8xf32> to vector<8xf32>
    %440 = vector.shape_cast %439 : vector<8xf32> to vector<8x1xf32>
    %441 = vector.broadcast %440 : vector<8x1xf32> to vector<8x8xf32>
    %442 = arith.subf %438, %441 : vector<8x8xf32>
    %443 = math.exp %442 : vector<8x8xf32>
    %cst_201 = arith.constant dense<0.000000e+00> : vector<8xf32>
    %444 = vector.multi_reduction <add>, %443, %cst_201 [1] : vector<8x8xf32> to vector<8xf32>
    %445 = vector.shape_cast %444 : vector<8xf32> to vector<8x1xf32>
    %446 = tpu.reciprocal %445 {approx = true} : vector<8x1xf32> -> vector<8x1xf32>
    %447 = vector.broadcast %446 : vector<8x1xf32> to vector<8x8xf32>
    %448 = arith.mulf %443, %447 : vector<8x8xf32>
    %449 = arith.truncf %448 : vector<8x8xf32> to vector<8x8xbf16>
    %cst_202 = arith.constant dense<0.000000e+00> : vector<8x16xf32>
    %450 = tpu.matmul %449, %436, %cst_202 {dimension_numbers = #tpu.dot_dimension_numbers<[1], [0], [0], [1], [0, 0, 1, 1], [], []>} : vector<8x8xbf16>, vector<8x16xbf16>, vector<8x16xf32> -> vector<8x16xf32>
    %451 = vector.extract_strided_slice %399 {offsets = [0, 48], sizes = [8, 16], strides = [1, 1]} : vector<8x192xbf16> to vector<8x16xbf16>
    %452 = vector.extract_strided_slice %399 {offsets = [0, 112], sizes = [8, 16], strides = [1, 1]} : vector<8x192xbf16> to vector<8x16xbf16>
    %453 = vector.extract_strided_slice %399 {offsets = [0, 176], sizes = [8, 16], strides = [1, 1]} : vector<8x192xbf16> to vector<8x16xbf16>
    %cst_203 = arith.constant dense<0.000000e+00> : vector<8x8xf32>
    %454 = tpu.matmul %451, %452, %cst_203 {dimension_numbers = #tpu.dot_dimension_numbers<[1], [1], [0], [0], [0, 0, 1, 0], [], []>} : vector<8x16xbf16>, vector<8x16xbf16>, vector<8x8xf32> -> vector<8x8xf32>
    %455 = arith.addf %454, %98 : vector<8x8xf32>
    %cst_204 = arith.constant dense<0xFF800000> : vector<8xf32>
    %456 = vector.multi_reduction <maximumf>, %455, %cst_204 [1] : vector<8x8xf32> to vector<8xf32>
    %457 = vector.shape_cast %456 : vector<8xf32> to vector<8x1xf32>
    %458 = vector.broadcast %457 : vector<8x1xf32> to vector<8x8xf32>
    %459 = arith.subf %455, %458 : vector<8x8xf32>
    %460 = math.exp %459 : vector<8x8xf32>
    %cst_205 = arith.constant dense<0.000000e+00> : vector<8xf32>
    %461 = vector.multi_reduction <add>, %460, %cst_205 [1] : vector<8x8xf32> to vector<8xf32>
    %462 = vector.shape_cast %461 : vector<8xf32> to vector<8x1xf32>
    %463 = tpu.reciprocal %462 {approx = true} : vector<8x1xf32> -> vector<8x1xf32>
    %464 = vector.broadcast %463 : vector<8x1xf32> to vector<8x8xf32>
    %465 = arith.mulf %460, %464 : vector<8x8xf32>
    %466 = arith.truncf %465 : vector<8x8xf32> to vector<8x8xbf16>
    %cst_206 = arith.constant dense<0.000000e+00> : vector<8x16xf32>
    %467 = tpu.matmul %466, %453, %cst_206 {dimension_numbers = #tpu.dot_dimension_numbers<[1], [0], [0], [1], [0, 0, 1, 1], [], []>} : vector<8x8xbf16>, vector<8x16xbf16>, vector<8x16xf32> -> vector<8x16xf32>
    %468 = tpu.concatenate %416, %433, %450, %467 in 1 : vector<8x16xf32>, vector<8x16xf32>, vector<8x16xf32>, vector<8x16xf32> -> vector<8x64xf32>
    %c1_207 = arith.constant 1 : index
    %c0_208 = arith.constant 0 : index
    %c0_209 = arith.constant 0 : index
    %469 = vector.load %arg10[%c1_207, %c0_208, %c0_209] : memref<2x64x64xbf16, #tpu.memory_space<vmem>>, vector<1x64x64xbf16>
    %470 = vector.shape_cast %469 : vector<1x64x64xbf16> to vector<64x64xbf16>
    %471 = arith.truncf %468 : vector<8x64xf32> to vector<8x64xbf16>
    %cst_210 = arith.constant dense<0.000000e+00> : vector<8x64xf32>
    %472 = tpu.matmul %471, %470, %cst_210 {dimension_numbers = #tpu.dot_dimension_numbers<[1], [0], [0], [1], [0, 0, 1, 1], [], []>} : vector<8x64xbf16>, vector<64x64xbf16>, vector<8x64xf32> -> vector<8x64xf32>
    %473 = arith.addf %364, %472 : vector<8x64xf32>
    %c1_211 = arith.constant 1 : index
    %c0_212 = arith.constant 0 : index
    %c0_213 = arith.constant 0 : index
    %474 = vector.load %arg11[%c1_211, %c0_212, %c0_213] : memref<2x1x64xf32, #tpu.memory_space<vmem>>, vector<1x1x64xf32>
    %475 = vector.shape_cast %474 : vector<1x1x64xf32> to vector<1x64xf32>
    %476 = vector.broadcast %475 : vector<1x64xf32> to vector<8x64xf32>
    %477 = arith.addf %473, %476 : vector<8x64xf32>
    %c1_214 = arith.constant 1 : index
    %c2_215 = arith.constant 2 : index
    %c0_216 = arith.constant 0 : index
    %c0_217 = arith.constant 0 : index
    %478 = vector.load %arg6[%c1_214, %c2_215, %c0_216, %c0_217] : memref<2x3x1x64xf32, #tpu.memory_space<vmem>>, vector<1x1x1x64xf32>
    %479 = vector.shape_cast %478 : vector<1x1x1x64xf32> to vector<1x64xf32>
    %c1_218 = arith.constant 1 : index
    %c2_219 = arith.constant 2 : index
    %c0_220 = arith.constant 0 : index
    %c0_221 = arith.constant 0 : index
    %480 = vector.load %arg7[%c1_218, %c2_219, %c0_220, %c0_221] : memref<2x3x1x64xf32, #tpu.memory_space<vmem>>, vector<1x1x1x64xf32>
    %481 = vector.shape_cast %480 : vector<1x1x1x64xf32> to vector<1x64xf32>
    %cst_222 = arith.constant dense<0.000000e+00> : vector<8xf32>
    %482 = vector.multi_reduction <add>, %477, %cst_222 [1] : vector<8x64xf32> to vector<8xf32>
    %483 = vector.shape_cast %482 : vector<8xf32> to vector<8x1xf32>
    %cst_223 = arith.constant 6.400000e+01 : f32
    %484 = vector.broadcast %cst_223 : f32 to vector<8x1xf32>
    %485 = arith.divf %483, %484 : vector<8x1xf32>
    %486 = vector.broadcast %485 : vector<8x1xf32> to vector<8x64xf32>
    %487 = arith.subf %477, %486 : vector<8x64xf32>
    %488 = arith.mulf %487, %487 : vector<8x64xf32>
    %cst_224 = arith.constant dense<0.000000e+00> : vector<8xf32>
    %489 = vector.multi_reduction <add>, %488, %cst_224 [1] : vector<8x64xf32> to vector<8xf32>
    %490 = vector.shape_cast %489 : vector<8xf32> to vector<8x1xf32>
    %cst_225 = arith.constant 6.400000e+01 : f32
    %491 = vector.broadcast %cst_225 : f32 to vector<8x1xf32>
    %492 = arith.divf %490, %491 : vector<8x1xf32>
    %493 = vector.broadcast %485 : vector<8x1xf32> to vector<8x64xf32>
    %494 = arith.subf %477, %493 : vector<8x64xf32>
    %cst_226 = arith.constant 9.99999974E-6 : f32
    %495 = vector.broadcast %cst_226 : f32 to vector<8x1xf32>
    %496 = arith.addf %492, %495 : vector<8x1xf32>
    %497 = math.rsqrt %496 : vector<8x1xf32>
    %498 = vector.broadcast %497 : vector<8x1xf32> to vector<8x64xf32>
    %499 = arith.mulf %494, %498 : vector<8x64xf32>
    %500 = vector.broadcast %479 : vector<1x64xf32> to vector<8x64xf32>
    %501 = arith.mulf %499, %500 : vector<8x64xf32>
    %502 = vector.broadcast %481 : vector<1x64xf32> to vector<8x64xf32>
    %503 = arith.addf %501, %502 : vector<8x64xf32>
    %c1_227 = arith.constant 1 : index
    %c1_228 = arith.constant 1 : index
    %c0_229 = arith.constant 0 : index
    %c0_230 = arith.constant 0 : index
    %504 = vector.load %arg12[%c1_227, %c1_228, %c0_229, %c0_230] : memref<2x2x64x128xbf16, #tpu.memory_space<vmem>>, vector<1x1x64x128xbf16>
    %505 = vector.shape_cast %504 : vector<1x1x64x128xbf16> to vector<64x128xbf16>
    %506 = arith.truncf %503 : vector<8x64xf32> to vector<8x64xbf16>
    %cst_231 = arith.constant dense<0.000000e+00> : vector<8x128xf32>
    %507 = tpu.matmul %506, %505, %cst_231 {dimension_numbers = #tpu.dot_dimension_numbers<[1], [0], [0], [1], [0, 0, 1, 1], [], []>} : vector<8x64xbf16>, vector<64x128xbf16>, vector<8x128xf32> -> vector<8x128xf32>
    %c1_232 = arith.constant 1 : index
    %c1_233 = arith.constant 1 : index
    %c0_234 = arith.constant 0 : index
    %c0_235 = arith.constant 0 : index
    %508 = vector.load %arg13[%c1_232, %c1_233, %c0_234, %c0_235] : memref<2x2x1x128xf32, #tpu.memory_space<vmem>>, vector<1x1x1x128xf32>
    %509 = vector.shape_cast %508 : vector<1x1x1x128xf32> to vector<1x128xf32>
    %510 = vector.broadcast %509 : vector<1x128xf32> to vector<8x128xf32>
    %511 = arith.addf %507, %510 : vector<8x128xf32>
    %512 = arith.negf %511 : vector<8x128xf32>
    %513 = math.exp %512 : vector<8x128xf32>
    %cst_236 = arith.constant 1.000000e+00 : f32
    %514 = vector.broadcast %cst_236 : f32 to vector<8x128xf32>
    %515 = arith.addf %514, %513 : vector<8x128xf32>
    %516 = arith.divf %514, %515 : vector<8x128xf32>
    %517 = arith.mulf %511, %516 : vector<8x128xf32>
    %c1_237 = arith.constant 1 : index
    %c1_238 = arith.constant 1 : index
    %c0_239 = arith.constant 0 : index
    %c0_240 = arith.constant 0 : index
    %518 = vector.load %arg14[%c1_237, %c1_238, %c0_239, %c0_240] : memref<2x2x128x64xbf16, #tpu.memory_space<vmem>>, vector<1x1x128x64xbf16>
    %519 = vector.shape_cast %518 : vector<1x1x128x64xbf16> to vector<128x64xbf16>
    %520 = arith.truncf %517 : vector<8x128xf32> to vector<8x128xbf16>
    %cst_241 = arith.constant dense<0.000000e+00> : vector<8x64xf32>
    %521 = tpu.matmul %520, %519, %cst_241 {dimension_numbers = #tpu.dot_dimension_numbers<[1], [0], [0], [1], [0, 0, 1, 1], [], []>} : vector<8x128xbf16>, vector<128x64xbf16>, vector<8x64xf32> -> vector<8x64xf32>
    %c1_242 = arith.constant 1 : index
    %c1_243 = arith.constant 1 : index
    %c0_244 = arith.constant 0 : index
    %c0_245 = arith.constant 0 : index
    %522 = vector.load %arg15[%c1_242, %c1_243, %c0_244, %c0_245] : memref<2x2x1x64xf32, #tpu.memory_space<vmem>>, vector<1x1x1x64xf32>
    %523 = vector.shape_cast %522 : vector<1x1x1x64xf32> to vector<1x64xf32>
    %524 = vector.broadcast %523 : vector<1x64xf32> to vector<8x64xf32>
    %525 = arith.addf %521, %524 : vector<8x64xf32>
    %cst_246 = arith.constant 5.000000e-01 : f32
    %526 = vector.broadcast %cst_246 : f32 to vector<8x64xf32>
    %527 = arith.mulf %526, %525 : vector<8x64xf32>
    %528 = arith.addf %477, %527 : vector<8x64xf32>
    %c0_247 = arith.constant 0 : index
    %c0_248 = arith.constant 0 : index
    %529 = vector.load %arg16[%c0_247, %c0_248] : memref<1x64xf32, #tpu.memory_space<vmem>>, vector<1x64xf32>
    %c0_249 = arith.constant 0 : index
    %c0_250 = arith.constant 0 : index
    %530 = vector.load %arg17[%c0_249, %c0_250] : memref<1x64xf32, #tpu.memory_space<vmem>>, vector<1x64xf32>
    %cst_251 = arith.constant dense<0.000000e+00> : vector<8xf32>
    %531 = vector.multi_reduction <add>, %528, %cst_251 [1] : vector<8x64xf32> to vector<8xf32>
    %532 = vector.shape_cast %531 : vector<8xf32> to vector<8x1xf32>
    %cst_252 = arith.constant 6.400000e+01 : f32
    %533 = vector.broadcast %cst_252 : f32 to vector<8x1xf32>
    %534 = arith.divf %532, %533 : vector<8x1xf32>
    %535 = vector.broadcast %534 : vector<8x1xf32> to vector<8x64xf32>
    %536 = arith.subf %528, %535 : vector<8x64xf32>
    %537 = arith.mulf %536, %536 : vector<8x64xf32>
    %cst_253 = arith.constant dense<0.000000e+00> : vector<8xf32>
    %538 = vector.multi_reduction <add>, %537, %cst_253 [1] : vector<8x64xf32> to vector<8xf32>
    %539 = vector.shape_cast %538 : vector<8xf32> to vector<8x1xf32>
    %cst_254 = arith.constant 6.400000e+01 : f32
    %540 = vector.broadcast %cst_254 : f32 to vector<8x1xf32>
    %541 = arith.divf %539, %540 : vector<8x1xf32>
    %542 = vector.broadcast %534 : vector<8x1xf32> to vector<8x64xf32>
    %543 = arith.subf %528, %542 : vector<8x64xf32>
    %cst_255 = arith.constant 9.99999974E-6 : f32
    %544 = vector.broadcast %cst_255 : f32 to vector<8x1xf32>
    %545 = arith.addf %541, %544 : vector<8x1xf32>
    %546 = math.rsqrt %545 : vector<8x1xf32>
    %547 = vector.broadcast %546 : vector<8x1xf32> to vector<8x64xf32>
    %548 = arith.mulf %543, %547 : vector<8x64xf32>
    %549 = vector.broadcast %529 : vector<1x64xf32> to vector<8x64xf32>
    %550 = arith.mulf %548, %549 : vector<8x64xf32>
    %551 = vector.broadcast %530 : vector<1x64xf32> to vector<8x64xf32>
    %552 = arith.addf %550, %551 : vector<8x64xf32>
    %553 = vector.extract_strided_slice %552 {offsets = [0, 0], sizes = [7, 64], strides = [1, 1]} : vector<8x64xf32> to vector<7x64xf32>
    %c0_256 = arith.constant 0 : index
    %c0_257 = arith.constant 0 : index
    %c0_258 = arith.constant 0 : index
    %554 = vector.load %arg18[%c0_256, %c0_257, %c0_258] : memref<1x7x64xf32, #tpu.memory_space<vmem>>, vector<1x7x64xf32>
    %555 = vector.shape_cast %554 : vector<1x7x64xf32> to vector<7x64xf32>
    %556 = vector.shape_cast %553 : vector<7x64xf32> to vector<1x7x64xf32>
    tpu.vector_store %arg18[%c0_256, %c0_257, %c0_258], %556 {strides = array<i32>} : memref<1x7x64xf32, #tpu.memory_space<vmem>>, vector<1x7x64xf32>,
    return
  }
  func.func @transform_0(%arg0: i32) -> (i32, i32, i32) {
    %c0_i32 = arith.constant 0 : i32
    %c0_i32_0 = arith.constant 0 : i32
    %c0_i32_1 = arith.constant 0 : i32
    return %arg0, %c0_i32, %c0_i32_0 : i32, i32, i32
  }
  func.func @transform_1(%arg0: i32) -> (i32, i32) {
    %c0_i32 = arith.constant 0 : i32
    %c0_i32_0 = arith.constant 0 : i32
    %c0_i32_1 = arith.constant 0 : i32
    return %c0_i32, %c0_i32_0 : i32, i32
  }
  func.func @transform_2(%arg0: i32) -> (i32, i32) {
    %c0_i32 = arith.constant 0 : i32
    %c0_i32_0 = arith.constant 0 : i32
    %c0_i32_1 = arith.constant 0 : i32
    return %c0_i32, %c0_i32_0 : i32, i32
  }
  func.func @transform_3(%arg0: i32) -> (i32, i32) {
    %c0_i32 = arith.constant 0 : i32
    %c0_i32_0 = arith.constant 0 : i32
    %c0_i32_1 = arith.constant 0 : i32
    return %c0_i32, %c0_i32_0 : i32, i32
  }
  func.func @transform_4(%arg0: i32) -> (i32, i32) {
    %c0_i32 = arith.constant 0 : i32
    %c0_i32_0 = arith.constant 0 : i32
    %c0_i32_1 = arith.constant 0 : i32
    return %c0_i32, %c0_i32_0 : i32, i32
  }
  func.func @transform_5(%arg0: i32) -> (i32, i32, i32, i32) {
    %c0_i32 = arith.constant 0 : i32
    %c0_i32_0 = arith.constant 0 : i32
    %c0_i32_1 = arith.constant 0 : i32
    %c0_i32_2 = arith.constant 0 : i32
    %c0_i32_3 = arith.constant 0 : i32
    return %c0_i32, %c0_i32_0, %c0_i32_1, %c0_i32_2 : i32, i32, i32, i32
  }
  func.func @transform_6(%arg0: i32) -> (i32, i32, i32, i32) {
    %c0_i32 = arith.constant 0 : i32
    %c0_i32_0 = arith.constant 0 : i32
    %c0_i32_1 = arith.constant 0 : i32
    %c0_i32_2 = arith.constant 0 : i32
    %c0_i32_3 = arith.constant 0 : i32
    return %c0_i32, %c0_i32_0, %c0_i32_1, %c0_i32_2 : i32, i32, i32, i32
  }
  func.func @transform_7(%arg0: i32) -> (i32, i32, i32) {
    %c0_i32 = arith.constant 0 : i32
    %c0_i32_0 = arith.constant 0 : i32
    %c0_i32_1 = arith.constant 0 : i32
    %c0_i32_2 = arith.constant 0 : i32
    return %c0_i32, %c0_i32_0, %c0_i32_1 : i32, i32, i32
  }
  func.func @transform_8(%arg0: i32) -> (i32, i32, i32) {
    %c0_i32 = arith.constant 0 : i32
    %c0_i32_0 = arith.constant 0 : i32
    %c0_i32_1 = arith.constant 0 : i32
    %c0_i32_2 = arith.constant 0 : i32
    return %c0_i32, %c0_i32_0, %c0_i32_1 : i32, i32, i32
  }
  func.func @transform_9(%arg0: i32) -> (i32, i32, i32) {
    %c0_i32 = arith.constant 0 : i32
    %c0_i32_0 = arith.constant 0 : i32
    %c0_i32_1 = arith.constant 0 : i32
    %c0_i32_2 = arith.constant 0 : i32
    return %c0_i32, %c0_i32_0, %c0_i32_1 : i32, i32, i32
  }
  func.func @transform_10(%arg0: i32) -> (i32, i32, i32) {
    %c0_i32 = arith.constant 0 : i32
    %c0_i32_0 = arith.constant 0 : i32
    %c0_i32_1 = arith.constant 0 : i32
    %c0_i32_2 = arith.constant 0 : i32
    return %c0_i32, %c0_i32_0, %c0_i32_1 : i32, i32, i32
  }
  func.func @transform_11(%arg0: i32) -> (i32, i32, i32, i32) {
    %c0_i32 = arith.constant 0 : i32
    %c0_i32_0 = arith.constant 0 : i32
    %c0_i32_1 = arith.constant 0 : i32
    %c0_i32_2 = arith.constant 0 : i32
    %c0_i32_3 = arith.constant 0 : i32
    return %c0_i32, %c0_i32_0, %c0_i32_1, %c0_i32_2 : i32, i32, i32, i32
  }
  func.func @transform_12(%arg0: i32) -> (i32, i32, i32, i32) {
    %c0_i32 = arith.constant 0 : i32
    %c0_i32_0 = arith.constant 0 : i32
    %c0_i32_1 = arith.constant 0 : i32
    %c0_i32_2 = arith.constant 0 : i32
    %c0_i32_3 = arith.constant 0 : i32
    return %c0_i32, %c0_i32_0, %c0_i32_1, %c0_i32_2 : i32, i32, i32, i32
  }
  func.func @transform_13(%arg0: i32) -> (i32, i32, i32, i32) {
    %c0_i32 = arith.constant 0 : i32
    %c0_i32_0 = arith.constant 0 : i32
    %c0_i32_1 = arith.constant 0 : i32
    %c0_i32_2 = arith.constant 0 : i32
    %c0_i32_3 = arith.constant 0 : i32
    return %c0_i32, %c0_i32_0, %c0_i32_1, %c0_i32_2 : i32, i32, i32, i32
  }
  func.func @transform_14(%arg0: i32) -> (i32, i32, i32, i32) {
    %c0_i32 = arith.constant 0 : i32
    %c0_i32_0 = arith.constant 0 : i32
    %c0_i32_1 = arith.constant 0 : i32
    %c0_i32_2 = arith.constant 0 : i32
    %c0_i32_3 = arith.constant 0 : i32
    return %c0_i32, %c0_i32_0, %c0_i32_1, %c0_i32_2 : i32, i32, i32, i32
  }
  func.func @transform_15(%arg0: i32) -> (i32, i32) {
    %c0_i32 = arith.constant 0 : i32
    %c0_i32_0 = arith.constant 0 : i32
    %c0_i32_1 = arith.constant 0 : i32
    return %c0_i32, %c0_i32_0 : i32, i32
  }
  func.func @transform_16(%arg0: i32) -> (i32, i32) {
    %c0_i32 = arith.constant 0 : i32
    %c0_i32_0 = arith.constant 0 : i32
    %c0_i32_1 = arith.constant 0 : i32
    return %c0_i32, %c0_i32_0 : i32, i32
  }
  func.func @transform_17(%arg0: i32) -> (i32, i32, i32) {
    %c0_i32 = arith.constant 0 : i32
    %c0_i32_0 = arith.constant 0 : i32
    %c0_i32_1 = arith.constant 0 : i32
    return %arg0, %c0_i32, %c0_i32_0 : i32, i32, i32
  }
}

</mosaic_0001>

<llo_original>
// kernel: nemo_encoder_forward.1
$region0: #{nemo_encoder_forward.1}
  #allocation0 [shape = 'u32[]', space=smem, size = 0x4, offset = 0x4, fixed_abs, tag = 'smem constant byte address 0x4 - core index']
  #allocation1 [shape = 'u32[144,128]{1,0:T(1,128)}', space=vmem, size = 0x12000, scoped, tag = 'internal scratch']
  %s0 = inlined_call_operand.vmem [shape: f32[2,8,512], index: 0, kind: input, shape index: {}]
  %s1 = inlined_call_operand.vmem [shape: bf16[256,256], index: 1, kind: input, shape index: {}]
  %s2 = inlined_call_operand.vmem [shape: bf16[512,128], index: 2, kind: input, shape index: {}]
  %s3 = inlined_call_operand.vmem [shape: bf16[128,64], index: 3, kind: input, shape index: {}]
  %s4 = inlined_call_operand.vmem [shape: f32[1,64], index: 4, kind: input, shape index: {}]
  %s5 = inlined_call_operand.vmem [shape: f32[2,3,1,64], index: 5, kind: input, shape index: {}]
  %s6 = inlined_call_operand.hbm [shape: f32[2,3,1,64], index: 6, kind: input, shape index: {}]
  %s7 = inlined_call_operand.vmem [shape: bf16[2,64,192], index: 7, kind: input, shape index: {}]
  %s8 = inlined_call_operand.vmem [shape: f32[2,1,192], index: 8, kind: input, shape index: {}]
  %s9 = inlined_call_operand.hbm [shape: bf16[2,64,64], index: 9, kind: input, shape index: {}]
  %s10 = inlined_call_operand.hbm [shape: f32[2,1,64], index: 10, kind: input, shape index: {}]
  %s11 = inlined_call_operand.hbm [shape: bf16[2,2,64,128], index: 11, kind: input, shape index: {}]
  %s12 = inlined_call_operand.hbm [shape: f32[2,2,1,128], index: 12, kind: input, shape index: {}]
  %s13 = inlined_call_operand.vmem [shape: bf16[2,2,128,64], index: 13, kind: input, shape index: {}]
  %s14 = inlined_call_operand.hbm [shape: f32[2,2,1,64], index: 14, kind: input, shape index: {}]
  %s15 = inlined_call_operand.hbm [shape: f32[1,64], index: 15, kind: input, shape index: {}]
  %s16 = inlined_call_operand.hbm [shape: f32[1,64], index: 16, kind: input, shape index: {}]
  %s17 = inlined_call_operand.vmem [shape: f32[2,7,64], index: 17, kind: output, shape index: {}]
  %s18 = sld [smem:[#allocation0]]
  $region133: #{nemo_encoder_forward.1} parent=0
    _
  %s20 = ssub.s32 1, %s18
  %s21 = scalar_select 0, %s20, %s18
  $region1: #{nemo_encoder_forward.1} parent=0
    #allocation2 [shape = 'u8[3072]{0}', space=vmem, size = 0xc00, scoped, tag = 'input window, operand 6, single buffered']
    #allocation3 [shape = 's32[2]{0}', space=sflag, size = 0x8, scoped, tag = 'scoped memory for nemo_encoder_forward.1']
    #allocation4 [shape = 'u8[32768]{0}', space=vmem, size = 0x8000, scoped, tag = 'input window, operand 9, single buffered']
    #allocation5 [shape = 's32[1]{0}', space=sflag, size = 0x4, scoped, tag = 'scoped memory for nemo_encoder_forward.1']
    #allocation6 [shape = 'u8[1024]{0}', space=vmem, size = 0x400, scoped, tag = 'input window, operand 10, single buffered']
    #allocation7 [shape = 'u8[65536]{0}', space=vmem, size = 0x10000, scoped, tag = 'input window, operand 11, single buffered']
    #allocation8 [shape = 's32[1]{0}', space=sflag, size = 0x4, scoped, tag = 'scoped memory for nemo_encoder_forward.1']
    #allocation9 [shape = 'u8[2048]{0}', space=vmem, size = 0x800, scoped, tag = 'input window, operand 12, single buffered']
    #allocation10 [shape = 'u8[2048]{0}', space=vmem, size = 0x800, scoped, tag = 'input window, operand 14, single buffered']
    #allocation11 [shape = 's32[1]{0}', space=sflag, size = 0x4, scoped, tag = 'scoped memory for nemo_encoder_forward.1']
    #allocation12 [shape = 'u8[512]{0}', space=vmem, size = 0x400, scoped, tag = 'input window, operand 15, single buffered']
    #allocation13 [shape = 'u8[512]{0}', space=vmem, size = 0x400, scoped, tag = 'input window, operand 16, single buffered']
    #allocation14 [shape = 's32[1]{0}', space=sflag, size = 0x4, scoped, tag = 'scoped memory for nemo_encoder_forward.1']
    %22 = vsyncpa [#allocation3], 0
    %23 = vsyncpa [#allocation5], 0
    %24 = vsyncpa [#allocation8], 0
    %25 = vsyncpa [#allocation11], 0
    %26 = vsyncpa [#allocation14], 0
    loop: start=0, step=1, limit=4
    $region2: #{nemo_encoder_forward.1} parent=1 // loop_pre_header
      _
    $region3: #{nemo_encoder_forward.1} parent=1 // loop_header
      %s28 = sphi 0, %s32
      %p29 = scmp.ge.s32.totalorder %s28, 4
      %s38 = sphi 0, %s40
      %s41 = sphi 0, %s38
      %s42 = sphi 0, %s41
      %s58 = sphi 0, %s42
      %s62 = sphi 0, %s62
      %s64 = sphi 0, %s62
      %s65 = sphi 0, %s64
      %s79 = sphi 0, %s65
      %s83 = sphi 0, %s83
      %s85 = sphi 0, %s83
      %s86 = sphi 0, %s85
      %s100 = sphi 0, %s86
      %s104 = sphi 0, %s104
      %s106 = sphi 0, %s104
      %s107 = sphi 0, %s106
      %s121 = sphi 0, %s107
      %s125 = sphi 0, %s125
      %s127 = sphi 0, %s125
      %s128 = sphi 0, %s127
      %s142 = sphi 0, %s128
      %s146 = sphi 0, %s146
      %s148 = sphi 0, %s146
      %s149 = sphi 0, %s148
      %s163 = sphi 0, %s149
      %s167 = sphi 0, %s167
      %s169 = sphi 0, %s167
      %s170 = sphi 0, %s169
      %s184 = sphi 0, %s170
      %s188 = sphi 0, %s188
      %s190 = sphi 0, %s188
      %s191 = sphi 0, %s190
      %s205 = sphi 0, %s191
      %s209 = sphi 0, %s209
      %s211 = sphi 0, %s209
      %s212 = sphi 0, %s211
      %s226 = sphi 0, %s212
      %s230 = sphi 0, %s230
      %s232 = sphi 0, %s230
      %s233 = sphi 0, %s232
      %s247 = sphi 0, %s233
      %s251 = sphi 0, %s251
      %s253 = sphi 0, %s251
      %s254 = sphi 0, %s253
      %s268 = sphi 0, %s254
      %s272 = sphi 0, %s272
      %s274 = sphi 0, %s272
      %s275 = sphi 0, %s274
      %s289 = sphi 0, %s275
      %s293 = sphi 0, %s293
      %s295 = sphi 0, %s293
      %s296 = sphi 0, %s295
      %s310 = sphi 0, %s296
      %s314 = sphi 0, %s314
      %s316 = sphi 0, %s314
      %s317 = sphi 0, %s316
      %s331 = sphi 0, %s317
      %s335 = sphi 0, %s335
      %s337 = sphi 0, %s335
      %s338 = sphi 0, %s337
      %s352 = sphi 0, %s338
      %s356 = sphi 0, %s356
      %s358 = sphi 0, %s356
      %s359 = sphi 0, %s358
      %s373 = sphi 0, %s359
      %s377 = sphi 0, %s377
      %s379 = sphi 0, %s377
      %s380 = sphi 0, %s379
      %s394 = sphi 0, %s380
      %s400 = sphi 0, %s402
      %s403 = sphi 0, %s400
      %s404 = sphi 0, %s403
      %s420 = sphi 0, %s404
    $region4: #{nemo_encoder_forward.1} parent=1 // loop_header_branch
      %31 = sbr.rel (%p29) target = $region8
    $region5: #{nemo_encoder_forward.1} parent=1 // loop_body
      %s33 = ssub.s32 %s28, 1
      %s34 = ssub.s32 %s28, 2
      %s35 = sadd.s32 %s28, 1
      %s36 = ssub.s32 %s28, %s35
      %p37 = scmp.eq.s32.totalorder %s36, 0
      %s39 = sadd.s32 %s38, 1
      %s40 = scalar_select %p37, %s38, %s39
      %p43 = pneg %p37
      %p44 = scmp.eq.s32.totalorder %s28, 1
      %p45 = por %p43, %p44
      %p46 = scmp.ne.s32.totalorder %s38, %s41
      %p47 = scmp.eq.s32.totalorder %s28, 0
      %p48 = por %p46, %p47
      %p49 = scmp.ne.s32.totalorder %s38, %s41
      %p50 = scmp.eq.s32.totalorder %s33, 1
      %p51 = por %p49, %p50
      %p52 = scmp.ne.s32.totalorder %s41, %s42
      %p53 = scmp.eq.s32.totalorder %s33, 0
      %p54 = por %p52, %p53
      %p55 = scmp.ne.s32.totalorder %s41, %s42
      %p56 = scmp.eq.s32.totalorder %s34, 1
      %p57 = por %p55, %p56
      %p59 = scmp.ne.s32.totalorder %s42, %s58
      %p60 = scmp.eq.s32.totalorder %s34, 0
      %p61 = por %p59, %p60
      %s63 = sadd.s32 %s62, 1
      %p66 = scmp.eq.s32.totalorder %s28, 1
      %p67 = scmp.ne.s32.totalorder %s62, %s64
      %p68 = scmp.eq.s32.totalorder %s28, 0
      %p69 = por %p67, %p68
      %p70 = scmp.ne.s32.totalorder %s62, %s64
      %p71 = scmp.eq.s32.totalorder %s33, 1
      %p72 = por %p70, %p71
      %p73 = scmp.ne.s32.totalorder %s64, %s65
      %p74 = scmp.eq.s32.totalorder %s33, 0
      %p75 = por %p73, %p74
      %p76 = scmp.ne.s32.totalorder %s64, %s65
      %p77 = scmp.eq.s32.totalorder %s34, 1
      %p78 = por %p76, %p77
      %p80 = scmp.ne.s32.totalorder %s65, %s79
      %p81 = scmp.eq.s32.totalorder %s34, 0
      %p82 = por %p80, %p81
      %s84 = sadd.s32 %s83, 1
      %p87 = scmp.eq.s32.totalorder %s28, 1
      %p88 = scmp.ne.s32.totalorder %s83, %s85
      %p89 = scmp.eq.s32.totalorder %s28, 0
      %p90 = por %p88, %p89
      %p91 = scmp.ne.s32.totalorder %s83, %s85
      %p92 = scmp.eq.s32.totalorder %s33, 1
      %p93 = por %p91, %p92
      %p94 = scmp.ne.s32.totalorder %s85, %s86
      %p95 = scmp.eq.s32.totalorder %s33, 0
      %p96 = por %p94, %p95
      %p97 = scmp.ne.s32.totalorder %s85, %s86
      %p98 = scmp.eq.s32.totalorder %s34, 1
      %p99 = por %p97, %p98
      %p101 = scmp.ne.s32.totalorder %s86, %s100
      %p102 = scmp.eq.s32.totalorder %s34, 0
      %p103 = por %p101, %p102
      %s105 = sadd.s32 %s104, 1
      %p108 = scmp.eq.s32.totalorder %s28, 1
      %p109 = scmp.ne.s32.totalorder %s104, %s106
      %p110 = scmp.eq.s32.totalorder %s28, 0
      %p111 = por %p109, %p110
      %p112 = scmp.ne.s32.totalorder %s104, %s106
      %p113 = scmp.eq.s32.totalorder %s33, 1
      %p114 = por %p112, %p113
      %p115 = scmp.ne.s32.totalorder %s106, %s107
      %p116 = scmp.eq.s32.totalorder %s33, 0
      %p117 = por %p115, %p116
      %p118 = scmp.ne.s32.totalorder %s106, %s107
      %p119 = scmp.eq.s32.totalorder %s34, 1
      %p120 = por %p118, %p119
      %p122 = scmp.ne.s32.totalorder %s107, %s121
      %p123 = scmp.eq.s32.totalorder %s34, 0
      %p124 = por %p122, %p123
      %s126 = sadd.s32 %s125, 1
      %p129 = scmp.eq.s32.totalorder %s28, 1
      %p130 = scmp.ne.s32.totalorder %s125, %s127
      %p131 = scmp.eq.s32.totalorder %s28, 0
      %p132 = por %p130, %p131
      %p133 = scmp.ne.s32.totalorder %s125, %s127
      %p134 = scmp.eq.s32.totalorder %s33, 1
      %p135 = por %p133, %p134
      %p136 = scmp.ne.s32.totalorder %s127, %s128
      %p137 = scmp.eq.s32.totalorder %s33, 0
      %p138 = por %p136, %p137
      %p139 = scmp.ne.s32.totalorder %s127, %s128
      %p140 = scmp.eq.s32.totalorder %s34, 1
      %p141 = por %p139, %p140
      %p143 = scmp.ne.s32.totalorder %s128, %s142
      %p144 = scmp.eq.s32.totalorder %s34, 0
      %p145 = por %p143, %p144
      %s147 = sadd.s32 %s146, 1
      %p150 = scmp.eq.s32.totalorder %s28, 1
      %p151 = scmp.ne.s32.totalorder %s146, %s148
      %p152 = scmp.eq.s32.totalorder %s28, 0
      %p153 = por %p151, %p152
      %p154 = scmp.ne.s32.totalorder %s146, %s148
      %p155 = scmp.eq.s32.totalorder %s33, 1
      %p156 = por %p154, %p155
      %p157 = scmp.ne.s32.totalorder %s148, %s149
      %p158 = scmp.eq.s32.totalorder %s33, 0
      %p159 = por %p157, %p158
      %p160 = scmp.ne.s32.totalorder %s148, %s149
      %p161 = scmp.eq.s32.totalorder %s34, 1
      %p162 = por %p160, %p161
      %p164 = scmp.ne.s32.totalorder %s149, %s163
      %p165 = scmp.eq.s32.totalorder %s34, 0
      %p166 = por %p164, %p165
      %s168 = sadd.s32 %s167, 1
      %p171 = scmp.eq.s32.totalorder %s28, 1
      %p172 = scmp.ne.s32.totalorder %s167, %s169
      %p173 = scmp.eq.s32.totalorder %s28, 0
      %p174 = por %p172, %p173
      %p175 = scmp.ne.s32.totalorder %s167, %s169
      %p176 = scmp.eq.s32.totalorder %s33, 1
      %p177 = por %p175, %p176
      %p178 = scmp.ne.s32.totalorder %s169, %s170
      %p179 = scmp.eq.s32.totalorder %s33, 0
      %p180 = por %p178, %p179
      %p181 = scmp.ne.s32.totalorder %s169, %s170
      %p182 = scmp.eq.s32.totalorder %s34, 1
      %p183 = por %p181, %p182
      %p185 = scmp.ne.s32.totalorder %s170, %s184
      %p186 = scmp.eq.s32.totalorder %s34, 0
      %p187 = por %p185, %p186
      %s189 = sadd.s32 %s188, 1
      %p192 = scmp.eq.s32.totalorder %s28, 1
      %p193 = scmp.ne.s32.totalorder %s188, %s190
      %p194 = scmp.eq.s32.totalorder %s28, 0
      %p195 = por %p193, %p194
      %p196 = scmp.ne.s32.totalorder %s188, %s190
      %p197 = scmp.eq.s32.totalorder %s33, 1
      %p198 = por %p196, %p197
      %p199 = scmp.ne.s32.totalorder %s190, %s191
      %p200 = scmp.eq.s32.totalorder %s33, 0
      %p201 = por %p199, %p200
      %p202 = scmp.ne.s32.totalorder %s190, %s191
      %p203 = scmp.eq.s32.totalorder %s34, 1
      %p204 = por %p202, %p203
      %p206 = scmp.ne.s32.totalorder %s191, %s205
      %p207 = scmp.eq.s32.totalorder %s34, 0
      %p208 = por %p206, %p207
      %s210 = sadd.s32 %s209, 1
      %p213 = scmp.eq.s32.totalorder %s28, 1
      %p214 = scmp.ne.s32.totalorder %s209, %s211
      %p215 = scmp.eq.s32.totalorder %s28, 0
      %p216 = por %p214, %p215
      %p217 = scmp.ne.s32.totalorder %s209, %s211
      %p218 = scmp.eq.s32.totalorder %s33, 1
      %p219 = por %p217, %p218
      %p220 = scmp.ne.s32.totalorder %s211, %s212
      %p221 = scmp.eq.s32.totalorder %s33, 0
      %p222 = por %p220, %p221
      %p223 = scmp.ne.s32.totalorder %s211, %s212
      %p224 = scmp.eq.s32.totalorder %s34, 1
      %p225 = por %p223, %p224
      %p227 = scmp.ne.s32.totalorder %s212, %s226
      %p228 = scmp.eq.s32.totalorder %s34, 0
      %p229 = por %p227, %p228
      %s231 = sadd.s32 %s230, 1
      %p234 = scmp.eq.s32.totalorder %s28, 1
      %p235 = scmp.ne.s32.totalorder %s230, %s232
      %p236 = scmp.eq.s32.totalorder %s28, 0
      %p237 = por %p235, %p236
      %p238 = scmp.ne.s32.totalorder %s230, %s232
      %p239 = scmp.eq.s32.totalorder %s33, 1
      %p240 = por %p238, %p239
      %p241 = scmp.ne.s32.totalorder %s232, %s233
      %p242 = scmp.eq.s32.totalorder %s33, 0
      %p243 = por %p241, %p242
      %p244 = scmp.ne.s32.totalorder %s232, %s233
      %p245 = scmp.eq.s32.totalorder %s34, 1
      %p246 = por %p244, %p245
      %p248 = scmp.ne.s32.totalorder %s233, %s247
      %p249 = scmp.eq.s32.totalorder %s34, 0
      %p250 = por %p248, %p249
      %s252 = sadd.s32 %s251, 1
      %p255 = scmp.eq.s32.totalorder %s28, 1
      %p256 = scmp.ne.s32.totalorder %s251, %s253
      %p257 = scmp.eq.s32.totalorder %s28, 0
      %p258 = por %p256, %p257
      %p259 = scmp.ne.s32.totalorder %s251, %s253
      %p260 = scmp.eq.s32.totalorder %s33, 1
      %p261 = por %p259, %p260
      %p262 = scmp.ne.s32.totalorder %s253, %s254
      %p263 = scmp.eq.s32.totalorder %s33, 0
      %p264 = por %p262, %p263
      %p265 = scmp.ne.s32.totalorder %s253, %s254
      %p266 = scmp.eq.s32.totalorder %s34, 1
      %p267 = por %p265, %p266
      %p269 = scmp.ne.s32.totalorder %s254, %s268
      %p270 = scmp.eq.s32.totalorder %s34, 0
      %p271 = por %p269, %p270
      %s273 = sadd.s32 %s272, 1
      %p276 = scmp.eq.s32.totalorder %s28, 1
      %p277 = scmp.ne.s32.totalorder %s272, %s274
      %p278 = scmp.eq.s32.totalorder %s28, 0
      %p279 = por %p277, %p278
      %p280 = scmp.ne.s32.totalorder %s272, %s274
      %p281 = scmp.eq.s32.totalorder %s33, 1
      %p282 = por %p280, %p281
      %p283 = scmp.ne.s32.totalorder %s274, %s275
      %p284 = scmp.eq.s32.totalorder %s33, 0
      %p285 = por %p283, %p284
      %p286 = scmp.ne.s32.totalorder %s274, %s275
      %p287 = scmp.eq.s32.totalorder %s34, 1
      %p288 = por %p286, %p287
      %p290 = scmp.ne.s32.totalorder %s275, %s289
      %p291 = scmp.eq.s32.totalorder %s34, 0
      %p292 = por %p290, %p291
      %s294 = sadd.s32 %s293, 1
      %p297 = scmp.eq.s32.totalorder %s28, 1
      %p298 = scmp.ne.s32.totalorder %s293, %s295
      %p299 = scmp.eq.s32.totalorder %s28, 0
      %p300 = por %p298, %p299
      %p301 = scmp.ne.s32.totalorder %s293, %s295
      %p302 = scmp.eq.s32.totalorder %s33, 1
      %p303 = por %p301, %p302
      %p304 = scmp.ne.s32.totalorder %s295, %s296
      %p305 = scmp.eq.s32.totalorder %s33, 0
      %p306 = por %p304, %p305
      %p307 = scmp.ne.s32.totalorder %s295, %s296
      %p308 = scmp.eq.s32.totalorder %s34, 1
      %p309 = por %p307, %p308
      %p311 = scmp.ne.s32.totalorder %s296, %s310
      %p312 = scmp.eq.s32.totalorder %s34, 0
      %p313 = por %p311, %p312
      %s315 = sadd.s32 %s314, 1
      %p318 = scmp.eq.s32.totalorder %s28, 1
      %p319 = scmp.ne.s32.totalorder %s314, %s316
      %p320 = scmp.eq.s32.totalorder %s28, 0
      %p321 = por %p319, %p320
      %p322 = scmp.ne.s32.totalorder %s314, %s316
      %p323 = scmp.eq.s32.totalorder %s33, 1
      %p324 = por %p322, %p323
      %p325 = scmp.ne.s32.totalorder %s316, %s317
      %p326 = scmp.eq.s32.totalorder %s33, 0
      %p327 = por %p325, %p326
      %p328 = scmp.ne.s32.totalorder %s316, %s317
      %p329 = scmp.eq.s32.totalorder %s34, 1
      %p330 = por %p328, %p329
      %p332 = scmp.ne.s32.totalorder %s317, %s331
      %p333 = scmp.eq.s32.totalorder %s34, 0
      %p334 = por %p332, %p333
      %s336 = sadd.s32 %s335, 1
      %p339 = scmp.eq.s32.totalorder %s28, 1
      %p340 = scmp.ne.s32.totalorder %s335, %s337
      %p341 = scmp.eq.s32.totalorder %s28, 0
      %p342 = por %p340, %p341
      %p343 = scmp.ne.s32.totalorder %s335, %s337
      %p344 = scmp.eq.s32.totalorder %s33, 1
      %p345 = por %p343, %p344
      %p346 = scmp.ne.s32.totalorder %s337, %s338
      %p347 = scmp.eq.s32.totalorder %s33, 0
      %p348 = por %p346, %p347
      %p349 = scmp.ne.s32.totalorder %s337, %s338
      %p350 = scmp.eq.s32.totalorder %s34, 1
      %p351 = por %p349, %p350
      %p353 = scmp.ne.s32.totalorder %s338, %s352
      %p354 = scmp.eq.s32.totalorder %s34, 0
      %p355 = por %p353, %p354
      %s357 = sadd.s32 %s356, 1
      %p360 = scmp.eq.s32.totalorder %s28, 1
      %p361 = scmp.ne.s32.totalorder %s356, %s358
      %p362 = scmp.eq.s32.totalorder %s28, 0
      %p363 = por %p361, %p362
      %p364 = scmp.ne.s32.totalorder %s356, %s358
      %p365 = scmp.eq.s32.totalorder %s33, 1
      %p366 = por %p364, %p365
      %p367 = scmp.ne.s32.totalorder %s358, %s359
      %p368 = scmp.eq.s32.totalorder %s33, 0
      %p369 = por %p367, %p368
      %p370 = scmp.ne.s32.totalorder %s358, %s359
      %p371 = scmp.eq.s32.totalorder %s34, 1
      %p372 = por %p370, %p371
      %p374 = scmp.ne.s32.totalorder %s359, %s373
      %p375 = scmp.eq.s32.totalorder %s34, 0
      %p376 = por %p374, %p375
      %s378 = sadd.s32 %s377, 1
      %p381 = scmp.eq.s32.totalorder %s28, 1
      %p382 = scmp.ne.s32.totalorder %s377, %s379
      %p383 = scmp.eq.s32.totalorder %s28, 0
      %p384 = por %p382, %p383
      %p385 = scmp.ne.s32.totalorder %s377, %s379
      %p386 = scmp.eq.s32.totalorder %s33, 1
      %p387 = por %p385, %p386
      %p388 = scmp.ne.s32.totalorder %s379, %s380
      %p389 = scmp.eq.s32.totalorder %s33, 0
      %p390 = por %p388, %p389
      %p391 = scmp.ne.s32.totalorder %s379, %s380
      %p392 = scmp.eq.s32.totalorder %s34, 1
      %p393 = por %p391, %p392
      %p395 = scmp.ne.s32.totalorder %s380, %s394
      %p396 = scmp.eq.s32.totalorder %s34, 0
      %p397 = por %p395, %p396
      %s398 = ssub.s32 %s28, %s35
      %p399 = scmp.eq.s32.totalorder %s398, 0
      %s401 = sadd.s32 %s400, 1
      %s402 = scalar_select %p399, %s400, %s401
      %p405 = pneg %p399
      %p406 = scmp.eq.s32.totalorder %s28, 1
      %p407 = por %p405, %p406
      %p408 = scmp.ne.s32.totalorder %s400, %s403
      %p409 = scmp.eq.s32.totalorder %s28, 0
      %p410 = por %p408, %p409
      %p411 = scmp.ne.s32.totalorder %s400, %s403
      %p412 = scmp.eq.s32.totalorder %s33, 1
      %p413 = por %p411, %p412
      %p414 = scmp.ne.s32.totalorder %s403, %s404
      %p415 = scmp.eq.s32.totalorder %s33, 0
      %p416 = por %p414, %p415
      %p417 = scmp.ne.s32.totalorder %s403, %s404
      %p418 = scmp.eq.s32.totalorder %s34, 1
      %p419 = por %p417, %p418
      %p421 = scmp.ne.s32.totalorder %s404, %s420
      %p422 = scmp.eq.s32.totalorder %s34, 0
      %p423 = por %p421, %p422
      %p424 = scmp.le.s32.totalorder 1, %s28
      %p425 = scmp.lt.s32.totalorder %s28, 3
      %p426 = pnand %p424, %p425
      %p427 = pneg %p426
      // Predicated region
      $region9: #{nemo_encoder_forward.1} parent=5 // pred_check
        _
      $region10: #{nemo_encoder_forward.1} parent=5 // pred_check_branch
        %429 = sbr.rel (%p426) target = $region12
      $region11: #{nemo_encoder_forward.1} parent=5 // pred_region
        %s430 = ssub.s32 %s28, 1
        // Predicated region
        $region13: #{nemo_encoder_forward.1} parent=11 // pred_check
          %p431 = pneg %p75
        $region14: #{nemo_encoder_forward.1} parent=11 // pred_check_branch
          %433 = sbr.rel (%p431) target = $region16
        $region15: #{nemo_encoder_forward.1} parent=11 // pred_region
          _
        $region16: #{nemo_encoder_forward.1} parent=11 // pred_fallthru
          _
        // Predicated region
        $region17: #{nemo_encoder_forward.1} parent=11 // pred_check
          %p434 = pneg %p96
        $region18: #{nemo_encoder_forward.1} parent=11 // pred_check_branch
          %436 = sbr.rel (%p434) target = $region20
        $region19: #{nemo_encoder_forward.1} parent=11 // pred_region
          _
        $region20: #{nemo_encoder_forward.1} parent=11 // pred_fallthru
          _
        // Predicated region
        $region21: #{nemo_encoder_forward.1} parent=11 // pred_check
          %p437 = pneg %p117
        $region22: #{nemo_encoder_forward.1} parent=11 // pred_check_branch
          %439 = sbr.rel (%p437) target = $region24
        $region23: #{nemo_encoder_forward.1} parent=11 // pred_region
          _
        $region24: #{nemo_encoder_forward.1} parent=11 // pred_fallthru
          _
        // Predicated region
        $region25: #{nemo_encoder_forward.1} parent=11 // pred_check
          %p440 = pneg %p138
        $region26: #{nemo_encoder_forward.1} parent=11 // pred_check_branch
          %442 = sbr.rel (%p440) target = $region28
        $region27: #{nemo_encoder_forward.1} parent=11 // pred_region
          _
        $region28: #{nemo_encoder_forward.1} parent=11 // pred_fallthru
          _
        // Predicated region
        $region29: #{nemo_encoder_forward.1} parent=11 // pred_check
          %p443 = pneg %p159
        $region30: #{nemo_encoder_forward.1} parent=11 // pred_check_branch
          %445 = sbr.rel (%p443) target = $region32
        $region31: #{nemo_encoder_forward.1} parent=11 // pred_region
          _
        $region32: #{nemo_encoder_forward.1} parent=11 // pred_fallthru
          _
        // Predicated region
        $region33: #{nemo_encoder_forward.1} parent=11 // pred_check
          %p446 = pneg %p180
        $region34: #{nemo_encoder_forward.1} parent=11 // pred_check_branch
          %448 = sbr.rel (%p446) target = $region36
        $region35: #{nemo_encoder_forward.1} parent=11 // pred_region
          %s450 = ssub.s32 96, 96
          %451 = vsyncadd [#allocation3], %s450
          %s452 = sshll.u32 [#allocation2], 4
          %s453 = int_to_ptr.vmem [resolvable:$true] %s452
          %458 = dma.hbm_to_vmem [thread:$0]  %s6, 96, %s453, [#allocation3], 16, 16, 1
        $region36: #{nemo_encoder_forward.1} parent=11 // pred_fallthru
          _
        // Predicated region
        $region37: #{nemo_encoder_forward.1} parent=11 // pred_check
          %p459 = pneg %p201
        $region38: #{nemo_encoder_forward.1} parent=11 // pred_check_branch
          %461 = sbr.rel (%p459) target = $region40
        $region39: #{nemo_encoder_forward.1} parent=11 // pred_region
          _
        $region40: #{nemo_encoder_forward.1} parent=11 // pred_fallthru
          _
        // Predicated region
        $region41: #{nemo_encoder_forward.1} parent=11 // pred_check
          %p462 = pneg %p222
        $region42: #{nemo_encoder_forward.1} parent=11 // pred_check_branch
          %464 = sbr.rel (%p462) target = $region44
        $region43: #{nemo_encoder_forward.1} parent=11 // pred_region
          _
        $region44: #{nemo_encoder_forward.1} parent=11 // pred_fallthru
          _
        // Predicated region
        $region45: #{nemo_encoder_forward.1} parent=11 // pred_check
          %p465 = pneg %p243
        $region46: #{nemo_encoder_forward.1} parent=11 // pred_check_branch
          %467 = sbr.rel (%p465) target = $region48
        $region47: #{nemo_encoder_forward.1} parent=11 // pred_region
          %s469 = ssub.s32 1024, 1024
          %470 = vsyncadd [#allocation5], %s469
          %s471 = sshll.u32 [#allocation4], 4
          %s472 = int_to_ptr.vmem [resolvable:$true] %s471
          %477 = dma.hbm_to_vmem [thread:$0]  %s9, 1024, %s472, [#allocation5], 64, 64, 4
        $region48: #{nemo_encoder_forward.1} parent=11 // pred_fallthru
          _
        // Predicated region
        $region49: #{nemo_encoder_forward.1} parent=11 // pred_check
          %p478 = pneg %p264
        $region50: #{nemo_encoder_forward.1} parent=11 // pred_check_branch
          %480 = sbr.rel (%p478) target = $region52
        $region51: #{nemo_encoder_forward.1} parent=11 // pred_region
          %s482 = ssub.s32 32, 32
          %483 = vsyncadd [#allocation5], %s482
          %s484 = sshll.u32 [#allocation6], 4
          %s485 = int_to_ptr.vmem [resolvable:$true] %s484
          %490 = dma.hbm_to_vmem [thread:$0]  %s10, 32, %s485, [#allocation5], 16, 16, 1
        $region52: #{nemo_encoder_forward.1} parent=11 // pred_fallthru
          _
        // Predicated region
        $region53: #{nemo_encoder_forward.1} parent=11 // pred_check
          %p491 = pneg %p285
        $region54: #{nemo_encoder_forward.1} parent=11 // pred_check_branch
          %493 = sbr.rel (%p491) target = $region56
        $region55: #{nemo_encoder_forward.1} parent=11 // pred_region
          %s495 = ssub.s32 2048, 2048
          %496 = vsyncadd [#allocation8], %s495
          %s497 = sshll.u32 [#allocation7], 4
          %s498 = int_to_ptr.vmem [resolvable:$true] %s497
          %503 = dma.hbm_to_vmem [thread:$0]  %s11, 2048, %s498, [#allocation8], 64, 64, 4
        $region56: #{nemo_encoder_forward.1} parent=11 // pred_fallthru
          _
        // Predicated region
        $region57: #{nemo_encoder_forward.1} parent=11 // pred_check
          %p504 = pneg %p306
        $region58: #{nemo_encoder_forward.1} parent=11 // pred_check_branch
          %506 = sbr.rel (%p504) target = $region60
        $region59: #{nemo_encoder_forward.1} parent=11 // pred_region
          %s508 = ssub.s32 64, 64
          %509 = vsyncadd [#allocation8], %s508
          %s510 = sshll.u32 [#allocation9], 4
          %s511 = int_to_ptr.vmem [resolvable:$true] %s510
          %516 = dma.hbm_to_vmem [thread:$0]  %s12, 64, %s511, [#allocation8], 16, 16, 1
        $region60: #{nemo_encoder_forward.1} parent=11 // pred_fallthru
          _
        // Predicated region
        $region61: #{nemo_encoder_forward.1} parent=11 // pred_check
          %p517 = pneg %p327
        $region62: #{nemo_encoder_forward.1} parent=11 // pred_check_branch
          %519 = sbr.rel (%p517) target = $region64
        $region63: #{nemo_encoder_forward.1} parent=11 // pred_region
          _
        $region64: #{nemo_encoder_forward.1} parent=11 // pred_fallthru
          _
        // Predicated region
        $region65: #{nemo_encoder_forward.1} parent=11 // pred_check
          %p520 = pneg %p348
        $region66: #{nemo_encoder_forward.1} parent=11 // pred_check_branch
          %522 = sbr.rel (%p520) target = $region68
        $region67: #{nemo_encoder_forward.1} parent=11 // pred_region
          %s524 = ssub.s32 64, 64
          %525 = vsyncadd [#allocation11], %s524
          %s526 = sshll.u32 [#allocation10], 4
          %s527 = int_to_ptr.vmem [resolvable:$true] %s526
          %532 = dma.hbm_to_vmem [thread:$0]  %s14, 64, %s527, [#allocation11], 16, 16, 1
        $region68: #{nemo_encoder_forward.1} parent=11 // pred_fallthru
          _
        // Predicated region
        $region69: #{nemo_encoder_forward.1} parent=11 // pred_check
          %p533 = pneg %p369
        $region70: #{nemo_encoder_forward.1} parent=11 // pred_check_branch
          %535 = sbr.rel (%p533) target = $region72
        $region71: #{nemo_encoder_forward.1} parent=11 // pred_region
          %s537 = ssub.s32 16, 16
          %538 = vsyncadd [#allocation11], %s537
          %s540 = sshll.u32 [#allocation12], 4
          %s541 = int_to_ptr.vmem [resolvable:$true] %s540
          %543 = dma.hbm_to_vmem [thread:$0]  %s15, 16, %s541, [#allocation11]
        $region72: #{nemo_encoder_forward.1} parent=11 // pred_fallthru
          _
        // Predicated region
        $region73: #{nemo_encoder_forward.1} parent=11 // pred_check
          %p544 = pneg %p390
        $region74: #{nemo_encoder_forward.1} parent=11 // pred_check_branch
          %546 = sbr.rel (%p544) target = $region76
        $region75: #{nemo_encoder_forward.1} parent=11 // pred_region
          %s548 = ssub.s32 16, 16
          %549 = vsyncadd [#allocation14], %s548
          %s551 = sshll.u32 [#allocation13], 4
          %s552 = int_to_ptr.vmem [resolvable:$true] %s551
          %554 = dma.hbm_to_vmem [thread:$0]  %s16, 16, %s552, [#allocation14]
        $region76: #{nemo_encoder_forward.1} parent=11 // pred_fallthru
          _
      $region12: #{nemo_encoder_forward.1} parent=5 // pred_fallthru
        _
      %p555 = scmp.lt.s32.totalorder %s28, 2
      // Predicated region
      $region77: #{nemo_encoder_forward.1} parent=5 // pred_check
        %p556 = pneg %p555
      $region78: #{nemo_encoder_forward.1} parent=5 // pred_check_branch
        %558 = sbr.rel (%p556) target = $region80
      $region79: #{nemo_encoder_forward.1} parent=5 // pred_region
        // Predicated region
        $region81: #{nemo_encoder_forward.1} parent=79 // pred_check
          %p559 = pneg %p48
        $region82: #{nemo_encoder_forward.1} parent=79 // pred_check_branch
          %561 = sbr.rel (%p559) target = $region84
        $region83: #{nemo_encoder_forward.1} parent=79 // pred_region
          %p562 = scmp.lt.s32.totalorder %s28, 1
          %s563 = scalar_select %p562, %s28, 1
          %s564 = smul.addr %s563, 4
          %s565 = smul.addr %s564, 8
          %s566 = scalar_lea.vmem %s0, %s565
        $region84: #{nemo_encoder_forward.1} parent=79 // pred_fallthru
          _
      $region80: #{nemo_encoder_forward.1} parent=5 // pred_fallthru
        _
      %p567 = scmp.le.s32.totalorder 1, %s28
      %p568 = scmp.lt.s32.totalorder %s28, 3
      %p569 = pnand %p567, %p568
      %p570 = pneg %p569
      // Predicated region
      $region85: #{nemo_encoder_forward.1} parent=5 // pred_check
        _
      $region86: #{nemo_encoder_forward.1} parent=5 // pred_check_branch
        %572 = sbr.rel (%p569) target = $region88
      $region87: #{nemo_encoder_forward.1} parent=5 // pred_region
        %s573 = ssub.s32 %s28, 1
        // Predicated region
        $region89: #{nemo_encoder_forward.1} parent=87 // pred_check
          %p574 = pneg %p180
        $region90: #{nemo_encoder_forward.1} parent=87 // pred_check_branch
          %576 = sbr.rel (%p574) target = $region92
        $region91: #{nemo_encoder_forward.1} parent=87 // pred_region
          %577 = dma.done [#allocation3], 96
        $region92: #{nemo_encoder_forward.1} parent=87 // pred_fallthru
          _
        // Predicated region
        $region93: #{nemo_encoder_forward.1} parent=87 // pred_check
          %p578 = pneg %p243
        $region94: #{nemo_encoder_forward.1} parent=87 // pred_check_branch
          %580 = sbr.rel (%p578) target = $region96
        $region95: #{nemo_encoder_forward.1} parent=87 // pred_region
          %581 = dma.done [#allocation5], 1024
        $region96: #{nemo_encoder_forward.1} parent=87 // pred_fallthru
          _
        // Predicated region
        $region97: #{nemo_encoder_forward.1} parent=87 // pred_check
          %p582 = pneg %p264
        $region98: #{nemo_encoder_forward.1} parent=87 // pred_check_branch
          %584 = sbr.rel (%p582) target = $region100
        $region99: #{nemo_encoder_forward.1} parent=87 // pred_region
          %585 = dma.done [#allocation5], 32
        $region100: #{nemo_encoder_forward.1} parent=87 // pred_fallthru
          _
        // Predicated region
        $region101: #{nemo_encoder_forward.1} parent=87 // pred_check
          %p586 = pneg %p285
        $region102: #{nemo_encoder_forward.1} parent=87 // pred_check_branch
          %588 = sbr.rel (%p586) target = $region104
        $region103: #{nemo_encoder_forward.1} parent=87 // pred_region
          %589 = dma.done [#allocation8], 2048
        $region104: #{nemo_encoder_forward.1} parent=87 // pred_fallthru
          _
        // Predicated region
        $region105: #{nemo_encoder_forward.1} parent=87 // pred_check
          %p590 = pneg %p306
        $region106: #{nemo_encoder_forward.1} parent=87 // pred_check_branch
          %592 = sbr.rel (%p590) target = $region108
        $region107: #{nemo_encoder_forward.1} parent=87 // pred_region
          %593 = dma.done [#allocation8], 64
        $region108: #{nemo_encoder_forward.1} parent=87 // pred_fallthru
          _
        // Predicated region
        $region109: #{nemo_encoder_forward.1} parent=87 // pred_check
          %p594 = pneg %p348
        $region110: #{nemo_encoder_forward.1} parent=87 // pred_check_branch
          %596 = sbr.rel (%p594) target = $region112
        $region111: #{nemo_encoder_forward.1} parent=87 // pred_region
          %597 = dma.done [#allocation11], 64
        $region112: #{nemo_encoder_forward.1} parent=87 // pred_fallthru
          _
        // Predicated region
        $region113: #{nemo_encoder_forward.1} parent=87 // pred_check
          %p598 = pneg %p369
        $region114: #{nemo_encoder_forward.1} parent=87 // pred_check_branch
          %600 = sbr.rel (%p598) target = $region116
        $region115: #{nemo_encoder_forward.1} parent=87 // pred_region
          %601 = dma.done [#allocation11], 16
        $region116: #{nemo_encoder_forward.1} parent=87 // pred_fallthru
          _
        // Predicated region
        $region117: #{nemo_encoder_forward.1} parent=87 // pred_check
          %p602 = pneg %p390
        $region118: #{nemo_encoder_forward.1} parent=87 // pred_check_branch
          %604 = sbr.rel (%p602) target = $region120
        $region119: #{nemo_encoder_forward.1} parent=87 // pred_region
          %605 = dma.done [#allocation14], 16
        $region120: #{nemo_encoder_forward.1} parent=87 // pred_fallthru
          _
        %p606 = scmp.lt.s32.totalorder %s33, 1
        %s607 = scalar_select %p606, %s33, 1
        %s608 = smul.addr %s607, 4
        %s609 = smul.addr %s608, 8
        %s610 = scalar_lea.vmem %s0, %s609
        %p611 = pneg %p54
        %p612 = pneg %p51
        %p613 = pneg %p75
        %p614 = pneg %p72
        %p615 = pneg %p96
        %p616 = pneg %p93
        %p617 = pneg %p117
        %p618 = pneg %p114
        %p619 = pneg %p138
        %p620 = pneg %p135
        %p621 = pneg %p159
        %p622 = pneg %p156
        %p623 = pneg %p180
        %p624 = pneg %p177
        %p625 = pneg %p201
        %p626 = pneg %p198
        %p627 = pneg %p222
        %p628 = pneg %p219
        %p629 = pneg %p243
        %p630 = pneg %p240
        %p631 = pneg %p264
        %p632 = pneg %p261
        %p633 = pneg %p285
        %p634 = pneg %p282
        %p635 = pneg %p306
        %p636 = pneg %p303
        %p637 = pneg %p327
        %p638 = pneg %p324
        %p639 = pneg %p348
        %p640 = pneg %p345
        %p641 = pneg %p369
        %p642 = pneg %p366
        %p643 = pneg %p390
        %p644 = pneg %p387
        %p645 = pneg %p416
        %p646 = pneg %p413
        %p647 = scmp.lt.s32.totalorder %s33, 1
        %s648 = scalar_select %p647, %s33, 1
        %s649 = smul.addr %s648, 8
        %s650 = scalar_lea.vmem %s17, %s649
        %p651 = scmp.lt.s32.totalorder %s33, 1
        %s652 = scalar_select %p651, %s33, 1
        %s653 = smul.addr %s652, 4
        %s654 = smul.addr %s653, 8
        %s655 = scalar_lea.vmem %s0, %s654
        %p656 = scmp.lt.s32.totalorder %s33, 1
        %s657 = scalar_select %p656, %s33, 1
        %s658 = smul.addr %s657, 8
        %s659 = scalar_lea.vmem %s17, %s658
        %v661 = vld [vmem:[%s655] sm:$0xff]
        %v662 = vld [vmem:[%s655 + $0x8] sm:$0xff]
        %v663 = vld [vmem:[%s655 + $0x10] sm:$0xff]
        %v664 = vld [vmem:[%s655 + $0x18] sm:$0xff]
        %v665 = vpack.c.bf16 %v661, %v661
        %v666 = vpack.c.bf16 %v662, %v662
        %v667 = vpack.c.bf16 %v663, %v663
        %v668 = vpack.c.bf16 %v664, %v664
        %v670 = vrot.slane %v661, 1
        %vm672 = vcmask 1046528
        %v673 = vsel %vm672, %v670, %v670
        %v674 = vpack.c.bf16 %v673, %v673
        %v675 = vld [vmem:[%s1] sm:$0xff]
        %v676 = vld [vmem:[%s1 + $0x8] sm:$0xff]
        %v677 = vld [vmem:[%s1 + $0x10] sm:$0xff]
        %v678 = vld [vmem:[%s1 + $0x18] sm:$0xff]
        %v679 = vld [vmem:[%s1 + $0x20] sm:$0xff]
        %v680 = vld [vmem:[%s1 + $0x28] sm:$0xff]
        %v681 = vld [vmem:[%s1 + $0x30] sm:$0xff]
        %v682 = vld [vmem:[%s1 + $0x38] sm:$0xff]
        %v683 = vld [vmem:[%s1 + $0x40] sm:$0xff]
        %v684 = vld [vmem:[%s1 + $0x48] sm:$0xff]
        %v685 = vld [vmem:[%s1 + $0x50] sm:$0xff]
        %v686 = vld [vmem:[%s1 + $0x58] sm:$0xff]
        %v687 = vld [vmem:[%s1 + $0x60] sm:$0xff]
        %v688 = vld [vmem:[%s1 + $0x68] sm:$0xff]
        %v689 = vld [vmem:[%s1 + $0x70] sm:$0xff]
        %v690 = vld [vmem:[%s1 + $0x78] sm:$0xff]
        %v691 = vld [vmem:[%s1 + $0x80] sm:$0xff]
        %v692 = vld [vmem:[%s1 + $0x88] sm:$0xff]
        %v693 = vld [vmem:[%s1 + $0x90] sm:$0xff]
        %v694 = vld [vmem:[%s1 + $0x98] sm:$0xff]
        %v695 = vld [vmem:[%s1 + $0xa0] sm:$0xff]
        %v696 = vld [vmem:[%s1 + $0xa8] sm:$0xff]
        %v697 = vld [vmem:[%s1 + $0xb0] sm:$0xff]
        %v698 = vld [vmem:[%s1 + $0xb8] sm:$0xff]
        %v699 = vld [vmem:[%s1 + $0xc0] sm:$0xff]
        %v700 = vld [vmem:[%s1 + $0xc8] sm:$0xff]
        %v701 = vld [vmem:[%s1 + $0xd0] sm:$0xff]
        %v702 = vld [vmem:[%s1 + $0xd8] sm:$0xff]
        %v703 = vld [vmem:[%s1 + $0xe0] sm:$0xff]
        %v704 = vld [vmem:[%s1 + $0xe8] sm:$0xff]
        %v705 = vld [vmem:[%s1 + $0xf0] sm:$0xff]
        %v706 = vld [vmem:[%s1 + $0xf8] sm:$0xff]
        %v739 = vunpack.c.l.b16 %v675
        %v740 = vunpack.c.h.b16 %v675
        %v741 = vunpack.c.l.b16 %v676
        %v742 = vunpack.c.h.b16 %v676
        %v743 = vunpack.c.l.b16 %v677
        %v744 = vunpack.c.h.b16 %v677
        %v745 = vunpack.c.l.b16 %v678
        %v746 = vunpack.c.h.b16 %v678
        %v747 = vunpack.c.l.b16 %v679
        %v748 = vunpack.c.h.b16 %v679
        %v749 = vunpack.c.l.b16 %v680
        %v750 = vunpack.c.h.b16 %v680
        %v751 = vunpack.c.l.b16 %v681
        %v752 = vunpack.c.h.b16 %v681
        %v753 = vunpack.c.l.b16 %v682
        %v754 = vunpack.c.h.b16 %v682
        %v755 = vunpack.c.l.b16 %v683
        %v756 = vunpack.c.h.b16 %v683
        %v757 = vunpack.c.l.b16 %v684
        %v758 = vunpack.c.h.b16 %v684
        %v759 = vunpack.c.l.b16 %v685
        %v760 = vunpack.c.h.b16 %v685
        %v761 = vunpack.c.l.b16 %v686
        %v762 = vunpack.c.h.b16 %v686
        %v763 = vunpack.c.l.b16 %v687
        %v764 = vunpack.c.h.b16 %v687
        %v765 = vunpack.c.l.b16 %v688
        %v766 = vunpack.c.h.b16 %v688
        %v767 = vunpack.c.l.b16 %v689
        %v768 = vunpack.c.h.b16 %v689
        %v769 = vunpack.c.l.b16 %v690
        %v770 = vunpack.c.h.b16 %v690
        %v771 = vunpack.c.l.b16 %v691
        %v772 = vunpack.c.h.b16 %v691
        %v773 = vunpack.c.l.b16 %v692
        %v774 = vunpack.c.h.b16 %v692
        %v775 = vunpack.c.l.b16 %v693
        %v776 = vunpack.c.h.b16 %v693
        %v777 = vunpack.c.l.b16 %v694
        %v778 = vunpack.c.h.b16 %v694
        %v779 = vunpack.c.l.b16 %v695
        %v780 = vunpack.c.h.b16 %v695
        %v781 = vunpack.c.l.b16 %v696
        %v782 = vunpack.c.h.b16 %v696
        %v783 = vunpack.c.l.b16 %v697
        %v784 = vunpack.c.h.b16 %v697
        %v785 = vunpack.c.l.b16 %v698
        %v786 = vunpack.c.h.b16 %v698
        %v787 = vunpack.c.l.b16 %v699
        %v788 = vunpack.c.h.b16 %v699
        %v789 = vunpack.c.l.b16 %v700
        %v790 = vunpack.c.h.b16 %v700
        %v791 = vunpack.c.l.b16 %v701
        %v792 = vunpack.c.h.b16 %v701
        %v793 = vunpack.c.l.b16 %v702
        %v794 = vunpack.c.h.b16 %v702
        %v795 = vunpack.c.l.b16 %v703
        %v796 = vunpack.c.h.b16 %v703
        %v797 = vunpack.c.l.b16 %v704
        %v798 = vunpack.c.h.b16 %v704
        %v799 = vunpack.c.l.b16 %v705
        %v800 = vunpack.c.h.b16 %v705
        %v801 = vunpack.c.l.b16 %v706
        %v802 = vunpack.c.h.b16 %v706
        %v803 = vpack.c.b16 %v741, %v739
        %v804 = vpack.c.b16 %v742, %v740
        %v805 = vpack.c.b16 %v745, %v743
        %v806 = vpack.c.b16 %v746, %v744
        %v807 = vpack.c.b16 %v749, %v747
        %v808 = vpack.c.b16 %v750, %v748
        %v809 = vpack.c.b16 %v753, %v751
        %v810 = vpack.c.b16 %v754, %v752
        %v811 = vpack.c.b16 %v757, %v755
        %v812 = vpack.c.b16 %v758, %v756
        %v813 = vpack.c.b16 %v761, %v759
        %v814 = vpack.c.b16 %v762, %v760
        %v815 = vpack.c.b16 %v765, %v763
        %v816 = vpack.c.b16 %v766, %v764
        %v817 = vpack.c.b16 %v769, %v767
        %v818 = vpack.c.b16 %v770, %v768
        %v819 = vpack.c.b16 %v773, %v771
        %v820 = vpack.c.b16 %v774, %v772
        %v821 = vpack.c.b16 %v777, %v775
        %v822 = vpack.c.b16 %v778, %v776
        %v823 = vpack.c.b16 %v781, %v779
        %v824 = vpack.c.b16 %v782, %v780
        %v825 = vpack.c.b16 %v785, %v783
        %v826 = vpack.c.b16 %v786, %v784
        %v827 = vpack.c.b16 %v789, %v787
        %v828 = vpack.c.b16 %v790, %v788
        %v829 = vpack.c.b16 %v793, %v791
        %v830 = vpack.c.b16 %v794, %v792
        %v831 = vpack.c.b16 %v797, %v795
        %v832 = vpack.c.b16 %v798, %v796
        %v833 = vpack.c.b16 %v801, %v799
        %v834 = vpack.c.b16 %v802, %v800
        %867 = vmatprep.subr.bf16.mxu0 %v804
        %868 = vmatpush1.bf16.msra.mxu0 %v803
        %869 = vmatprep.subr.bf16.mxu0 %v806
        %870 = vmatpush1.bf16.msra.mxu0 %v805
        %871 = vmatprep.subr.bf16.mxu0 %v808
        %872 = vmatpush1.bf16.msra.mxu0 %v807
        %873 = vmatprep.subr.bf16.mxu0 %v810
        %874 = vmatpush1.bf16.msra.mxu0 %v809
        %875 = vmatprep.subr.bf16.mxu0 %v812
        %876 = vmatpush1.bf16.msra.mxu0 %v811
        %877 = vmatprep.subr.bf16.mxu0 %v814
        %878 = vmatpush1.bf16.msra.mxu0 %v813
        %879 = vmatprep.subr.bf16.mxu0 %v816
        %880 = vmatpush1.bf16.msra.mxu0 %v815
        %881 = vmatprep.subr.bf16.mxu0 %v818
        %882 = vmatpush1.bf16.msra.mxu0 %v817
        %883 = vmatprep.subr.bf16.mxu0 %v820
        %884 = vmatpush1.bf16.msra.mxu0 %v819
        %885 = vmatprep.subr.bf16.mxu0 %v822
        %886 = vmatpush1.bf16.msra.mxu0 %v821
        %887 = vmatprep.subr.bf16.mxu0 %v824
        %888 = vmatpush1.bf16.msra.mxu0 %v823
        %889 = vmatprep.subr.bf16.mxu0 %v826
        %890 = vmatpush1.bf16.msra.mxu0 %v825
        %891 = vmatprep.subr.bf16.mxu0 %v828
        %892 = vmatpush1.bf16.msra.mxu0 %v827
        %893 = vmatprep.subr.bf16.mxu0 %v830
        %894 = vmatpush1.bf16.msra.mxu0 %v829
        %895 = vmatprep.subr.bf16.mxu0 %v832
        %896 = vmatpush1.bf16.msra.mxu0 %v831
        %897 = vmatprep.subr.bf16.mxu0 %v834
        %898 = vmatpush1.bf16.msra.mxu0 %v833
        %899 = vmatprep.mubr.bf16.mxu0 %v666
        %900 = vmatmul.mubr.bf16.gmra.mrb[0].mxu0 %v665
        %v901 = vpop.f32.mrb[0].mxu0
        %v902 = vadd.f32 0.0, %v901
        %v903 = vpop.f32.mrb[0].mxu0
        %v904 = vadd.f32 0.0, %v903
        %v905 = vpop.f32.mrb[0].mxu0
        %v906 = vpop.f32.mrb[0].mxu0
        %907 = vdwg.mxu0
        %v908 = vmul.f32 %v902, %v902
        %v909 = vmul.f32 %v904, %v904
        %v910 = vadd.f32 %v908, %v909
        %911 = vmatprep.subr.bf16.mxu0 %v804
        %912 = vmatpush1.bf16.msra.mxu0 %v803
        %913 = vmatprep.subr.bf16.mxu0 %v806
        %914 = vmatpush1.bf16.msra.mxu0 %v805
        %915 = vmatprep.subr.bf16.mxu0 %v808
        %916 = vmatpush1.bf16.msra.mxu0 %v807
        %917 = vmatprep.subr.bf16.mxu0 %v810
        %918 = vmatpush1.bf16.msra.mxu0 %v809
        %919 = vmatprep.subr.bf16.mxu0 %v812
        %920 = vmatpush1.bf16.msra.mxu0 %v811
        %921 = vmatprep.subr.bf16.mxu0 %v814
        %922 = vmatpush1.bf16.msra.mxu0 %v813
        %923 = vmatprep.subr.bf16.mxu0 %v816
        %924 = vmatpush1.bf16.msra.mxu0 %v815
        %925 = vmatprep.subr.bf16.mxu0 %v818
        %926 = vmatpush1.bf16.msra.mxu0 %v817
        %927 = vmatprep.subr.bf16.mxu0 %v820
        %928 = vmatpush1.bf16.msra.mxu0 %v819
        %929 = vmatprep.subr.bf16.mxu0 %v822
        %930 = vmatpush1.bf16.msra.mxu0 %v821
        %931 = vmatprep.subr.bf16.mxu0 %v824
        %932 = vmatpush1.bf16.msra.mxu0 %v823
        %933 = vmatprep.subr.bf16.mxu0 %v826
        %934 = vmatpush1.bf16.msra.mxu0 %v825
        %935 = vmatprep.subr.bf16.mxu0 %v828
        %936 = vmatpush1.bf16.msra.mxu0 %v827
        %937 = vmatprep.subr.bf16.mxu0 %v830
        %938 = vmatpush1.bf16.msra.mxu0 %v829
        %939 = vmatprep.subr.bf16.mxu0 %v832
        %940 = vmatpush1.bf16.msra.mxu0 %v831
        %941 = vmatprep.subr.bf16.mxu0 %v834
        %942 = vmatpush1.bf16.msra.mxu0 %v833
        %943 = vmatprep.mubr.bf16.mxu0 %v667
        %944 = vmatmul.mubr.bf16.gmra.mrb[0].mxu0 %v666
        %v945 = vpop.f32.mrb[0].mxu0
        %v946 = vadd.f32 0.0, %v945
        %v947 = vpop.f32.mrb[0].mxu0
        %v948 = vadd.f32 0.0, %v947
        %v949 = vpop.f32.mrb[0].mxu0
        %v950 = vpop.f32.mrb[0].mxu0
        %951 = vdwg.mxu0
        %v952 = vmul.f32 %v946, %v946
        %v953 = vmul.f32 %v948, %v948
        %v954 = vadd.f32 %v952, %v953
        %955 = vmatprep.subr.bf16.mxu0 %v804
        %956 = vmatpush1.bf16.msra.mxu0 %v803
        %957 = vmatprep.subr.bf16.mxu0 %v806
        %958 = vmatpush1.bf16.msra.mxu0 %v805
        %959 = vmatprep.subr.bf16.mxu0 %v808
        %960 = vmatpush1.bf16.msra.mxu0 %v807
        %961 = vmatprep.subr.bf16.mxu0 %v810
        %962 = vmatpush1.bf16.msra.mxu0 %v809
        %963 = vmatprep.subr.bf16.mxu0 %v812
        %964 = vmatpush1.bf16.msra.mxu0 %v811
        %965 = vmatprep.subr.bf16.mxu0 %v814
        %966 = vmatpush1.bf16.msra.mxu0 %v813
        %967 = vmatprep.subr.bf16.mxu0 %v816
        %968 = vmatpush1.bf16.msra.mxu0 %v815
        %969 = vmatprep.subr.bf16.mxu0 %v818
        %970 = vmatpush1.bf16.msra.mxu0 %v817
        %971 = vmatprep.subr.bf16.mxu0 %v820
        %972 = vmatpush1.bf16.msra.mxu0 %v819
        %973 = vmatprep.subr.bf16.mxu0 %v822
        %974 = vmatpush1.bf16.msra.mxu0 %v821
        %975 = vmatprep.subr.bf16.mxu0 %v824
        %976 = vmatpush1.bf16.msra.mxu0 %v823
        %977 = vmatprep.subr.bf16.mxu0 %v826
        %978 = vmatpush1.bf16.msra.mxu0 %v825
        %979 = vmatprep.subr.bf16.mxu0 %v828
        %980 = vmatpush1.bf16.msra.mxu0 %v827
        %981 = vmatprep.subr.bf16.mxu0 %v830
        %982 = vmatpush1.bf16.msra.mxu0 %v829
        %983 = vmatprep.subr.bf16.mxu0 %v832
        %984 = vmatpush1.bf16.msra.mxu0 %v831
        %985 = vmatprep.subr.bf16.mxu0 %v834
        %986 = vmatpush1.bf16.msra.mxu0 %v833
        %987 = vmatprep.mubr.bf16.mxu0 %v668
        %988 = vmatmul.mubr.bf16.gmra.mrb[0].mxu0 %v667
        %v989 = vpop.f32.mrb[0].mxu0
        %v990 = vadd.f32 0.0, %v989
        %v991 = vpop.f32.mrb[0].mxu0
        %v992 = vadd.f32 0.0, %v991
        %v993 = vpop.f32.mrb[0].mxu0
        %v994 = vpop.f32.mrb[0].mxu0
        %995 = vdwg.mxu0
        %v996 = vmul.f32 %v990, %v990
        %v997 = vmul.f32 %v992, %v992
        %v998 = vadd.f32 %v996, %v997
        %999 = vmatprep.subr.bf16.mxu0 %v804
        %1000 = vmatpush1.bf16.msra.mxu0 %v803
        %1001 = vmatprep.subr.bf16.mxu0 %v806
        %1002 = vmatpush1.bf16.msra.mxu0 %v805
        %1003 = vmatprep.subr.bf16.mxu0 %v808
        %1004 = vmatpush1.bf16.msra.mxu0 %v807
        %1005 = vmatprep.subr.bf16.mxu0 %v810
        %1006 = vmatpush1.bf16.msra.mxu0 %v809
        %1007 = vmatprep.subr.bf16.mxu0 %v812
        %1008 = vmatpush1.bf16.msra.mxu0 %v811
        %1009 = vmatprep.subr.bf16.mxu0 %v814
        %1010 = vmatpush1.bf16.msra.mxu0 %v813
        %1011 = vmatprep.subr.bf16.mxu0 %v816
        %1012 = vmatpush1.bf16.msra.mxu0 %v815
        %1013 = vmatprep.subr.bf16.mxu0 %v818
        %1014 = vmatpush1.bf16.msra.mxu0 %v817
        %1015 = vmatprep.subr.bf16.mxu0 %v820
        %1016 = vmatpush1.bf16.msra.mxu0 %v819
        %1017 = vmatprep.subr.bf16.mxu0 %v822
        %1018 = vmatpush1.bf16.msra.mxu0 %v821
        %1019 = vmatprep.subr.bf16.mxu0 %v824
        %1020 = vmatpush1.bf16.msra.mxu0 %v823
        %1021 = vmatprep.subr.bf16.mxu0 %v826
        %1022 = vmatpush1.bf16.msra.mxu0 %v825
        %1023 = vmatprep.subr.bf16.mxu0 %v828
        %1024 = vmatpush1.bf16.msra.mxu0 %v827
        %1025 = vmatprep.subr.bf16.mxu0 %v830
        %1026 = vmatpush1.bf16.msra.mxu0 %v829
        %1027 = vmatprep.subr.bf16.mxu0 %v832
        %1028 = vmatpush1.bf16.msra.mxu0 %v831
        %1029 = vmatprep.subr.bf16.mxu0 %v834
        %1030 = vmatpush1.bf16.msra.mxu0 %v833
        %1031 = vmatprep.mubr.bf16.mxu0 %v674
        %1032 = vmatmul.mubr.bf16.gmra.mrb[0].mxu0 %v668
        %v1033 = vpop.f32.mrb[0].mxu0
        %v1034 = vadd.f32 0.0, %v1033
        %v1035 = vpop.f32.mrb[0].mxu0
        %v1036 = vadd.f32 0.0, %v1035
        %v1037 = vpop.f32.mrb[0].mxu0
        %v1038 = vpop.f32.mrb[0].mxu0
        %1039 = vdwg.mxu0
        %v1040 = vmul.f32 %v1034, %v1034
        %v1041 = vmul.f32 %v1036, %v1036
        %v1042 = vadd.f32 %v1040, %v1041
        %v1043 = vpack.c.bf16 %v910, %v910
        %v1044 = vpack.c.bf16 %v954, %v954
        %v1045 = vpack.c.bf16 %v998, %v998
        %v1046 = vpack.c.bf16 %v1042, %v1042
        %v1047 = vld [vmem:[%s2] sm:$0xf]
        %v1048 = vld [vmem:[%s2 + $0x4] sm:$0xf]
        %v1049 = vld [vmem:[%s2 + $0x8] sm:$0xf]
        %v1050 = vld [vmem:[%s2 + $0xc] sm:$0xf]
        %v1051 = vld [vmem:[%s2 + $0x10] sm:$0xf]
        %v1052 = vld [vmem:[%s2 + $0x14] sm:$0xf]
        %v1053 = vld [vmem:[%s2 + $0x18] sm:$0xf]
        %v1054 = vld [vmem:[%s2 + $0x1c] sm:$0xf]
        %v1055 = vld [vmem:[%s2 + $0x20] sm:$0xf]
        %v1056 = vld [vmem:[%s2 + $0x24] sm:$0xf]
        %v1057 = vld [vmem:[%s2 + $0x28] sm:$0xf]
        %v1058 = vld [vmem:[%s2 + $0x2c] sm:$0xf]
        %v1059 = vld [vmem:[%s2 + $0x30] sm:$0xf]
        %v1060 = vld [vmem:[%s2 + $0x34] sm:$0xf]
        %v1061 = vld [vmem:[%s2 + $0x38] sm:$0xf]
        %v1062 = vld [vmem:[%s2 + $0x3c] sm:$0xf]
        %v1063 = vld [vmem:[%s2 + $0x40] sm:$0xf]
        %v1064 = vld [vmem:[%s2 + $0x44] sm:$0xf]
        %v1065 = vld [vmem:[%s2 + $0x48] sm:$0xf]
        %v1066 = vld [vmem:[%s2 + $0x4c] sm:$0xf]
        %v1067 = vld [vmem:[%s2 + $0x50] sm:$0xf]
        %v1068 = vld [vmem:[%s2 + $0x54] sm:$0xf]
        %v1069 = vld [vmem:[%s2 + $0x58] sm:$0xf]
        %v1070 = vld [vmem:[%s2 + $0x5c] sm:$0xf]
        %v1071 = vld [vmem:[%s2 + $0x60] sm:$0xf]
        %v1072 = vld [vmem:[%s2 + $0x64] sm:$0xf]
        %v1073 = vld [vmem:[%s2 + $0x68] sm:$0xf]
        %v1074 = vld [vmem:[%s2 + $0x6c] sm:$0xf]
        %v1075 = vld [vmem:[%s2 + $0x70] sm:$0xf]
        %v1076 = vld [vmem:[%s2 + $0x74] sm:$0xf]
        %v1077 = vld [vmem:[%s2 + $0x78] sm:$0xf]
        %v1078 = vld [vmem:[%s2 + $0x7c] sm:$0xf]
        %v1079 = vld [vmem:[%s2 + $0x80] sm:$0xf]
        %v1080 = vld [vmem:[%s2 + $0x84] sm:$0xf]
        %v1081 = vld [vmem:[%s2 + $0x88] sm:$0xf]
        %v1082 = vld [vmem:[%s2 + $0x8c] sm:$0xf]
        %v1083 = vld [vmem:[%s2 + $0x90] sm:$0xf]
        %v1084 = vld [vmem:[%s2 + $0x94] sm:$0xf]
        %v1085 = vld [vmem:[%s2 + $0x98] sm:$0xf]
        %v1086 = vld [vmem:[%s2 + $0x9c] sm:$0xf]
        %v1087 = vld [vmem:[%s2 + $0xa0] sm:$0xf]
        %v1088 = vld [vmem:[%s2 + $0xa4] sm:$0xf]
        %v1089 = vld [vmem:[%s2 + $0xa8] sm:$0xf]
        %v1090 = vld [vmem:[%s2 + $0xac] sm:$0xf]
        %v1091 = vld [vmem:[%s2 + $0xb0] sm:$0xf]
        %v1092 = vld [vmem:[%s2 + $0xb4] sm:$0xf]
        %v1093 = vld [vmem:[%s2 + $0xb8] sm:$0xf]
        %v1094 = vld [vmem:[%s2 + $0xbc] sm:$0xf]
        %v1095 = vld [vmem:[%s2 + $0xc0] sm:$0xf]
        %v1096 = vld [vmem:[%s2 + $0xc4] sm:$0xf]
        %v1097 = vld [vmem:[%s2 + $0xc8] sm:$0xf]
        %v1098 = vld [vmem:[%s2 + $0xcc] sm:$0xf]
        %v1099 = vld [vmem:[%s2 + $0xd0] sm:$0xf]
        %v1100 = vld [vmem:[%s2 + $0xd4] sm:$0xf]
        %v1101 = vld [vmem:[%s2 + $0xd8] sm:$0xf]
        %v1102 = vld [vmem:[%s2 + $0xdc] sm:$0xf]
        %v1103 = vld [vmem:[%s2 + $0xe0] sm:$0xf]
        %v1104 = vld [vmem:[%s2 + $0xe4] sm:$0xf]
        %v1105 = vld [vmem:[%s2 + $0xe8] sm:$0xf]
        %v1106 = vld [vmem:[%s2 + $0xec] sm:$0xf]
        %v1107 = vld [vmem:[%s2 + $0xf0] sm:$0xf]
        %v1108 = vld [vmem:[%s2 + $0xf4] sm:$0xf]
        %v1109 = vld [vmem:[%s2 + $0xf8] sm:$0xf]
        %v1110 = vld [vmem:[%s2 + $0xfc] sm:$0xf]
        %v1175 = vunpack.c.l.b16 %v1047
        %v1176 = vunpack.c.l.b16 %v1048
        %v1177 = vunpack.c.l.b16 %v1049
        %v1178 = vunpack.c.l.b16 %v1050
        %v1179 = vunpack.c.l.b16 %v1051
        %v1180 = vunpack.c.l.b16 %v1052
        %v1181 = vunpack.c.l.b16 %v1053
        %v1182 = vunpack.c.l.b16 %v1054
        %v1183 = vunpack.c.l.b16 %v1055
        %v1184 = vunpack.c.l.b16 %v1056
        %v1185 = vunpack.c.l.b16 %v1057
        %v1186 = vunpack.c.l.b16 %v1058
        %v1187 = vunpack.c.l.b16 %v1059
        %v1188 = vunpack.c.l.b16 %v1060
        %v1189 = vunpack.c.l.b16 %v1061
        %v1190 = vunpack.c.l.b16 %v1062
        %v1191 = vunpack.c.l.b16 %v1063
        %v1192 = vunpack.c.l.b16 %v1064
        %v1193 = vunpack.c.l.b16 %v1065
        %v1194 = vunpack.c.l.b16 %v1066
        %v1195 = vunpack.c.l.b16 %v1067
        %v1196 = vunpack.c.l.b16 %v1068
        %v1197 = vunpack.c.l.b16 %v1069
        %v1198 = vunpack.c.l.b16 %v1070
        %v1199 = vunpack.c.l.b16 %v1071
        %v1200 = vunpack.c.l.b16 %v1072
        %v1201 = vunpack.c.l.b16 %v1073
        %v1202 = vunpack.c.l.b16 %v1074
        %v1203 = vunpack.c.l.b16 %v1075
        %v1204 = vunpack.c.l.b16 %v1076
        %v1205 = vunpack.c.l.b16 %v1077
        %v1206 = vunpack.c.l.b16 %v1078
        %v1207 = vunpack.c.l.b16 %v1079
        %v1208 = vunpack.c.l.b16 %v1080
        %v1209 = vunpack.c.l.b16 %v1081
        %v1210 = vunpack.c.l.b16 %v1082
        %v1211 = vunpack.c.l.b16 %v1083
        %v1212 = vunpack.c.l.b16 %v1084
        %v1213 = vunpack.c.l.b16 %v1085
        %v1214 = vunpack.c.l.b16 %v1086
        %v1215 = vunpack.c.l.b16 %v1087
        %v1216 = vunpack.c.l.b16 %v1088
        %v1217 = vunpack.c.l.b16 %v1089
        %v1218 = vunpack.c.l.b16 %v1090
        %v1219 = vunpack.c.l.b16 %v1091
        %v1220 = vunpack.c.l.b16 %v1092
        %v1221 = vunpack.c.l.b16 %v1093
        %v1222 = vunpack.c.l.b16 %v1094
        %v1223 = vunpack.c.l.b16 %v1095
        %v1224 = vunpack.c.l.b16 %v1096
        %v1225 = vunpack.c.l.b16 %v1097
        %v1226 = vunpack.c.l.b16 %v1098
        %v1227 = vunpack.c.l.b16 %v1099
        %v1228 = vunpack.c.l.b16 %v1100
        %v1229 = vunpack.c.l.b16 %v1101
        %v1230 = vunpack.c.l.b16 %v1102
        %v1231 = vunpack.c.l.b16 %v1103
        %v1232 = vunpack.c.l.b16 %v1104
        %v1233 = vunpack.c.l.b16 %v1105
        %v1234 = vunpack.c.l.b16 %v1106
        %v1235 = vunpack.c.l.b16 %v1107
        %v1236 = vunpack.c.l.b16 %v1108
        %v1237 = vunpack.c.l.b16 %v1109
        %v1238 = vunpack.c.l.b16 %v1110
        %v1239 = vpack.c.b16 %v1176, %v1175
        %v1240 = vpack.c.b16 %v1178, %v1177
        %v1241 = vpack.c.b16 %v1180, %v1179
        %v1242 = vpack.c.b16 %v1182, %v1181
        %v1243 = vpack.c.b16 %v1184, %v1183
        %v1244 = vpack.c.b16 %v1186, %v1185
        %v1245 = vpack.c.b16 %v1188, %v1187
        %v1246 = vpack.c.b16 %v1190, %v1189
        %v1247 = vpack.c.b16 %v1192, %v1191
        %v1248 = vpack.c.b16 %v1194, %v1193
        %v1249 = vpack.c.b16 %v1196, %v1195
        %v1250 = vpack.c.b16 %v1198, %v1197
        %v1251 = vpack.c.b16 %v1200, %v1199
        %v1252 = vpack.c.b16 %v1202, %v1201
        %v1253 = vpack.c.b16 %v1204, %v1203
        %v1254 = vpack.c.b16 %v1206, %v1205
        %v1255 = vpack.c.b16 %v1208, %v1207
        %v1256 = vpack.c.b16 %v1210, %v1209
        %v1257 = vpack.c.b16 %v1212, %v1211
        %v1258 = vpack.c.b16 %v1214, %v1213
        %v1259 = vpack.c.b16 %v1216, %v1215
        %v1260 = vpack.c.b16 %v1218, %v1217
        %v1261 = vpack.c.b16 %v1220, %v1219
        %v1262 = vpack.c.b16 %v1222, %v1221
        %v1263 = vpack.c.b16 %v1224, %v1223
        %v1264 = vpack.c.b16 %v1226, %v1225
        %v1265 = vpack.c.b16 %v1228, %v1227
        %v1266 = vpack.c.b16 %v1230, %v1229
        %v1267 = vpack.c.b16 %v1232, %v1231
        %v1268 = vpack.c.b16 %v1234, %v1233
        %v1269 = vpack.c.b16 %v1236, %v1235
        %v1270 = vpack.c.b16 %v1238, %v1237
        %1303 = vmatprep.subr.bf16.mxu0 0
        %1304 = vmatpush1.bf16.msra.mxu0 %v1239
        %1305 = vmatprep.subr.bf16.mxu0 0
        %1306 = vmatpush1.bf16.msra.mxu0 %v1240
        %1307 = vmatprep.subr.bf16.mxu0 0
        %1308 = vmatpush1.bf16.msra.mxu0 %v1241
        %1309 = vmatprep.subr.bf16.mxu0 0
        %1310 = vmatpush1.bf16.msra.mxu0 %v1242
        %1311 = vmatprep.subr.bf16.mxu0 0
        %1312 = vmatpush1.bf16.msra.mxu0 %v1243
        %1313 = vmatprep.subr.bf16.mxu0 0
        %1314 = vmatpush1.bf16.msra.mxu0 %v1244
        %1315 = vmatprep.subr.bf16.mxu0 0
        %1316 = vmatpush1.bf16.msra.mxu0 %v1245
        %1317 = vmatprep.subr.bf16.mxu0 0
        %1318 = vmatpush1.bf16.msra.mxu0 %v1246
        %1319 = vmatprep.subr.bf16.mxu0 0
        %1320 = vmatpush1.bf16.msra.mxu0 %v1247
        %1321 = vmatprep.subr.bf16.mxu0 0
        %1322 = vmatpush1.bf16.msra.mxu0 %v1248
        %1323 = vmatprep.subr.bf16.mxu0 0
        %1324 = vmatpush1.bf16.msra.mxu0 %v1249
        %1325 = vmatprep.subr.bf16.mxu0 0
        %1326 = vmatpush1.bf16.msra.mxu0 %v1250
        %1327 = vmatprep.subr.bf16.mxu0 0
        %1328 = vmatpush1.bf16.msra.mxu0 %v1251
        %1329 = vmatprep.subr.bf16.mxu0 0
        %1330 = vmatpush1.bf16.msra.mxu0 %v1252
        %1331 = vmatprep.subr.bf16.mxu0 0
        %1332 = vmatpush1.bf16.msra.mxu0 %v1253
        %1333 = vmatprep.subr.bf16.mxu0 0
        %1334 = vmatpush1.bf16.msra.mxu0 %v1254
        %1335 = vmatprep.mubr.bf16.mxu0 %v1044
        %1336 = vmatmul.mubr.bf16.gmra.mrb[0].mxu0 %v1043
        %v1337 = vpop.f32.mrb[0].mxu0
        %v1338 = vadd.f32 5.9604645e-08, %v1337
        %v1339 = vpop.f32.mrb[0].mxu0
        %v1340 = vpop.f32.mrb[0].mxu0
        %v1341 = vpop.f32.mrb[0].mxu0
        %1342 = vdwg.mxu0
        %1343 = vmatprep.subr.bf16.mxu0 0
        %1344 = vmatpush1.bf16.msra.mxu0 %v1255
        %1345 = vmatprep.subr.bf16.mxu0 0
        %1346 = vmatpush1.bf16.msra.mxu0 %v1256
        %1347 = vmatprep.subr.bf16.mxu0 0
        %1348 = vmatpush1.bf16.msra.mxu0 %v1257
        %1349 = vmatprep.subr.bf16.mxu0 0
        %1350 = vmatpush1.bf16.msra.mxu0 %v1258
        %1351 = vmatprep.subr.bf16.mxu0 0
        %1352 = vmatpush1.bf16.msra.mxu0 %v1259
        %1353 = vmatprep.subr.bf16.mxu0 0
        %1354 = vmatpush1.bf16.msra.mxu0 %v1260
        %1355 = vmatprep.subr.bf16.mxu0 0
        %1356 = vmatpush1.bf16.msra.mxu0 %v1261
        %1357 = vmatprep.subr.bf16.mxu0 0
        %1358 = vmatpush1.bf16.msra.mxu0 %v1262
        %1359 = vmatprep.subr.bf16.mxu0 0
        %1360 = vmatpush1.bf16.msra.mxu0 %v1263
        %1361 = vmatprep.subr.bf16.mxu0 0
        %1362 = vmatpush1.bf16.msra.mxu0 %v1264
        %1363 = vmatprep.subr.bf16.mxu0 0
        %1364 = vmatpush1.bf16.msra.mxu0 %v1265
        %1365 = vmatprep.subr.bf16.mxu0 0
        %1366 = vmatpush1.bf16.msra.mxu0 %v1266
        %1367 = vmatprep.subr.bf16.mxu0 0
        %1368 = vmatpush1.bf16.msra.mxu0 %v1267
        %1369 = vmatprep.subr.bf16.mxu0 0
        %1370 = vmatpush1.bf16.msra.mxu0 %v1268
        %1371 = vmatprep.subr.bf16.mxu0 0
        %1372 = vmatpush1.bf16.msra.mxu0 %v1269
        %1373 = vmatprep.subr.bf16.mxu0 0
        %1374 = vmatpush1.bf16.msra.mxu0 %v1270
        %1375 = vmatprep.mubr.bf16.mxu0 %v1046
        %1376 = vmatmul.mubr.bf16.gmra.mrb[0].mxu0 %v1045
        %v1377 = vpop.f32.mrb[0].mxu0
        %v1378 = vadd.f32 %v1338, %v1377
        %v1379 = vpop.f32.mrb[0].mxu0
        %v1380 = vpop.f32.mrb[0].mxu0
        %v1381 = vpop.f32.mrb[0].mxu0
        %1382 = vdwg.mxu0
        %v1383 = vlog2.pop %v1378
        %v1384 = vmul.f32 %v1383, 0.6931472
        %v1385 = vlaneseq
        %v1386 = vshrl.u32 %v1385, 7
        %v1387 = vlaneseq
        %v1388 = vand.u32 %v1387, 127
        %v1389 = vmul.u32 %v1386, 4
        %v1390 = vshrl.u32 %v1388, 5
        %v1391 = vadd.s32 %v1389, %v1390
        %vm1392 = vcmp.lt.s32.totalorder %v1391, 31
        %v1393 = vsel %vm1392, 1, 0
        %v1394 = vcvt.s32.f32 %v1393
        %v1395 = vmul.f32 %v1384, %v1394
        %v1396 = vrot.slane %v1395, 4
        %v1397 = vadd.f32 %v1395, %v1396
        %v1398 = vrot.slane %v1397, 2
        %v1399 = vadd.f32 %v1397, %v1398
        %v1400 = vrot.slane %v1399, 1
        %v1401 = vadd.f32 %v1399, %v1400
        %1402 = vrot.lane.b32.xlu0 %v1401, 64
        %v1403 = vpop.permute.xlu0 %1402
        %v1404 = vadd.f32 %v1401, %v1403
        %1405 = vrot.lane.b32.xlu0 %v1404, 32
        %v1406 = vpop.permute.xlu0 %1405
        %v1407 = vadd.f32 %v1404, %v1406
        %v1408 = vmul.f32 %v1407, 0.032258064
        %v1409 = vlaneseq
        %v1410 = vshrl.u32 %v1409, 7
        %v1411 = vsub.s32 0, %v1410
        %v1412 = vrot.slane %v1408, %v1411
        %v1413 = vsub.f32 %v1384, %v1412
        %v1414 = vmul.f32 %v1413, %v1394
        %v1415 = vmul.f32 %v1414, %v1414
        %v1416 = vrot.slane %v1415, 4
        %v1417 = vadd.f32 %v1415, %v1416
        %v1418 = vrot.slane %v1417, 2
        %v1419 = vadd.f32 %v1417, %v1418
        %v1420 = vrot.slane %v1419, 1
        %v1421 = vadd.f32 %v1419, %v1420
        %1422 = vrot.lane.b32.xlu0 %v1421, 64
        %v1423 = vpop.permute.xlu0 %1422
        %v1424 = vadd.f32 %v1421, %v1423
        %1425 = vrot.lane.b32.xlu0 %v1424, 32
        %v1426 = vpop.permute.xlu0 %1425
        %v1427 = vadd.f32 %v1424, %v1426
        %v1428 = vmul.f32 %v1427, 0.033333335
        %v1429 = vadd.f32 %v1428, 1e-05
        %v1430 = vrsqrt.pop %v1429
        %v1431 = vlaneseq
        %v1432 = vshrl.u32 %v1431, 7
        %v1433 = vsub.s32 0, %v1432
        %v1434 = vrot.slane %v1430, %v1433
        %v1435 = vmul.f32 %v1413, %v1434
        %v1436 = vld [vmem:[%s3] sm:$0xf]
        %v1437 = vld [vmem:[%s3 + $0x4] sm:$0xf]
        %v1438 = vld [vmem:[%s3 + $0x8] sm:$0xf]
        %v1439 = vld [vmem:[%s3 + $0xc] sm:$0xf]
        %v1440 = vld [vmem:[%s3 + $0x10] sm:$0xf]
        %v1441 = vld [vmem:[%s3 + $0x14] sm:$0xf]
        %v1442 = vld [vmem:[%s3 + $0x18] sm:$0xf]
        %v1443 = vld [vmem:[%s3 + $0x1c] sm:$0xf]
        %v1444 = vld [vmem:[%s3 + $0x20] sm:$0xf]
        %v1445 = vld [vmem:[%s3 + $0x24] sm:$0xf]
        %v1446 = vld [vmem:[%s3 + $0x28] sm:$0xf]
        %v1447 = vld [vmem:[%s3 + $0x2c] sm:$0xf]
        %v1448 = vld [vmem:[%s3 + $0x30] sm:$0xf]
        %v1449 = vld [vmem:[%s3 + $0x34] sm:$0xf]
        %v1450 = vld [vmem:[%s3 + $0x38] sm:$0xf]
        %v1451 = vld [vmem:[%s3 + $0x3c] sm:$0xf]
        %v1452 = vpack.c.bf16 %v1435, %v1435
        %v1453 = vld [vmem:[%s4] sm:$0x1]
        %v1455 = vlaneseq
        %v1456 = vshrl.u32 %v1455, 7
        %v1457 = vsub.s32 0, %v1456
        %v1458 = vrot.slane %v1453, %v1457
        %v1476 = vunpack.c.l.b16 %v1436
        %v1477 = vunpack.c.l.b16 %v1437
        %v1478 = vunpack.c.l.b16 %v1438
        %v1479 = vunpack.c.l.b16 %v1439
        %v1480 = vunpack.c.l.b16 %v1440
        %v1481 = vunpack.c.l.b16 %v1441
        %v1482 = vunpack.c.l.b16 %v1442
        %v1483 = vunpack.c.l.b16 %v1443
        %v1484 = vunpack.c.l.b16 %v1444
        %v1485 = vunpack.c.l.b16 %v1445
        %v1486 = vunpack.c.l.b16 %v1446
        %v1487 = vunpack.c.l.b16 %v1447
        %v1488 = vunpack.c.l.b16 %v1448
        %v1489 = vunpack.c.l.b16 %v1449
        %v1490 = vunpack.c.l.b16 %v1450
        %v1491 = vunpack.c.l.b16 %v1451
        %v1492 = vpack.c.b16 %v1477, %v1476
        %v1493 = vpack.c.b16 %v1479, %v1478
        %v1494 = vpack.c.b16 %v1481, %v1480
        %v1495 = vpack.c.b16 %v1483, %v1482
        %v1496 = vpack.c.b16 %v1485, %v1484
        %v1497 = vpack.c.b16 %v1487, %v1486
        %v1498 = vpack.c.b16 %v1489, %v1488
        %v1499 = vpack.c.b16 %v1491, %v1490
        %1508 = vmatprep.subr.bf16.mxu0 0
        %1509 = vmatpush1.bf16.msra.mxu0 %v1492
        %1510 = vmatprep.subr.bf16.mxu0 0
        %1511 = vmatpush1.bf16.msra.mxu0 %v1493
        %1512 = vmatprep.subr.bf16.mxu0 0
        %1513 = vmatpush1.bf16.msra.mxu0 %v1494
        %1514 = vmatprep.subr.bf16.mxu0 0
        %1515 = vmatpush1.bf16.msra.mxu0 %v1495
        %1516 = vmatprep.subr.bf16.mxu0 0
        %1517 = vmatpush1.bf16.msra.mxu0 %v1496
        %1518 = vmatprep.subr.bf16.mxu0 0
        %1519 = vmatpush1.bf16.msra.mxu0 %v1497
        %1520 = vmatprep.subr.bf16.mxu0 0
        %1521 = vmatpush1.bf16.msra.mxu0 %v1498
        %1522 = vmatprep.subr.bf16.mxu0 0
        %1523 = vmatpush1.bf16.msra.mxu0 %v1499
        %1524 = vmatprep.subr.bf16.mxu0 0
        %1525 = vmatpush1.bf16.msra.mxu0 0
        %1526 = vmatprep.subr.bf16.mxu0 0
        %1527 = vmatpush1.bf16.msra.mxu0 0
        %1528 = vmatprep.subr.bf16.mxu0 0
        %1529 = vmatpush1.bf16.msra.mxu0 0
        %1530 = vmatprep.subr.bf16.mxu0 0
        %1531 = vmatpush1.bf16.msra.mxu0 0
        %1532 = vmatprep.subr.bf16.mxu0 0
        %1533 = vmatpush1.bf16.msra.mxu0 0
        %1534 = vmatprep.subr.bf16.mxu0 0
        %1535 = vmatpush1.bf16.msra.mxu0 0
        %1536 = vmatprep.subr.bf16.mxu0 0
        %1537 = vmatpush1.bf16.msra.mxu0 0
        %1538 = vmatprep.subr.bf16.mxu0 0
        %1539 = vmatpush1.bf16.msra.mxu0 0
        %1540 = vmatprep.mubr.bf16.mxu0 0
        %1541 = vmatmul.mubr.bf16.gmra.mrb[0].mxu0 %v1452
        %v1542 = vpop.f32.mrb[0].mxu0
        %v1543 = vadd.f32 %v1458, %v1542
        %v1544 = vpop.f32.mrb[0].mxu0
        %v1545 = vpop.f32.mrb[0].mxu0
        %v1546 = vpop.f32.mrb[0].mxu0
        %1547 = vdwg.mxu0
        %vm1548 = vcmp.lt.s32.totalorder %v1388, 7
        %v1549 = vsel %vm1548, 0.0, -1e+30
        %v1550 = vld [vmem:[%s5] sm:$0x1]
        %v1551 = vld [vmem:[#allocation2] sm:$0x1]
        %vm1552 = vcmask 523264
        %v1553 = vsel %vm1552, %v1543, 0.0
        %1554 = vadd.xlane.f32.xlu0 %v1553
        %v1555 = vpop.xlane.xlu0 %1554
        %v1556 = vrcp.pop 64.0
        %v1557 = vmul.f32 %v1555, %v1556
        %v1558 = vsub.f32 %v1543, %v1557
        %v1559 = vmul.f32 %v1558, %v1558
        %v1560 = vsel %vm1552, %v1559, 0.0
        %1561 = vadd.xlane.f32.xlu0 %v1560
        %v1562 = vpop.xlane.xlu0 %1561
        %v1563 = vmul.f32 %v1562, %v1556
        %v1564 = vadd.f32 %v1563, 1e-05
        %v1565 = vrsqrt.pop %v1564
        %v1566 = vmul.f32 %v1558, %v1565
        %v1568 = vlaneseq
        %v1569 = vshrl.u32 %v1568, 7
        %v1570 = vsub.s32 0, %v1569
        %v1571 = vrot.slane %v1550, %v1570
        %v1573 = vmul.f32 %v1566, %v1571
        %v1575 = vlaneseq
        %v1576 = vshrl.u32 %v1575, 7
        %v1577 = vsub.s32 0, %v1576
        %v1578 = vrot.slane %v1551, %v1577
        %v1580 = vadd.f32 %v1573, %v1578
        %v1581 = vld [vmem:[#allocation7] sm:$0xf]
        %v1582 = vld [vmem:[#allocation7 + $0x4] sm:$0xf]
        %v1583 = vld [vmem:[#allocation7 + $0x8] sm:$0xf]
        %v1584 = vld [vmem:[#allocation7 + $0xc] sm:$0xf]
        %v1585 = vld [vmem:[#allocation7 + $0x10] sm:$0xf]
        %v1586 = vld [vmem:[#allocation7 + $0x14] sm:$0xf]
        %v1587 = vld [vmem:[#allocation7 + $0x18] sm:$0xf]
        %v1588 = vld [vmem:[#allocation7 + $0x1c] sm:$0xf]
        %v1589 = vpack.c.bf16 %v1580, %v1580
        %v1590 = vld [vmem:[#allocation9] sm:$0x1]
        %v1592 = vlaneseq
        %v1593 = vshrl.u32 %v1592, 7
        %v1594 = vsub.s32 0, %v1593
        %v1595 = vrot.slane %v1590, %v1594
        %v1605 = vunpack.c.l.b16 %v1581
        %v1606 = vunpack.c.l.b16 %v1582
        %v1607 = vunpack.c.l.b16 %v1583
        %v1608 = vunpack.c.l.b16 %v1584
        %v1609 = vunpack.c.l.b16 %v1585
        %v1610 = vunpack.c.l.b16 %v1586
        %v1611 = vunpack.c.l.b16 %v1587
        %v1612 = vunpack.c.l.b16 %v1588
        %v1613 = vpack.c.b16 %v1606, %v1605
        %v1614 = vpack.c.b16 %v1608, %v1607
        %v1615 = vpack.c.b16 %v1610, %v1609
        %v1616 = vpack.c.b16 %v1612, %v1611
        %v1622 = vsel %vm1552, %v1589, 0
        %1624 = vmatprep.subr.bf16.mxu0 0
        %1625 = vmatpush1.bf16.msra.mxu0 %v1613
        %1626 = vmatprep.subr.bf16.mxu0 0
        %1627 = vmatpush1.bf16.msra.mxu0 %v1614
        %1628 = vmatprep.subr.bf16.mxu0 0
        %1629 = vmatpush1.bf16.msra.mxu0 %v1615
        %1630 = vmatprep.subr.bf16.mxu0 0
        %1631 = vmatpush1.bf16.msra.mxu0 %v1616
        %1632 = vmatprep.subr.bf16.mxu0 0
        %1633 = vmatpush1.bf16.msra.mxu0 0
        %1634 = vmatprep.subr.bf16.mxu0 0
        %1635 = vmatpush1.bf16.msra.mxu0 0
        %1636 = vmatprep.subr.bf16.mxu0 0
        %1637 = vmatpush1.bf16.msra.mxu0 0
        %1638 = vmatprep.subr.bf16.mxu0 0
        %1639 = vmatpush1.bf16.msra.mxu0 0
        %1640 = vmatprep.subr.bf16.mxu0 0
        %1641 = vmatpush1.bf16.msra.mxu0 0
        %1642 = vmatprep.subr.bf16.mxu0 0
        %1643 = vmatpush1.bf16.msra.mxu0 0
        %1644 = vmatprep.subr.bf16.mxu0 0
        %1645 = vmatpush1.bf16.msra.mxu0 0
        %1646 = vmatprep.subr.bf16.mxu0 0
        %1647 = vmatpush1.bf16.msra.mxu0 0
        %1648 = vmatprep.subr.bf16.mxu0 0
        %1649 = vmatpush1.bf16.msra.mxu0 0
        %1650 = vmatprep.subr.bf16.mxu0 0
        %1651 = vmatpush1.bf16.msra.mxu0 0
        %1652 = vmatprep.subr.bf16.mxu0 0
        %1653 = vmatpush1.bf16.msra.mxu0 0
        %1654 = vmatprep.subr.bf16.mxu0 0
        %1655 = vmatpush1.bf16.msra.mxu0 0
        %1656 = vmatprep.mubr.bf16.mxu0 0
        %1657 = vmatmul.mubr.bf16.gmra.mrb[0].mxu0 %v1622
        %v1658 = vpop.f32.mrb[0].mxu0
        %v1659 = vadd.f32 %v1595, %v1658
        %v1660 = vpop.f32.mrb[0].mxu0
        %v1661 = vpop.f32.mrb[0].mxu0
        %v1662 = vpop.f32.mrb[0].mxu0
        %1663 = vdwg.mxu0
        %v1664 = vxor.u32 %v1659, 2147483648
        %v1665 = vmul.f32 %v1664, 1.442695
        %v1666 = vpow.pop %v1665
        %v1667 = vadd.f32 %v1666, 1.0
        %v1668 = vrcp.pop %v1667
        %v1669 = vmul.f32 1.0, %v1668
        %v1670 = vmul.f32 %v1659, %v1669
        %v1671 = vld [vmem:[%s13] sm:$0xf]
        %v1672 = vld [vmem:[%s13 + $0x4] sm:$0xf]
        %v1673 = vld [vmem:[%s13 + $0x8] sm:$0xf]
        %v1674 = vld [vmem:[%s13 + $0xc] sm:$0xf]
        %v1675 = vld [vmem:[%s13 + $0x10] sm:$0xf]
        %v1676 = vld [vmem:[%s13 + $0x14] sm:$0xf]
        %v1677 = vld [vmem:[%s13 + $0x18] sm:$0xf]
        %v1678 = vld [vmem:[%s13 + $0x1c] sm:$0xf]
        %v1679 = vld [vmem:[%s13 + $0x20] sm:$0xf]
        %v1680 = vld [vmem:[%s13 + $0x24] sm:$0xf]
        %v1681 = vld [vmem:[%s13 + $0x28] sm:$0xf]
        %v1682 = vld [vmem:[%s13 + $0x2c] sm:$0xf]
        %v1683 = vld [vmem:[%s13 + $0x30] sm:$0xf]
        %v1684 = vld [vmem:[%s13 + $0x34] sm:$0xf]
        %v1685 = vld [vmem:[%s13 + $0x38] sm:$0xf]
        %v1686 = vld [vmem:[%s13 + $0x3c] sm:$0xf]
        %v1687 = vpack.c.bf16 %v1670, %v1670
        %v1688 = vld [vmem:[#allocation10] sm:$0x1]
        %v1690 = vlaneseq
        %v1691 = vshrl.u32 %v1690, 7
        %v1692 = vsub.s32 0, %v1691
        %v1693 = vrot.slane %v1688, %v1692
        %v1711 = vunpack.c.l.b16 %v1671
        %v1712 = vunpack.c.l.b16 %v1672
        %v1713 = vunpack.c.l.b16 %v1673
        %v1714 = vunpack.c.l.b16 %v1674
        %v1715 = vunpack.c.l.b16 %v1675
        %v1716 = vunpack.c.l.b16 %v1676
        %v1717 = vunpack.c.l.b16 %v1677
        %v1718 = vunpack.c.l.b16 %v1678
        %v1719 = vunpack.c.l.b16 %v1679
        %v1720 = vunpack.c.l.b16 %v1680
        %v1721 = vunpack.c.l.b16 %v1681
        %v1722 = vunpack.c.l.b16 %v1682
        %v1723 = vunpack.c.l.b16 %v1683
        %v1724 = vunpack.c.l.b16 %v1684
        %v1725 = vunpack.c.l.b16 %v1685
        %v1726 = vunpack.c.l.b16 %v1686
        %v1727 = vpack.c.b16 %v1712, %v1711
        %v1728 = vpack.c.b16 %v1714, %v1713
        %v1729 = vpack.c.b16 %v1716, %v1715
        %v1730 = vpack.c.b16 %v1718, %v1717
        %v1731 = vpack.c.b16 %v1720, %v1719
        %v1732 = vpack.c.b16 %v1722, %v1721
        %v1733 = vpack.c.b16 %v1724, %v1723
        %v1734 = vpack.c.b16 %v1726, %v1725
        %1743 = vmatprep.subr.bf16.mxu0 0
        %1744 = vmatpush1.bf16.msra.mxu0 %v1727
        %1745 = vmatprep.subr.bf16.mxu0 0
        %1746 = vmatpush1.bf16.msra.mxu0 %v1728
        %1747 = vmatprep.subr.bf16.mxu0 0
        %1748 = vmatpush1.bf16.msra.mxu0 %v1729
        %1749 = vmatprep.subr.bf16.mxu0 0
        %1750 = vmatpush1.bf16.msra.mxu0 %v1730
        %1751 = vmatprep.subr.bf16.mxu0 0
        %1752 = vmatpush1.bf16.msra.mxu0 %v1731
        %1753 = vmatprep.subr.bf16.mxu0 0
        %1754 = vmatpush1.bf16.msra.mxu0 %v1732
        %1755 = vmatprep.subr.bf16.mxu0 0
        %1756 = vmatpush1.bf16.msra.mxu0 %v1733
        %1757 = vmatprep.subr.bf16.mxu0 0
        %1758 = vmatpush1.bf16.msra.mxu0 %v1734
        %1759 = vmatprep.subr.bf16.mxu0 0
        %1760 = vmatpush1.bf16.msra.mxu0 0
        %1761 = vmatprep.subr.bf16.mxu0 0
        %1762 = vmatpush1.bf16.msra.mxu0 0
        %1763 = vmatprep.subr.bf16.mxu0 0
        %1764 = vmatpush1.bf16.msra.mxu0 0
        %1765 = vmatprep.subr.bf16.mxu0 0
        %1766 = vmatpush1.bf16.msra.mxu0 0
        %1767 = vmatprep.subr.bf16.mxu0 0
        %1768 = vmatpush1.bf16.msra.mxu0 0
        %1769 = vmatprep.subr.bf16.mxu0 0
        %1770 = vmatpush1.bf16.msra.mxu0 0
        %1771 = vmatprep.subr.bf16.mxu0 0
        %1772 = vmatpush1.bf16.msra.mxu0 0
        %1773 = vmatprep.subr.bf16.mxu0 0
        %1774 = vmatpush1.bf16.msra.mxu0 0
        %1775 = vmatprep.mubr.bf16.mxu0 0
        %1776 = vmatmul.mubr.bf16.gmra.mrb[0].mxu0 %v1687
        %v1777 = vpop.f32.mrb[0].mxu0
        %v1778 = vadd.f32 %v1693, %v1777
        %v1779 = vpop.f32.mrb[0].mxu0
        %v1780 = vpop.f32.mrb[0].mxu0
        %v1781 = vpop.f32.mrb[0].mxu0
        %1782 = vdwg.mxu0
        %v1783 = vmul.f32 %v1778, 0.5
        %v1784 = vadd.f32 %v1543, %v1783
        %s1785 = scalar_lea.vmem %s5, 1
        %v1786 = vld [vmem:[%s1785] sm:$0x1]
        %s1787 = scalar_lea.vmem [#allocation2], 1
        %v1788 = vld [vmem:[%s1787] sm:$0x1]
        %v1789 = vsel %vm1552, %v1784, 0.0
        %1790 = vadd.xlane.f32.xlu0 %v1789
        %v1791 = vpop.xlane.xlu0 %1790
        %v1792 = vmul.f32 %v1791, %v1556
        %v1793 = vsub.f32 %v1784, %v1792
        %v1794 = vmul.f32 %v1793, %v1793
        %v1795 = vsel %vm1552, %v1794, 0.0
        %1796 = vadd.xlane.f32.xlu0 %v1795
        %v1797 = vpop.xlane.xlu0 %1796
        %v1798 = vmul.f32 %v1797, %v1556
        %v1799 = vadd.f32 %v1798, 1e-05
        %v1800 = vrsqrt.pop %v1799
        %v1801 = vmul.f32 %v1793, %v1800
        %v1803 = vlaneseq
        %v1804 = vshrl.u32 %v1803, 7
        %v1805 = vsub.s32 0, %v1804
        %v1806 = vrot.slane %v1786, %v1805
        %v1808 = vmul.f32 %v1801, %v1806
        %v1810 = vlaneseq
        %v1811 = vshrl.u32 %v1810, 7
        %v1812 = vsub.s32 0, %v1811
        %v1813 = vrot.slane %v1788, %v1812
        %v1815 = vadd.f32 %v1808, %v1813
        %v1816 = vld [vmem:[%s7] sm:$0xff]
        %v1817 = vld [vmem:[%s7 + $0x8] sm:$0xff]
        %v1818 = vld [vmem:[%s7 + $0x10] sm:$0xff]
        %v1819 = vld [vmem:[%s7 + $0x18] sm:$0xff]
        %v1820 = vld [vmem:[%s7 + $0x20] sm:$0xff]
        %v1821 = vld [vmem:[%s7 + $0x28] sm:$0xff]
        %v1822 = vld [vmem:[%s7 + $0x30] sm:$0xff]
        %v1823 = vld [vmem:[%s7 + $0x38] sm:$0xff]
        %v1824 = vpack.c.bf16 %v1815, %v1815
        %v1825 = vld [vmem:[%s8] sm:$0x3]
        %v1827 = vlaneseq
        %v1828 = vshrl.u32 %v1827, 7
        %v1829 = vsub.s32 0, %v1828
        %v1830 = vrot.slane %v1825, %v1829
        %v1831 = vlaneseq
        %v1832 = vshrl.u32 %v1831, 7
        %v1833 = vsub.s32 1, %v1832
        %v1834 = vrot.slane %v1825, %v1833
        %v1845 = vunpack.c.l.b16 %v1816
        %v1846 = vunpack.c.h.b16 %v1816
        %v1847 = vunpack.c.l.b16 %v1817
        %v1848 = vunpack.c.h.b16 %v1817
        %v1849 = vunpack.c.l.b16 %v1818
        %v1850 = vunpack.c.h.b16 %v1818
        %v1851 = vunpack.c.l.b16 %v1819
        %v1852 = vunpack.c.h.b16 %v1819
        %v1853 = vunpack.c.l.b16 %v1820
        %v1854 = vunpack.c.h.b16 %v1820
        %v1855 = vunpack.c.l.b16 %v1821
        %v1856 = vunpack.c.h.b16 %v1821
        %v1857 = vunpack.c.l.b16 %v1822
        %v1858 = vunpack.c.h.b16 %v1822
        %v1859 = vunpack.c.l.b16 %v1823
        %v1860 = vunpack.c.h.b16 %v1823
        %v1861 = vpack.c.b16 %v1847, %v1845
        %v1862 = vpack.c.b16 %v1848, %v1846
        %v1863 = vpack.c.b16 %v1851, %v1849
        %v1864 = vpack.c.b16 %v1852, %v1850
        %v1865 = vpack.c.b16 %v1855, %v1853
        %v1866 = vpack.c.b16 %v1856, %v1854
        %v1867 = vpack.c.b16 %v1859, %v1857
        %v1868 = vpack.c.b16 %v1860, %v1858
        %v1878 = vsel %vm1552, %v1824, 0
        %1880 = vmatprep.subr.bf16.mxu0 %v1862
        %1881 = vmatpush1.bf16.msra.mxu0 %v1861
        %1882 = vmatprep.subr.bf16.mxu0 %v1864
        %1883 = vmatpush1.bf16.msra.mxu0 %v1863
        %1884 = vmatprep.subr.bf16.mxu0 %v1866
        %1885 = vmatpush1.bf16.msra.mxu0 %v1865
        %1886 = vmatprep.subr.bf16.mxu0 %v1868
        %1887 = vmatpush1.bf16.msra.mxu0 %v1867
        %1888 = vmatprep.subr.bf16.mxu0 0
        %1889 = vmatpush1.bf16.msra.mxu0 0
        %1890 = vmatprep.subr.bf16.mxu0 0
        %1891 = vmatpush1.bf16.msra.mxu0 0
        %1892 = vmatprep.subr.bf16.mxu0 0
        %1893 = vmatpush1.bf16.msra.mxu0 0
        %1894 = vmatprep.subr.bf16.mxu0 0
        %1895 = vmatpush1.bf16.msra.mxu0 0
        %1896 = vmatprep.subr.bf16.mxu0 0
        %1897 = vmatpush1.bf16.msra.mxu0 0
        %1898 = vmatprep.subr.bf16.mxu0 0
        %1899 = vmatpush1.bf16.msra.mxu0 0
        %1900 = vmatprep.subr.bf16.mxu0 0
        %1901 = vmatpush1.bf16.msra.mxu0 0
        %1902 = vmatprep.subr.bf16.mxu0 0
        %1903 = vmatpush1.bf16.msra.mxu0 0
        %1904 = vmatprep.subr.bf16.mxu0 0
        %1905 = vmatpush1.bf16.msra.mxu0 0
        %1906 = vmatprep.subr.bf16.mxu0 0
        %1907 = vmatpush1.bf16.msra.mxu0 0
        %1908 = vmatprep.subr.bf16.mxu0 0
        %1909 = vmatpush1.bf16.msra.mxu0 0
        %1910 = vmatprep.subr.bf16.mxu0 0
        %1911 = vmatpush1.bf16.msra.mxu0 0
        %1912 = vmatprep.mubr.bf16.mxu0 0
        %1913 = vmatmul.mubr.bf16.gmra.mrb[0].mxu0 %v1878
        %v1914 = vpop.f32.mrb[0].mxu0
        %v1915 = vadd.f32 %v1830, %v1914
        %v1916 = vpop.f32.mrb[0].mxu0
        %v1917 = vadd.f32 %v1834, %v1916
        %v1918 = vpop.f32.mrb[0].mxu0
        %v1919 = vpop.f32.mrb[0].mxu0
        %1920 = vdwg.mxu0
        %v1921 = vpack.c.bf16 %v1915, %v1915
        %v1922 = vpack.c.bf16 %v1917, %v1917
        %1924 = vrot.lane.b32.xlu0 %v1921, 64
        %v1925 = vpop.permute.xlu0 %1924
        %vm1926 = vcmask 130048
        %v1928 = vsel %vm1926, %v1921, 0
        %v1931 = vsel %vm1926, %v1925, 0
        %1933 = vmatprep.subr.bf16.mxu0 0
        %1934 = vmatpush1.bf16.xpose.msra.mxu0 %v1931
        %1935 = vmatprep.subr.bf16.mxu0 0
        %1936 = vmatpush1.bf16.xpose.msra.mxu0 0
        %1937 = vmatprep.subr.bf16.mxu0 0
        %1938 = vmatpush1.bf16.xpose.msra.mxu0 0
        %1939 = vmatprep.subr.bf16.mxu0 0
        %1940 = vmatpush1.bf16.xpose.msra.mxu0 0
        %1941 = vmatprep.subr.bf16.mxu0 0
        %1942 = vmatpush1.bf16.xpose.msra.mxu0 0
        %1943 = vmatprep.subr.bf16.mxu0 0
        %1944 = vmatpush1.bf16.xpose.msra.mxu0 0
        %1945 = vmatprep.subr.bf16.mxu0 0
        %1946 = vmatpush1.bf16.xpose.msra.mxu0 0
        %1947 = vmatprep.subr.bf16.mxu0 0
        %1948 = vmatpush1.bf16.xpose.msra.mxu0 0
        %1949 = vmatprep.subr.bf16.mxu0 0
        %1950 = vmatpush1.bf16.xpose.msra.mxu0 0
        %1951 = vmatprep.subr.bf16.mxu0 0
        %1952 = vmatpush1.bf16.xpose.msra.mxu0 0
        %1953 = vmatprep.subr.bf16.mxu0 0
        %1954 = vmatpush1.bf16.xpose.msra.mxu0 0
        %1955 = vmatprep.subr.bf16.mxu0 0
        %1956 = vmatpush1.bf16.xpose.msra.mxu0 0
        %1957 = vmatprep.subr.bf16.mxu0 0
        %1958 = vmatpush1.bf16.xpose.msra.mxu0 0
        %1959 = vmatprep.subr.bf16.mxu0 0
        %1960 = vmatpush1.bf16.xpose.msra.mxu0 0
        %1961 = vmatprep.subr.bf16.mxu0 0
        %1962 = vmatpush1.bf16.xpose.msra.mxu0 0
        %1963 = vmatprep.subr.bf16.mxu0 0
        %1964 = vmatpush1.bf16.xpose.msra.mxu0 0
        %1965 = vmatprep.mubr.bf16.mxu0 0
        %1966 = vmatmul.mubr.bf16.gmra.mrb[0].mxu0 %v1928
        %v1967 = vpop.f32.mrb[0].mxu0
        %v1968 = vadd.f32 %v1549, %v1967
        %v1969 = vpop.f32.mrb[0].mxu0
        %v1970 = vpop.f32.mrb[0].mxu0
        %v1971 = vpop.f32.mrb[0].mxu0
        %1972 = vdwg.mxu0
        %vm1973 = vcmask 64512
        %v1974 = vsel %vm1973, %v1968, -inf
        %1975 = vmax.xlane.f32.xlu0 %v1974
        %v1976 = vpop.xlane.xlu0 %1975
        %v1977 = vsub.f32 %v1968, %v1976
        %v1978 = vmul.f32 %v1977, 1.442695
        %v1979 = vpow.pop %v1978
        %v1980 = vsel %vm1973, %v1979, 0.0
        %1981 = vadd.xlane.f32.xlu0 %v1980
        %v1982 = vpop.xlane.xlu0 %1981
        %v1983 = vrcp.pop %v1982
        %v1984 = vmul.f32 %v1979, %v1983
        %v1985 = vpack.c.bf16 %v1984, %v1984
        %v1987 = vsel %vm1973, %v1985, 0
        %vm1989 = vcmask 1043456
        %v1991 = vsel %vm1989, %v1922, 0
        %1993 = vmatprep.subr.bf16.mxu0 0
        %1994 = vmatpush1.bf16.msra.mxu0 %v1991
        %1995 = vmatprep.subr.bf16.mxu0 0
        %1996 = vmatpush1.bf16.msra.mxu0 0
        %1997 = vmatprep.subr.bf16.mxu0 0
        %1998 = vmatpush1.bf16.msra.mxu0 0
        %1999 = vmatprep.subr.bf16.mxu0 0
        %2000 = vmatpush1.bf16.msra.mxu0 0
        %2001 = vmatprep.subr.bf16.mxu0 0
        %2002 = vmatpush1.bf16.msra.mxu0 0
        %2003 = vmatprep.subr.bf16.mxu0 0
        %2004 = vmatpush1.bf16.msra.mxu0 0
        %2005 = vmatprep.subr.bf16.mxu0 0
        %2006 = vmatpush1.bf16.msra.mxu0 0
        %2007 = vmatprep.subr.bf16.mxu0 0
        %2008 = vmatpush1.bf16.msra.mxu0 0
        %2009 = vmatprep.subr.bf16.mxu0 0
        %2010 = vmatpush1.bf16.msra.mxu0 0
        %2011 = vmatprep.subr.bf16.mxu0 0
        %2012 = vmatpush1.bf16.msra.mxu0 0
        %2013 = vmatprep.subr.bf16.mxu0 0
        %2014 = vmatpush1.bf16.msra.mxu0 0
        %2015 = vmatprep.subr.bf16.mxu0 0
        %2016 = vmatpush1.bf16.msra.mxu0 0
        %2017 = vmatprep.subr.bf16.mxu0 0
        %2018 = vmatpush1.bf16.msra.mxu0 0
        %2019 = vmatprep.subr.bf16.mxu0 0
        %2020 = vmatpush1.bf16.msra.mxu0 0
        %2021 = vmatprep.subr.bf16.mxu0 0
        %2022 = vmatpush1.bf16.msra.mxu0 0
        %2023 = vmatprep.subr.bf16.mxu0 0
        %2024 = vmatpush1.bf16.msra.mxu0 0
        %2025 = vmatprep.mubr.bf16.mxu0 0
        %2026 = vmatmul.mubr.bf16.gmra.mrb[0].mxu0 %v1987
        %v2027 = vpop.f32.mrb[0].mxu0
        %v2028 = vadd.f32 0.0, %v2027
        %v2029 = vpop.f32.mrb[0].mxu0
        %v2030 = vpop.f32.mrb[0].mxu0
        %v2031 = vpop.f32.mrb[0].mxu0
        %2032 = vdwg.mxu0
        %2033 = vrot.lane.b32.xlu0 %v1921, 112
        %v2034 = vpop.permute.xlu0 %2033
        %2035 = vrot.lane.b32.xlu0 %v1921, 48
        %v2036 = vpop.permute.xlu0 %2035
        %v2038 = vsel %vm1926, %v2034, 0
        %v2041 = vsel %vm1926, %v2036, 0
        %2043 = vmatprep.subr.bf16.mxu0 0
        %2044 = vmatpush1.bf16.xpose.msra.mxu0 %v2041
        %2045 = vmatprep.subr.bf16.mxu0 0
        %2046 = vmatpush1.bf16.xpose.msra.mxu0 0
        %2047 = vmatprep.subr.bf16.mxu0 0
        %2048 = vmatpush1.bf16.xpose.msra.mxu0 0
        %2049 = vmatprep.subr.bf16.mxu0 0
        %2050 = vmatpush1.bf16.xpose.msra.mxu0 0
        %2051 = vmatprep.subr.bf16.mxu0 0
        %2052 = vmatpush1.bf16.xpose.msra.mxu0 0
        %2053 = vmatprep.subr.bf16.mxu0 0
        %2054 = vmatpush1.bf16.xpose.msra.mxu0 0
        %2055 = vmatprep.subr.bf16.mxu0 0
        %2056 = vmatpush1.bf16.xpose.msra.mxu0 0
        %2057 = vmatprep.subr.bf16.mxu0 0
        %2058 = vmatpush1.bf16.xpose.msra.mxu0 0
        %2059 = vmatprep.subr.bf16.mxu0 0
        %2060 = vmatpush1.bf16.xpose.msra.mxu0 0
        %2061 = vmatprep.subr.bf16.mxu0 0
        %2062 = vmatpush1.bf16.xpose.msra.mxu0 0
        %2063 = vmatprep.subr.bf16.mxu0 0
        %2064 = vmatpush1.bf16.xpose.msra.mxu0 0
        %2065 = vmatprep.subr.bf16.mxu0 0
        %2066 = vmatpush1.bf16.xpose.msra.mxu0 0
        %2067 = vmatprep.subr.bf16.mxu0 0
        %2068 = vmatpush1.bf16.xpose.msra.mxu0 0
        %2069 = vmatprep.subr.bf16.mxu0 0
        %2070 = vmatpush1.bf16.xpose.msra.mxu0 0
        %2071 = vmatprep.subr.bf16.mxu0 0
        %2072 = vmatpush1.bf16.xpose.msra.mxu0 0
        %2073 = vmatprep.subr.bf16.mxu0 0
        %2074 = vmatpush1.bf16.xpose.msra.mxu0 0
        %2075 = vmatprep.mubr.bf16.mxu0 0
        %2076 = vmatmul.mubr.bf16.gmra.mrb[0].mxu0 %v2038
        %v2077 = vpop.f32.mrb[0].mxu0
        %v2078 = vadd.f32 %v1549, %v2077
        %v2079 = vpop.f32.mrb[0].mxu0
        %v2080 = vpop.f32.mrb[0].mxu0
        %v2081 = vpop.f32.mrb[0].mxu0
        %2082 = vdwg.mxu0
        %v2083 = vsel %vm1973, %v2078, -inf
        %2084 = vmax.xlane.f32.xlu0 %v2083
        %v2085 = vpop.xlane.xlu0 %2084
        %v2086 = vsub.f32 %v2078, %v2085
        %v2087 = vmul.f32 %v2086, 1.442695
        %v2088 = vpow.pop %v2087
        %v2089 = vsel %vm1973, %v2088, 0.0
        %2090 = vadd.xlane.f32.xlu0 %v2089
        %v2091 = vpop.xlane.xlu0 %2090
        %v2092 = vrcp.pop %v2091
        %v2093 = vmul.f32 %v2088, %v2092
        %v2094 = vpack.c.bf16 %v2093, %v2093
        %2096 = vrot.lane.b32.xlu0 %v1922, 112
        %v2097 = vpop.permute.xlu0 %2096
        %v2099 = vsel %vm1973, %v2094, 0
        %v2102 = vsel %vm1989, %v2097, 0
        %2104 = vmatprep.subr.bf16.mxu0 0
        %2105 = vmatpush1.bf16.msra.mxu0 %v2102
        %2106 = vmatprep.subr.bf16.mxu0 0
        %2107 = vmatpush1.bf16.msra.mxu0 0
        %2108 = vmatprep.subr.bf16.mxu0 0
        %2109 = vmatpush1.bf16.msra.mxu0 0
        %2110 = vmatprep.subr.bf16.mxu0 0
        %2111 = vmatpush1.bf16.msra.mxu0 0
        %2112 = vmatprep.subr.bf16.mxu0 0
        %2113 = vmatpush1.bf16.msra.mxu0 0
        %2114 = vmatprep.subr.bf16.mxu0 0
        %2115 = vmatpush1.bf16.msra.mxu0 0
        %2116 = vmatprep.subr.bf16.mxu0 0
        %2117 = vmatpush1.bf16.msra.mxu0 0
        %2118 = vmatprep.subr.bf16.mxu0 0
        %2119 = vmatpush1.bf16.msra.mxu0 0
        %2120 = vmatprep.subr.bf16.mxu0 0
        %2121 = vmatpush1.bf16.msra.mxu0 0
        %2122 = vmatprep.subr.bf16.mxu0 0
        %2123 = vmatpush1.bf16.msra.mxu0 0
        %2124 = vmatprep.subr.bf16.mxu0 0
        %2125 = vmatpush1.bf16.msra.mxu0 0
        %2126 = vmatprep.subr.bf16.mxu0 0
        %2127 = vmatpush1.bf16.msra.mxu0 0
        %2128 = vmatprep.subr.bf16.mxu0 0
        %2129 = vmatpush1.bf16.msra.mxu0 0
        %2130 = vmatprep.subr.bf16.mxu0 0
        %2131 = vmatpush1.bf16.msra.mxu0 0
        %2132 = vmatprep.subr.bf16.mxu0 0
        %2133 = vmatpush1.bf16.msra.mxu0 0
        %2134 = vmatprep.subr.bf16.mxu0 0
        %2135 = vmatpush1.bf16.msra.mxu0 0
        %2136 = vmatprep.mubr.bf16.mxu0 0
        %2137 = vmatmul.mubr.bf16.gmra.mrb[0].mxu0 %v2099
        %v2138 = vpop.f32.mrb[0].mxu0
        %v2139 = vadd.f32 0.0, %v2138
        %v2140 = vpop.f32.mrb[0].mxu0
        %v2141 = vpop.f32.mrb[0].mxu0
        %v2142 = vpop.f32.mrb[0].mxu0
        %2143 = vdwg.mxu0
        %2144 = vrot.lane.b32.xlu0 %v1921, 96
        %v2145 = vpop.permute.xlu0 %2144
        %2146 = vrot.lane.b32.xlu0 %v1921, 32
        %v2147 = vpop.permute.xlu0 %2146
        %v2149 = vsel %vm1926, %v2145, 0
        %v2152 = vsel %vm1926, %v2147, 0
        %2154 = vmatprep.subr.bf16.mxu0 0
        %2155 = vmatpush1.bf16.xpose.msra.mxu0 %v2152
        %2156 = vmatprep.subr.bf16.mxu0 0
        %2157 = vmatpush1.bf16.xpose.msra.mxu0 0
        %2158 = vmatprep.subr.bf16.mxu0 0
        %2159 = vmatpush1.bf16.xpose.msra.mxu0 0
        %2160 = vmatprep.subr.bf16.mxu0 0
        %2161 = vmatpush1.bf16.xpose.msra.mxu0 0
        %2162 = vmatprep.subr.bf16.mxu0 0
        %2163 = vmatpush1.bf16.xpose.msra.mxu0 0
        %2164 = vmatprep.subr.bf16.mxu0 0
        %2165 = vmatpush1.bf16.xpose.msra.mxu0 0
        %2166 = vmatprep.subr.bf16.mxu0 0
        %2167 = vmatpush1.bf16.xpose.msra.mxu0 0
        %2168 = vmatprep.subr.bf16.mxu0 0
        %2169 = vmatpush1.bf16.xpose.msra.mxu0 0
        %2170 = vmatprep.subr.bf16.mxu0 0
        %2171 = vmatpush1.bf16.xpose.msra.mxu0 0
        %2172 = vmatprep.subr.bf16.mxu0 0
        %2173 = vmatpush1.bf16.xpose.msra.mxu0 0
        %2174 = vmatprep.subr.bf16.mxu0 0
        %2175 = vmatpush1.bf16.xpose.msra.mxu0 0
        %2176 = vmatprep.subr.bf16.mxu0 0
        %2177 = vmatpush1.bf16.xpose.msra.mxu0 0
        %2178 = vmatprep.subr.bf16.mxu0 0
        %2179 = vmatpush1.bf16.xpose.msra.mxu0 0
        %2180 = vmatprep.subr.bf16.mxu0 0
        %2181 = vmatpush1.bf16.xpose.msra.mxu0 0
        %2182 = vmatprep.subr.bf16.mxu0 0
        %2183 = vmatpush1.bf16.xpose.msra.mxu0 0
        %2184 = vmatprep.subr.bf16.mxu0 0
        %2185 = vmatpush1.bf16.xpose.msra.mxu0 0
        %2186 = vmatprep.mubr.bf16.mxu0 0
        %2187 = vmatmul.mubr.bf16.gmra.mrb[0].mxu0 %v2149
        %v2188 = vpop.f32.mrb[0].mxu0
        %v2189 = vadd.f32 %v1549, %v2188
        %v2190 = vpop.f32.mrb[0].mxu0
        %v2191 = vpop.f32.mrb[0].mxu0
        %v2192 = vpop.f32.mrb[0].mxu0
        %2193 = vdwg.mxu0
        %v2194 = vsel %vm1973, %v2189, -inf
        %2195 = vmax.xlane.f32.xlu0 %v2194
        %v2196 = vpop.xlane.xlu0 %2195
        %v2197 = vsub.f32 %v2189, %v2196
        %v2198 = vmul.f32 %v2197, 1.442695
        %v2199 = vpow.pop %v2198
        %v2200 = vsel %vm1973, %v2199, 0.0
        %2201 = vadd.xlane.f32.xlu0 %v2200
        %v2202 = vpop.xlane.xlu0 %2201
        %v2203 = vrcp.pop %v2202
        %v2204 = vmul.f32 %v2199, %v2203
        %v2205 = vpack.c.bf16 %v2204, %v2204
        %2206 = vrot.lane.b32.xlu0 %v1922, 96
        %v2207 = vpop.permute.xlu0 %2206
        %v2209 = vsel %vm1973, %v2205, 0
        %v2212 = vsel %vm1989, %v2207, 0
        %2214 = vmatprep.subr.bf16.mxu0 0
        %2215 = vmatpush1.bf16.msra.mxu0 %v2212
        %2216 = vmatprep.subr.bf16.mxu0 0
        %2217 = vmatpush1.bf16.msra.mxu0 0
        %2218 = vmatprep.subr.bf16.mxu0 0
        %2219 = vmatpush1.bf16.msra.mxu0 0
        %2220 = vmatprep.subr.bf16.mxu0 0
        %2221 = vmatpush1.bf16.msra.mxu0 0
        %2222 = vmatprep.subr.bf16.mxu0 0
        %2223 = vmatpush1.bf16.msra.mxu0 0
        %2224 = vmatprep.subr.bf16.mxu0 0
        %2225 = vmatpush1.bf16.msra.mxu0 0
        %2226 = vmatprep.subr.bf16.mxu0 0
        %2227 = vmatpush1.bf16.msra.mxu0 0
        %2228 = vmatprep.subr.bf16.mxu0 0
        %2229 = vmatpush1.bf16.msra.mxu0 0
        %2230 = vmatprep.subr.bf16.mxu0 0
        %2231 = vmatpush1.bf16.msra.mxu0 0
        %2232 = vmatprep.subr.bf16.mxu0 0
        %2233 = vmatpush1.bf16.msra.mxu0 0
        %2234 = vmatprep.subr.bf16.mxu0 0
        %2235 = vmatpush1.bf16.msra.mxu0 0
        %2236 = vmatprep.subr.bf16.mxu0 0
        %2237 = vmatpush1.bf16.msra.mxu0 0
        %2238 = vmatprep.subr.bf16.mxu0 0
        %2239 = vmatpush1.bf16.msra.mxu0 0
        %2240 = vmatprep.subr.bf16.mxu0 0
        %2241 = vmatpush1.bf16.msra.mxu0 0
        %2242 = vmatprep.subr.bf16.mxu0 0
        %2243 = vmatpush1.bf16.msra.mxu0 0
        %2244 = vmatprep.subr.bf16.mxu0 0
        %2245 = vmatpush1.bf16.msra.mxu0 0
        %2246 = vmatprep.mubr.bf16.mxu0 0
        %2247 = vmatmul.mubr.bf16.gmra.mrb[0].mxu0 %v2209
        %v2248 = vpop.f32.mrb[0].mxu0
        %v2249 = vadd.f32 0.0, %v2248
        %v2250 = vpop.f32.mrb[0].mxu0
        %v2251 = vpop.f32.mrb[0].mxu0
        %v2252 = vpop.f32.mrb[0].mxu0
        %2253 = vdwg.mxu0
        %2254 = vrot.lane.b32.xlu0 %v1921, 80
        %v2255 = vpop.permute.xlu0 %2254
        %2256 = vrot.lane.b32.xlu0 %v1921, 16
        %v2257 = vpop.permute.xlu0 %2256
        %v2259 = vsel %vm1926, %v2255, 0
        %v2262 = vsel %vm1926, %v2257, 0
        %2264 = vmatprep.subr.bf16.mxu0 0
        %2265 = vmatpush1.bf16.xpose.msra.mxu0 %v2262
        %2266 = vmatprep.subr.bf16.mxu0 0
        %2267 = vmatpush1.bf16.xpose.msra.mxu0 0
        %2268 = vmatprep.subr.bf16.mxu0 0
        %2269 = vmatpush1.bf16.xpose.msra.mxu0 0
        %2270 = vmatprep.subr.bf16.mxu0 0
        %2271 = vmatpush1.bf16.xpose.msra.mxu0 0
        %2272 = vmatprep.subr.bf16.mxu0 0
        %2273 = vmatpush1.bf16.xpose.msra.mxu0 0
        %2274 = vmatprep.subr.bf16.mxu0 0
        %2275 = vmatpush1.bf16.xpose.msra.mxu0 0
        %2276 = vmatprep.subr.bf16.mxu0 0
        %2277 = vmatpush1.bf16.xpose.msra.mxu0 0
        %2278 = vmatprep.subr.bf16.mxu0 0
        %2279 = vmatpush1.bf16.xpose.msra.mxu0 0
        %2280 = vmatprep.subr.bf16.mxu0 0
        %2281 = vmatpush1.bf16.xpose.msra.mxu0 0
        %2282 = vmatprep.subr.bf16.mxu0 0
        %2283 = vmatpush1.bf16.xpose.msra.mxu0 0
        %2284 = vmatprep.subr.bf16.mxu0 0
        %2285 = vmatpush1.bf16.xpose.msra.mxu0 0
        %2286 = vmatprep.subr.bf16.mxu0 0
        %2287 = vmatpush1.bf16.xpose.msra.mxu0 0
        %2288 = vmatprep.subr.bf16.mxu0 0
        %2289 = vmatpush1.bf16.xpose.msra.mxu0 0
        %2290 = vmatprep.subr.bf16.mxu0 0
        %2291 = vmatpush1.bf16.xpose.msra.mxu0 0
        %2292 = vmatprep.subr.bf16.mxu0 0
        %2293 = vmatpush1.bf16.xpose.msra.mxu0 0
        %2294 = vmatprep.subr.bf16.mxu0 0
        %2295 = vmatpush1.bf16.xpose.msra.mxu0 0
        %2296 = vmatprep.mubr.bf16.mxu0 0
        %2297 = vmatmul.mubr.bf16.gmra.mrb[0].mxu0 %v2259
        %v2298 = vpop.f32.mrb[0].mxu0
        %v2299 = vadd.f32 %v1549, %v2298
        %v2300 = vpop.f32.mrb[0].mxu0
        %v2301 = vpop.f32.mrb[0].mxu0
        %v2302 = vpop.f32.mrb[0].mxu0
        %2303 = vdwg.mxu0
        %v2304 = vsel %vm1973, %v2299, -inf
        %2305 = vmax.xlane.f32.xlu0 %v2304
        %v2306 = vpop.xlane.xlu0 %2305
        %v2307 = vsub.f32 %v2299, %v2306
        %v2308 = vmul.f32 %v2307, 1.442695
        %v2309 = vpow.pop %v2308
        %v2310 = vsel %vm1973, %v2309, 0.0
        %2311 = vadd.xlane.f32.xlu0 %v2310
        %v2312 = vpop.xlane.xlu0 %2311
        %v2313 = vrcp.pop %v2312
        %v2314 = vmul.f32 %v2309, %v2313
        %v2315 = vpack.c.bf16 %v2314, %v2314
        %2316 = vrot.lane.b32.xlu0 %v1922, 80
        %v2317 = vpop.permute.xlu0 %2316
        %v2319 = vsel %vm1973, %v2315, 0
        %v2322 = vsel %vm1989, %v2317, 0
        %2324 = vmatprep.subr.bf16.mxu0 0
        %2325 = vmatpush1.bf16.msra.mxu0 %v2322
        %2326 = vmatprep.subr.bf16.mxu0 0
        %2327 = vmatpush1.bf16.msra.mxu0 0
        %2328 = vmatprep.subr.bf16.mxu0 0
        %2329 = vmatpush1.bf16.msra.mxu0 0
        %2330 = vmatprep.subr.bf16.mxu0 0
        %2331 = vmatpush1.bf16.msra.mxu0 0
        %2332 = vmatprep.subr.bf16.mxu0 0
        %2333 = vmatpush1.bf16.msra.mxu0 0
        %2334 = vmatprep.subr.bf16.mxu0 0
        %2335 = vmatpush1.bf16.msra.mxu0 0
        %2336 = vmatprep.subr.bf16.mxu0 0
        %2337 = vmatpush1.bf16.msra.mxu0 0
        %2338 = vmatprep.subr.bf16.mxu0 0
        %2339 = vmatpush1.bf16.msra.mxu0 0
        %2340 = vmatprep.subr.bf16.mxu0 0
        %2341 = vmatpush1.bf16.msra.mxu0 0
        %2342 = vmatprep.subr.bf16.mxu0 0
        %2343 = vmatpush1.bf16.msra.mxu0 0
        %2344 = vmatprep.subr.bf16.mxu0 0
        %2345 = vmatpush1.bf16.msra.mxu0 0
        %2346 = vmatprep.subr.bf16.mxu0 0
        %2347 = vmatpush1.bf16.msra.mxu0 0
        %2348 = vmatprep.subr.bf16.mxu0 0
        %2349 = vmatpush1.bf16.msra.mxu0 0
        %2350 = vmatprep.subr.bf16.mxu0 0
        %2351 = vmatpush1.bf16.msra.mxu0 0
        %2352 = vmatprep.subr.bf16.mxu0 0
        %2353 = vmatpush1.bf16.msra.mxu0 0
        %2354 = vmatprep.subr.bf16.mxu0 0
        %2355 = vmatpush1.bf16.msra.mxu0 0
        %2356 = vmatprep.mubr.bf16.mxu0 0
        %2357 = vmatmul.mubr.bf16.gmra.mrb[0].mxu0 %v2319
        %v2358 = vpop.f32.mrb[0].mxu0
        %v2359 = vadd.f32 0.0, %v2358
        %v2360 = vpop.f32.mrb[0].mxu0
        %v2361 = vpop.f32.mrb[0].mxu0
        %v2362 = vpop.f32.mrb[0].mxu0
        %2363 = vdwg.mxu0
        %2365 = vrot.lane.b32.xlu0 %v2139, 16
        %v2366 = vpop.permute.xlu0 %2365
        %2369 = vrot.lane.b32.xlu0 %v2249, 32
        %v2370 = vpop.permute.xlu0 %2369
        %2373 = vrot.lane.b32.xlu0 %v2359, 48
        %v2374 = vpop.permute.xlu0 %2373
        %v2376 = vsel %vm1926, %v2028, %v2366
        %vm2377 = vcmask 261120
        %v2378 = vsel %vm2377, %v2376, %v2370
        %vm2379 = vcmask 392192
        %v2380 = vsel %vm2379, %v2378, %v2374
        %v2381 = vld [vmem:[#allocation4] sm:$0xf]
        %v2382 = vld [vmem:[#allocation4 + $0x4] sm:$0xf]
        %v2383 = vld [vmem:[#allocation4 + $0x8] sm:$0xf]
        %v2384 = vld [vmem:[#allocation4 + $0xc] sm:$0xf]
        %v2385 = vld [vmem:[#allocation4 + $0x10] sm:$0xf]
        %v2386 = vld [vmem:[#allocation4 + $0x14] sm:$0xf]
        %v2387 = vld [vmem:[#allocation4 + $0x18] sm:$0xf]
        %v2388 = vld [vmem:[#allocation4 + $0x1c] sm:$0xf]
        %v2389 = vpack.c.bf16 %v2380, %v2380
        %v2398 = vunpack.c.l.b16 %v2381
        %v2399 = vunpack.c.l.b16 %v2382
        %v2400 = vunpack.c.l.b16 %v2383
        %v2401 = vunpack.c.l.b16 %v2384
        %v2402 = vunpack.c.l.b16 %v2385
        %v2403 = vunpack.c.l.b16 %v2386
        %v2404 = vunpack.c.l.b16 %v2387
        %v2405 = vunpack.c.l.b16 %v2388
        %v2406 = vpack.c.b16 %v2399, %v2398
        %v2407 = vpack.c.b16 %v2401, %v2400
        %v2408 = vpack.c.b16 %v2403, %v2402
        %v2409 = vpack.c.b16 %v2405, %v2404
        %v2415 = vsel %vm1552, %v2389, 0
        %2417 = vmatprep.subr.bf16.mxu0 0
        %2418 = vmatpush1.bf16.msra.mxu0 %v2406
        %2419 = vmatprep.subr.bf16.mxu0 0
        %2420 = vmatpush1.bf16.msra.mxu0 %v2407
        %2421 = vmatprep.subr.bf16.mxu0 0
        %2422 = vmatpush1.bf16.msra.mxu0 %v2408
        %2423 = vmatprep.subr.bf16.mxu0 0
        %2424 = vmatpush1.bf16.msra.mxu0 %v2409
        %2425 = vmatprep.subr.bf16.mxu0 0
        %2426 = vmatpush1.bf16.msra.mxu0 0
        %2427 = vmatprep.subr.bf16.mxu0 0
        %2428 = vmatpush1.bf16.msra.mxu0 0
        %2429 = vmatprep.subr.bf16.mxu0 0
        %2430 = vmatpush1.bf16.msra.mxu0 0
        %2431 = vmatprep.subr.bf16.mxu0 0
        %2432 = vmatpush1.bf16.msra.mxu0 0
        %2433 = vmatprep.subr.bf16.mxu0 0
        %2434 = vmatpush1.bf16.msra.mxu0 0
        %2435 = vmatprep.subr.bf16.mxu0 0
        %2436 = vmatpush1.bf16.msra.mxu0 0
        %2437 = vmatprep.subr.bf16.mxu0 0
        %2438 = vmatpush1.bf16.msra.mxu0 0
        %2439 = vmatprep.subr.bf16.mxu0 0
        %2440 = vmatpush1.bf16.msra.mxu0 0
        %2441 = vmatprep.subr.bf16.mxu0 0
        %2442 = vmatpush1.bf16.msra.mxu0 0
        %2443 = vmatprep.subr.bf16.mxu0 0
        %2444 = vmatpush1.bf16.msra.mxu0 0
        %2445 = vmatprep.subr.bf16.mxu0 0
        %2446 = vmatpush1.bf16.msra.mxu0 0
        %2447 = vmatprep.subr.bf16.mxu0 0
        %2448 = vmatpush1.bf16.msra.mxu0 0
        %2449 = vmatprep.mubr.bf16.mxu0 0
        %2450 = vmatmul.mubr.bf16.gmra.mrb[0].mxu0 %v2415
        %v2451 = vpop.f32.mrb[0].mxu0
        %v2452 = vadd.f32 0.0, %v2451
        %v2453 = vpop.f32.mrb[0].mxu0
        %v2454 = vpop.f32.mrb[0].mxu0
        %v2455 = vpop.f32.mrb[0].mxu0
        %2456 = vdwg.mxu0
        %v2457 = vadd.f32 %v1784, %v2452
        %v2458 = vld [vmem:[#allocation6] sm:$0x1]
        %v2460 = vlaneseq
        %v2461 = vshrl.u32 %v2460, 7
        %v2462 = vsub.s32 0, %v2461
        %v2463 = vrot.slane %v2458, %v2462
        %v2465 = vadd.f32 %v2457, %v2463
        %s2466 = scalar_lea.vmem %s5, 2
        %v2467 = vld [vmem:[%s2466] sm:$0x1]
        %s2468 = scalar_lea.vmem [#allocation2], 2
        %v2469 = vld [vmem:[%s2468] sm:$0x1]
        %v2470 = vsel %vm1552, %v2465, 0.0
        %2471 = vadd.xlane.f32.xlu0 %v2470
        %v2472 = vpop.xlane.xlu0 %2471
        %v2473 = vmul.f32 %v2472, %v1556
        %v2474 = vsub.f32 %v2465, %v2473
        %v2475 = vmul.f32 %v2474, %v2474
        %v2476 = vsel %vm1552, %v2475, 0.0
        %2477 = vadd.xlane.f32.xlu0 %v2476
        %v2478 = vpop.xlane.xlu0 %2477
        %v2479 = vmul.f32 %v2478, %v1556
        %v2480 = vadd.f32 %v2479, 1e-05
        %v2481 = vrsqrt.pop %v2480
        %v2482 = vmul.f32 %v2474, %v2481
        %v2484 = vlaneseq
        %v2485 = vshrl.u32 %v2484, 7
        %v2486 = vsub.s32 0, %v2485
        %v2487 = vrot.slane %v2467, %v2486
        %v2489 = vmul.f32 %v2482, %v2487
        %v2491 = vlaneseq
        %v2492 = vshrl.u32 %v2491, 7
        %v2493 = vsub.s32 0, %v2492
        %v2494 = vrot.slane %v2469, %v2493
        %v2496 = vadd.f32 %v2489, %v2494
        %s2497 = scalar_lea.vmem [#allocation7], 32
        %v2498 = vld [vmem:[%s2497] sm:$0xf]
        %v2499 = vld [vmem:[%s2497 + $0x4] sm:$0xf]
        %v2500 = vld [vmem:[%s2497 + $0x8] sm:$0xf]
        %v2501 = vld [vmem:[%s2497 + $0xc] sm:$0xf]
        %v2502 = vld [vmem:[%s2497 + $0x10] sm:$0xf]
        %v2503 = vld [vmem:[%s2497 + $0x14] sm:$0xf]
        %v2504 = vld [vmem:[%s2497 + $0x18] sm:$0xf]
        %v2505 = vld [vmem:[%s2497 + $0x1c] sm:$0xf]
        %v2506 = vpack.c.bf16 %v2496, %v2496
        %s2507 = scalar_lea.vmem [#allocation9], 1
        %v2508 = vld [vmem:[%s2507] sm:$0x1]
        %v2510 = vlaneseq
        %v2511 = vshrl.u32 %v2510, 7
        %v2512 = vsub.s32 0, %v2511
        %v2513 = vrot.slane %v2508, %v2512
        %v2523 = vunpack.c.l.b16 %v2498
        %v2524 = vunpack.c.l.b16 %v2499
        %v2525 = vunpack.c.l.b16 %v2500
        %v2526 = vunpack.c.l.b16 %v2501
        %v2527 = vunpack.c.l.b16 %v2502
        %v2528 = vunpack.c.l.b16 %v2503
        %v2529 = vunpack.c.l.b16 %v2504
        %v2530 = vunpack.c.l.b16 %v2505
        %v2531 = vpack.c.b16 %v2524, %v2523
        %v2532 = vpack.c.b16 %v2526, %v2525
        %v2533 = vpack.c.b16 %v2528, %v2527
        %v2534 = vpack.c.b16 %v2530, %v2529
        %v2540 = vsel %vm1552, %v2506, 0
        %2542 = vmatprep.subr.bf16.mxu0 0
        %2543 = vmatpush1.bf16.msra.mxu0 %v2531
        %2544 = vmatprep.subr.bf16.mxu0 0
        %2545 = vmatpush1.bf16.msra.mxu0 %v2532
        %2546 = vmatprep.subr.bf16.mxu0 0
        %2547 = vmatpush1.bf16.msra.mxu0 %v2533
        %2548 = vmatprep.subr.bf16.mxu0 0
        %2549 = vmatpush1.bf16.msra.mxu0 %v2534
        %2550 = vmatprep.subr.bf16.mxu0 0
        %2551 = vmatpush1.bf16.msra.mxu0 0
        %2552 = vmatprep.subr.bf16.mxu0 0
        %2553 = vmatpush1.bf16.msra.mxu0 0
        %2554 = vmatprep.subr.bf16.mxu0 0
        %2555 = vmatpush1.bf16.msra.mxu0 0
        %2556 = vmatprep.subr.bf16.mxu0 0
        %2557 = vmatpush1.bf16.msra.mxu0 0
        %2558 = vmatprep.subr.bf16.mxu0 0
        %2559 = vmatpush1.bf16.msra.mxu0 0
        %2560 = vmatprep.subr.bf16.mxu0 0
        %2561 = vmatpush1.bf16.msra.mxu0 0
        %2562 = vmatprep.subr.bf16.mxu0 0
        %2563 = vmatpush1.bf16.msra.mxu0 0
        %2564 = vmatprep.subr.bf16.mxu0 0
        %2565 = vmatpush1.bf16.msra.mxu0 0
        %2566 = vmatprep.subr.bf16.mxu0 0
        %2567 = vmatpush1.bf16.msra.mxu0 0
        %2568 = vmatprep.subr.bf16.mxu0 0
        %2569 = vmatpush1.bf16.msra.mxu0 0
        %2570 = vmatprep.subr.bf16.mxu0 0
        %2571 = vmatpush1.bf16.msra.mxu0 0
        %2572 = vmatprep.subr.bf16.mxu0 0
        %2573 = vmatpush1.bf16.msra.mxu0 0
        %2574 = vmatprep.mubr.bf16.mxu0 0
        %2575 = vmatmul.mubr.bf16.gmra.mrb[0].mxu0 %v2540
        %v2576 = vpop.f32.mrb[0].mxu0
        %v2577 = vadd.f32 %v2513, %v2576
        %v2578 = vpop.f32.mrb[0].mxu0
        %v2579 = vpop.f32.mrb[0].mxu0
        %v2580 = vpop.f32.mrb[0].mxu0
        %2581 = vdwg.mxu0
        %v2582 = vxor.u32 %v2577, 2147483648
        %v2583 = vmul.f32 %v2582, 1.442695
        %v2584 = vpow.pop %v2583
        %v2585 = vadd.f32 %v2584, 1.0
        %v2586 = vrcp.pop %v2585
        %v2587 = vmul.f32 1.0, %v2586
        %v2588 = vmul.f32 %v2577, %v2587
        %s2589 = scalar_lea.vmem %s13, 64
        %v2590 = vld [vmem:[%s2589] sm:$0xf]
        %v2591 = vld [vmem:[%s2589 + $0x4] sm:$0xf]
        %v2592 = vld [vmem:[%s2589 + $0x8] sm:$0xf]
        %v2593 = vld [vmem:[%s2589 + $0xc] sm:$0xf]
        %v2594 = vld [vmem:[%s2589 + $0x10] sm:$0xf]
        %v2595 = vld [vmem:[%s2589 + $0x14] sm:$0xf]
        %v2596 = vld [vmem:[%s2589 + $0x18] sm:$0xf]
        %v2597 = vld [vmem:[%s2589 + $0x1c] sm:$0xf]
        %v2598 = vld [vmem:[%s2589 + $0x20] sm:$0xf]
        %v2599 = vld [vmem:[%s2589 + $0x24] sm:$0xf]
        %v2600 = vld [vmem:[%s2589 + $0x28] sm:$0xf]
        %v2601 = vld [vmem:[%s2589 + $0x2c] sm:$0xf]
        %v2602 = vld [vmem:[%s2589 + $0x30] sm:$0xf]
        %v2603 = vld [vmem:[%s2589 + $0x34] sm:$0xf]
        %v2604 = vld [vmem:[%s2589 + $0x38] sm:$0xf]
        %v2605 = vld [vmem:[%s2589 + $0x3c] sm:$0xf]
        %v2606 = vpack.c.bf16 %v2588, %v2588
        %s2607 = scalar_lea.vmem [#allocation10], 1
        %v2608 = vld [vmem:[%s2607] sm:$0x1]
        %v2610 = vlaneseq
        %v2611 = vshrl.u32 %v2610, 7
        %v2612 = vsub.s32 0, %v2611
        %v2613 = vrot.slane %v2608, %v2612
        %v2631 = vunpack.c.l.b16 %v2590
        %v2632 = vunpack.c.l.b16 %v2591
        %v2633 = vunpack.c.l.b16 %v2592
        %v2634 = vunpack.c.l.b16 %v2593
        %v2635 = vunpack.c.l.b16 %v2594
        %v2636 = vunpack.c.l.b16 %v2595
        %v2637 = vunpack.c.l.b16 %v2596
        %v2638 = vunpack.c.l.b16 %v2597
        %v2639 = vunpack.c.l.b16 %v2598
        %v2640 = vunpack.c.l.b16 %v2599
        %v2641 = vunpack.c.l.b16 %v2600
        %v2642 = vunpack.c.l.b16 %v2601
        %v2643 = vunpack.c.l.b16 %v2602
        %v2644 = vunpack.c.l.b16 %v2603
        %v2645 = vunpack.c.l.b16 %v2604
        %v2646 = vunpack.c.l.b16 %v2605
        %v2647 = vpack.c.b16 %v2632, %v2631
        %v2648 = vpack.c.b16 %v2634, %v2633
        %v2649 = vpack.c.b16 %v2636, %v2635
        %v2650 = vpack.c.b16 %v2638, %v2637
        %v2651 = vpack.c.b16 %v2640, %v2639
        %v2652 = vpack.c.b16 %v2642, %v2641
        %v2653 = vpack.c.b16 %v2644, %v2643
        %v2654 = vpack.c.b16 %v2646, %v2645
        %2663 = vmatprep.subr.bf16.mxu0 0
        %2664 = vmatpush1.bf16.msra.mxu0 %v2647
        %2665 = vmatprep.subr.bf16.mxu0 0
        %2666 = vmatpush1.bf16.msra.mxu0 %v2648
        %2667 = vmatprep.subr.bf16.mxu0 0
        %2668 = vmatpush1.bf16.msra.mxu0 %v2649
        %2669 = vmatprep.subr.bf16.mxu0 0
        %2670 = vmatpush1.bf16.msra.mxu0 %v2650
        %2671 = vmatprep.subr.bf16.mxu0 0
        %2672 = vmatpush1.bf16.msra.mxu0 %v2651
        %2673 = vmatprep.subr.bf16.mxu0 0
        %2674 = vmatpush1.bf16.msra.mxu0 %v2652
        %2675 = vmatprep.subr.bf16.mxu0 0
        %2676 = vmatpush1.bf16.msra.mxu0 %v2653
        %2677 = vmatprep.subr.bf16.mxu0 0
        %2678 = vmatpush1.bf16.msra.mxu0 %v2654
        %2679 = vmatprep.subr.bf16.mxu0 0
        %2680 = vmatpush1.bf16.msra.mxu0 0
        %2681 = vmatprep.subr.bf16.mxu0 0
        %2682 = vmatpush1.bf16.msra.mxu0 0
        %2683 = vmatprep.subr.bf16.mxu0 0
        %2684 = vmatpush1.bf16.msra.mxu0 0
        %2685 = vmatprep.subr.bf16.mxu0 0
        %2686 = vmatpush1.bf16.msra.mxu0 0
        %2687 = vmatprep.subr.bf16.mxu0 0
        %2688 = vmatpush1.bf16.msra.mxu0 0
        %2689 = vmatprep.subr.bf16.mxu0 0
        %2690 = vmatpush1.bf16.msra.mxu0 0
        %2691 = vmatprep.subr.bf16.mxu0 0
        %2692 = vmatpush1.bf16.msra.mxu0 0
        %2693 = vmatprep.subr.bf16.mxu0 0
        %2694 = vmatpush1.bf16.msra.mxu0 0
        %2695 = vmatprep.mubr.bf16.mxu0 0
        %2696 = vmatmul.mubr.bf16.gmra.mrb[0].mxu0 %v2606
        %v2697 = vpop.f32.mrb[0].mxu0
        %v2698 = vadd.f32 %v2613, %v2697
        %v2699 = vpop.f32.mrb[0].mxu0
        %v2700 = vpop.f32.mrb[0].mxu0
        %v2701 = vpop.f32.mrb[0].mxu0
        %2702 = vdwg.mxu0
        %v2703 = vmul.f32 %v2698, 0.5
        %v2704 = vadd.f32 %v2465, %v2703
        %s2705 = scalar_lea.vmem %s5, 3
        %v2706 = vld [vmem:[%s2705] sm:$0x1]
        %s2707 = scalar_lea.vmem [#allocation2], 3
        %v2708 = vld [vmem:[%s2707] sm:$0x1]
        %v2709 = vsel %vm1552, %v2704, 0.0
        %2710 = vadd.xlane.f32.xlu0 %v2709
        %v2711 = vpop.xlane.xlu0 %2710
        %v2712 = vmul.f32 %v2711, %v1556
        %v2713 = vsub.f32 %v2704, %v2712
        %v2714 = vmul.f32 %v2713, %v2713
        %v2715 = vsel %vm1552, %v2714, 0.0
        %2716 = vadd.xlane.f32.xlu0 %v2715
        %v2717 = vpop.xlane.xlu0 %2716
        %v2718 = vmul.f32 %v2717, %v1556
        %v2719 = vadd.f32 %v2718, 1e-05
        %v2720 = vrsqrt.pop %v2719
        %v2721 = vmul.f32 %v2713, %v2720
        %v2723 = vlaneseq
        %v2724 = vshrl.u32 %v2723, 7
        %v2725 = vsub.s32 0, %v2724
        %v2726 = vrot.slane %v2706, %v2725
        %v2728 = vmul.f32 %v2721, %v2726
        %v2730 = vlaneseq
        %v2731 = vshrl.u32 %v2730, 7
        %v2732 = vsub.s32 0, %v2731
        %v2733 = vrot.slane %v2708, %v2732
        %v2735 = vadd.f32 %v2728, %v2733
        %s2736 = scalar_lea.vmem [#allocation7], 64
        %v2737 = vld [vmem:[%s2736] sm:$0xf]
        %v2738 = vld [vmem:[%s2736 + $0x4] sm:$0xf]
        %v2739 = vld [vmem:[%s2736 + $0x8] sm:$0xf]
        %v2740 = vld [vmem:[%s2736 + $0xc] sm:$0xf]
        %v2741 = vld [vmem:[%s2736 + $0x10] sm:$0xf]
        %v2742 = vld [vmem:[%s2736 + $0x14] sm:$0xf]
        %v2743 = vld [vmem:[%s2736 + $0x18] sm:$0xf]
        %v2744 = vld [vmem:[%s2736 + $0x1c] sm:$0xf]
        %v2745 = vpack.c.bf16 %v2735, %v2735
        %s2746 = scalar_lea.vmem [#allocation9], 2
        %v2747 = vld [vmem:[%s2746] sm:$0x1]
        %v2749 = vlaneseq
        %v2750 = vshrl.u32 %v2749, 7
        %v2751 = vsub.s32 0, %v2750
        %v2752 = vrot.slane %v2747, %v2751
        %v2762 = vunpack.c.l.b16 %v2737
        %v2763 = vunpack.c.l.b16 %v2738
        %v2764 = vunpack.c.l.b16 %v2739
        %v2765 = vunpack.c.l.b16 %v2740
        %v2766 = vunpack.c.l.b16 %v2741
        %v2767 = vunpack.c.l.b16 %v2742
        %v2768 = vunpack.c.l.b16 %v2743
        %v2769 = vunpack.c.l.b16 %v2744
        %v2770 = vpack.c.b16 %v2763, %v2762
        %v2771 = vpack.c.b16 %v2765, %v2764
        %v2772 = vpack.c.b16 %v2767, %v2766
        %v2773 = vpack.c.b16 %v2769, %v2768
        %v2779 = vsel %vm1552, %v2745, 0
        %2781 = vmatprep.subr.bf16.mxu0 0
        %2782 = vmatpush1.bf16.msra.mxu0 %v2770
        %2783 = vmatprep.subr.bf16.mxu0 0
        %2784 = vmatpush1.bf16.msra.mxu0 %v2771
        %2785 = vmatprep.subr.bf16.mxu0 0
        %2786 = vmatpush1.bf16.msra.mxu0 %v2772
        %2787 = vmatprep.subr.bf16.mxu0 0
        %2788 = vmatpush1.bf16.msra.mxu0 %v2773
        %2789 = vmatprep.subr.bf16.mxu0 0
        %2790 = vmatpush1.bf16.msra.mxu0 0
        %2791 = vmatprep.subr.bf16.mxu0 0
        %2792 = vmatpush1.bf16.msra.mxu0 0
        %2793 = vmatprep.subr.bf16.mxu0 0
        %2794 = vmatpush1.bf16.msra.mxu0 0
        %2795 = vmatprep.subr.bf16.mxu0 0
        %2796 = vmatpush1.bf16.msra.mxu0 0
        %2797 = vmatprep.subr.bf16.mxu0 0
        %2798 = vmatpush1.bf16.msra.mxu0 0
        %2799 = vmatprep.subr.bf16.mxu0 0
        %2800 = vmatpush1.bf16.msra.mxu0 0
        %2801 = vmatprep.subr.bf16.mxu0 0
        %2802 = vmatpush1.bf16.msra.mxu0 0
        %2803 = vmatprep.subr.bf16.mxu0 0
        %2804 = vmatpush1.bf16.msra.mxu0 0
        %2805 = vmatprep.subr.bf16.mxu0 0
        %2806 = vmatpush1.bf16.msra.mxu0 0
        %2807 = vmatprep.subr.bf16.mxu0 0
        %2808 = vmatpush1.bf16.msra.mxu0 0
        %2809 = vmatprep.subr.bf16.mxu0 0
        %2810 = vmatpush1.bf16.msra.mxu0 0
        %2811 = vmatprep.subr.bf16.mxu0 0
        %2812 = vmatpush1.bf16.msra.mxu0 0
        %2813 = vmatprep.mubr.bf16.mxu0 0
        %2814 = vmatmul.mubr.bf16.gmra.mrb[0].mxu0 %v2779
        %v2815 = vpop.f32.mrb[0].mxu0
        %v2816 = vadd.f32 %v2752, %v2815
        %v2817 = vpop.f32.mrb[0].mxu0
        %v2818 = vpop.f32.mrb[0].mxu0
        %v2819 = vpop.f32.mrb[0].mxu0
        %2820 = vdwg.mxu0
        %v2821 = vxor.u32 %v2816, 2147483648
        %v2822 = vmul.f32 %v2821, 1.442695
        %v2823 = vpow.pop %v2822
        %v2824 = vadd.f32 %v2823, 1.0
        %v2825 = vrcp.pop %v2824
        %v2826 = vmul.f32 1.0, %v2825
        %v2827 = vmul.f32 %v2816, %v2826
        %s2828 = scalar_lea.vmem %s13, 128
        %v2829 = vld [vmem:[%s2828] sm:$0xf]
        %v2830 = vld [vmem:[%s2828 + $0x4] sm:$0xf]
        %v2831 = vld [vmem:[%s2828 + $0x8] sm:$0xf]
        %v2832 = vld [vmem:[%s2828 + $0xc] sm:$0xf]
        %v2833 = vld [vmem:[%s2828 + $0x10] sm:$0xf]
        %v2834 = vld [vmem:[%s2828 + $0x14] sm:$0xf]
        %v2835 = vld [vmem:[%s2828 + $0x18] sm:$0xf]
        %v2836 = vld [vmem:[%s2828 + $0x1c] sm:$0xf]
        %v2837 = vld [vmem:[%s2828 + $0x20] sm:$0xf]
        %v2838 = vld [vmem:[%s2828 + $0x24] sm:$0xf]
        %v2839 = vld [vmem:[%s2828 + $0x28] sm:$0xf]
        %v2840 = vld [vmem:[%s2828 + $0x2c] sm:$0xf]
        %v2841 = vld [vmem:[%s2828 + $0x30] sm:$0xf]
        %v2842 = vld [vmem:[%s2828 + $0x34] sm:$0xf]
        %v2843 = vld [vmem:[%s2828 + $0x38] sm:$0xf]
        %v2844 = vld [vmem:[%s2828 + $0x3c] sm:$0xf]
        %v2845 = vpack.c.bf16 %v2827, %v2827
        %s2846 = scalar_lea.vmem [#allocation10], 2
        %v2847 = vld [vmem:[%s2846] sm:$0x1]
        %v2849 = vlaneseq
        %v2850 = vshrl.u32 %v2849, 7
        %v2851 = vsub.s32 0, %v2850
        %v2852 = vrot.slane %v2847, %v2851
        %v2870 = vunpack.c.l.b16 %v2829
        %v2871 = vunpack.c.l.b16 %v2830
        %v2872 = vunpack.c.l.b16 %v2831
        %v2873 = vunpack.c.l.b16 %v2832
        %v2874 = vunpack.c.l.b16 %v2833
        %v2875 = vunpack.c.l.b16 %v2834
        %v2876 = vunpack.c.l.b16 %v2835
        %v2877 = vunpack.c.l.b16 %v2836
        %v2878 = vunpack.c.l.b16 %v2837
        %v2879 = vunpack.c.l.b16 %v2838
        %v2880 = vunpack.c.l.b16 %v2839
        %v2881 = vunpack.c.l.b16 %v2840
        %v2882 = vunpack.c.l.b16 %v2841
        %v2883 = vunpack.c.l.b16 %v2842
        %v2884 = vunpack.c.l.b16 %v2843
        %v2885 = vunpack.c.l.b16 %v2844
        %v2886 = vpack.c.b16 %v2871, %v2870
        %v2887 = vpack.c.b16 %v2873, %v2872
        %v2888 = vpack.c.b16 %v2875, %v2874
        %v2889 = vpack.c.b16 %v2877, %v2876
        %v2890 = vpack.c.b16 %v2879, %v2878
        %v2891 = vpack.c.b16 %v2881, %v2880
        %v2892 = vpack.c.b16 %v2883, %v2882
        %v2893 = vpack.c.b16 %v2885, %v2884
        %2902 = vmatprep.subr.bf16.mxu0 0
        %2903 = vmatpush1.bf16.msra.mxu0 %v2886
        %2904 = vmatprep.subr.bf16.mxu0 0
        %2905 = vmatpush1.bf16.msra.mxu0 %v2887
        %2906 = vmatprep.subr.bf16.mxu0 0
        %2907 = vmatpush1.bf16.msra.mxu0 %v2888
        %2908 = vmatprep.subr.bf16.mxu0 0
        %2909 = vmatpush1.bf16.msra.mxu0 %v2889
        %2910 = vmatprep.subr.bf16.mxu0 0
        %2911 = vmatpush1.bf16.msra.mxu0 %v2890
        %2912 = vmatprep.subr.bf16.mxu0 0
        %2913 = vmatpush1.bf16.msra.mxu0 %v2891
        %2914 = vmatprep.subr.bf16.mxu0 0
        %2915 = vmatpush1.bf16.msra.mxu0 %v2892
        %2916 = vmatprep.subr.bf16.mxu0 0
        %2917 = vmatpush1.bf16.msra.mxu0 %v2893
        %2918 = vmatprep.subr.bf16.mxu0 0
        %2919 = vmatpush1.bf16.msra.mxu0 0
        %2920 = vmatprep.subr.bf16.mxu0 0
        %2921 = vmatpush1.bf16.msra.mxu0 0
        %2922 = vmatprep.subr.bf16.mxu0 0
        %2923 = vmatpush1.bf16.msra.mxu0 0
        %2924 = vmatprep.subr.bf16.mxu0 0
        %2925 = vmatpush1.bf16.msra.mxu0 0
        %2926 = vmatprep.subr.bf16.mxu0 0
        %2927 = vmatpush1.bf16.msra.mxu0 0
        %2928 = vmatprep.subr.bf16.mxu0 0
        %2929 = vmatpush1.bf16.msra.mxu0 0
        %2930 = vmatprep.subr.bf16.mxu0 0
        %2931 = vmatpush1.bf16.msra.mxu0 0
        %2932 = vmatprep.subr.bf16.mxu0 0
        %2933 = vmatpush1.bf16.msra.mxu0 0
        %2934 = vmatprep.mubr.bf16.mxu0 0
        %2935 = vmatmul.mubr.bf16.gmra.mrb[0].mxu0 %v2845
        %v2936 = vpop.f32.mrb[0].mxu0
        %v2937 = vadd.f32 %v2852, %v2936
        %v2938 = vpop.f32.mrb[0].mxu0
        %v2939 = vpop.f32.mrb[0].mxu0
        %v2940 = vpop.f32.mrb[0].mxu0
        %2941 = vdwg.mxu0
        %v2942 = vmul.f32 %v2937, 0.5
        %v2943 = vadd.f32 %v2704, %v2942
        %s2944 = scalar_lea.vmem %s5, 4
        %v2945 = vld [vmem:[%s2944] sm:$0x1]
        %s2946 = scalar_lea.vmem [#allocation2], 4
        %v2947 = vld [vmem:[%s2946] sm:$0x1]
        %v2948 = vsel %vm1552, %v2943, 0.0
        %2949 = vadd.xlane.f32.xlu0 %v2948
        %v2950 = vpop.xlane.xlu0 %2949
        %v2951 = vmul.f32 %v2950, %v1556
        %v2952 = vsub.f32 %v2943, %v2951
        %v2953 = vmul.f32 %v2952, %v2952
        %v2954 = vsel %vm1552, %v2953, 0.0
        %2955 = vadd.xlane.f32.xlu0 %v2954
        %v2956 = vpop.xlane.xlu0 %2955
        %v2957 = vmul.f32 %v2956, %v1556
        %v2958 = vadd.f32 %v2957, 1e-05
        %v2959 = vrsqrt.pop %v2958
        %v2960 = vmul.f32 %v2952, %v2959
        %v2962 = vlaneseq
        %v2963 = vshrl.u32 %v2962, 7
        %v2964 = vsub.s32 0, %v2963
        %v2965 = vrot.slane %v2945, %v2964
        %v2967 = vmul.f32 %v2960, %v2965
        %v2969 = vlaneseq
        %v2970 = vshrl.u32 %v2969, 7
        %v2971 = vsub.s32 0, %v2970
        %v2972 = vrot.slane %v2947, %v2971
        %v2974 = vadd.f32 %v2967, %v2972
        %s2975 = scalar_lea.vmem %s7, 64
        %v2976 = vld [vmem:[%s2975] sm:$0xff]
        %v2977 = vld [vmem:[%s2975 + $0x8] sm:$0xff]
        %v2978 = vld [vmem:[%s2975 + $0x10] sm:$0xff]
        %v2979 = vld [vmem:[%s2975 + $0x18] sm:$0xff]
        %v2980 = vld [vmem:[%s2975 + $0x20] sm:$0xff]
        %v2981 = vld [vmem:[%s2975 + $0x28] sm:$0xff]
        %v2982 = vld [vmem:[%s2975 + $0x30] sm:$0xff]
        %v2983 = vld [vmem:[%s2975 + $0x38] sm:$0xff]
        %v2984 = vpack.c.bf16 %v2974, %v2974
        %s2985 = scalar_lea.vmem %s8, 2
        %v2986 = vld [vmem:[%s2985] sm:$0x3]
        %v2988 = vlaneseq
        %v2989 = vshrl.u32 %v2988, 7
        %v2990 = vsub.s32 0, %v2989
        %v2991 = vrot.slane %v2986, %v2990
        %v2992 = vlaneseq
        %v2993 = vshrl.u32 %v2992, 7
        %v2994 = vsub.s32 1, %v2993
        %v2995 = vrot.slane %v2986, %v2994
        %v3006 = vunpack.c.l.b16 %v2976
        %v3007 = vunpack.c.h.b16 %v2976
        %v3008 = vunpack.c.l.b16 %v2977
        %v3009 = vunpack.c.h.b16 %v2977
        %v3010 = vunpack.c.l.b16 %v2978
        %v3011 = vunpack.c.h.b16 %v2978
        %v3012 = vunpack.c.l.b16 %v2979
        %v3013 = vunpack.c.h.b16 %v2979
        %v3014 = vunpack.c.l.b16 %v2980
        %v3015 = vunpack.c.h.b16 %v2980
        %v3016 = vunpack.c.l.b16 %v2981
        %v3017 = vunpack.c.h.b16 %v2981
        %v3018 = vunpack.c.l.b16 %v2982
        %v3019 = vunpack.c.h.b16 %v2982
        %v3020 = vunpack.c.l.b16 %v2983
        %v3021 = vunpack.c.h.b16 %v2983
        %v3022 = vpack.c.b16 %v3008, %v3006
        %v3023 = vpack.c.b16 %v3009, %v3007
        %v3024 = vpack.c.b16 %v3012, %v3010
        %v3025 = vpack.c.b16 %v3013, %v3011
        %v3026 = vpack.c.b16 %v3016, %v3014
        %v3027 = vpack.c.b16 %v3017, %v3015
        %v3028 = vpack.c.b16 %v3020, %v3018
        %v3029 = vpack.c.b16 %v3021, %v3019
        %v3039 = vsel %vm1552, %v2984, 0
        %3041 = vmatprep.subr.bf16.mxu0 %v3023
        %3042 = vmatpush1.bf16.msra.mxu0 %v3022
        %3043 = vmatprep.subr.bf16.mxu0 %v3025
        %3044 = vmatpush1.bf16.msra.mxu0 %v3024
        %3045 = vmatprep.subr.bf16.mxu0 %v3027
        %3046 = vmatpush1.bf16.msra.mxu0 %v3026
        %3047 = vmatprep.subr.bf16.mxu0 %v3029
        %3048 = vmatpush1.bf16.msra.mxu0 %v3028
        %3049 = vmatprep.subr.bf16.mxu0 0
        %3050 = vmatpush1.bf16.msra.mxu0 0
        %3051 = vmatprep.subr.bf16.mxu0 0
        %3052 = vmatpush1.bf16.msra.mxu0 0
        %3053 = vmatprep.subr.bf16.mxu0 0
        %3054 = vmatpush1.bf16.msra.mxu0 0
        %3055 = vmatprep.subr.bf16.mxu0 0
        %3056 = vmatpush1.bf16.msra.mxu0 0
        %3057 = vmatprep.subr.bf16.mxu0 0
        %3058 = vmatpush1.bf16.msra.mxu0 0
        %3059 = vmatprep.subr.bf16.mxu0 0
        %3060 = vmatpush1.bf16.msra.mxu0 0
        %3061 = vmatprep.subr.bf16.mxu0 0
        %3062 = vmatpush1.bf16.msra.mxu0 0
        %3063 = vmatprep.subr.bf16.mxu0 0
        %3064 = vmatpush1.bf16.msra.mxu0 0
        %3065 = vmatprep.subr.bf16.mxu0 0
        %3066 = vmatpush1.bf16.msra.mxu0 0
        %3067 = vmatprep.subr.bf16.mxu0 0
        %3068 = vmatpush1.bf16.msra.mxu0 0
        %3069 = vmatprep.subr.bf16.mxu0 0
        %3070 = vmatpush1.bf16.msra.mxu0 0
        %3071 = vmatprep.subr.bf16.mxu0 0
        %3072 = vmatpush1.bf16.msra.mxu0 0
        %3073 = vmatprep.mubr.bf16.mxu0 0
        %3074 = vmatmul.mubr.bf16.gmra.mrb[0].mxu0 %v3039
        %v3075 = vpop.f32.mrb[0].mxu0
        %v3076 = vadd.f32 %v2991, %v3075
        %v3077 = vpop.f32.mrb[0].mxu0
        %v3078 = vadd.f32 %v2995, %v3077
        %v3079 = vpop.f32.mrb[0].mxu0
        %v3080 = vpop.f32.mrb[0].mxu0
        %3081 = vdwg.mxu0
        %v3082 = vpack.c.bf16 %v3076, %v3076
        %v3083 = vpack.c.bf16 %v3078, %v3078
        %3085 = vrot.lane.b32.xlu0 %v3082, 64
        %v3086 = vpop.permute.xlu0 %3085
        %v3088 = vsel %vm1926, %v3082, 0
        %v3091 = vsel %vm1926, %v3086, 0
        %3093 = vmatprep.subr.bf16.mxu0 0
        %3094 = vmatpush1.bf16.xpose.msra.mxu0 %v3091
        %3095 = vmatprep.subr.bf16.mxu0 0
        %3096 = vmatpush1.bf16.xpose.msra.mxu0 0
        %3097 = vmatprep.subr.bf16.mxu0 0
        %3098 = vmatpush1.bf16.xpose.msra.mxu0 0
        %3099 = vmatprep.subr.bf16.mxu0 0
        %3100 = vmatpush1.bf16.xpose.msra.mxu0 0
        %3101 = vmatprep.subr.bf16.mxu0 0
        %3102 = vmatpush1.bf16.xpose.msra.mxu0 0
        %3103 = vmatprep.subr.bf16.mxu0 0
        %3104 = vmatpush1.bf16.xpose.msra.mxu0 0
        %3105 = vmatprep.subr.bf16.mxu0 0
        %3106 = vmatpush1.bf16.xpose.msra.mxu0 0
        %3107 = vmatprep.subr.bf16.mxu0 0
        %3108 = vmatpush1.bf16.xpose.msra.mxu0 0
        %3109 = vmatprep.subr.bf16.mxu0 0
        %3110 = vmatpush1.bf16.xpose.msra.mxu0 0
        %3111 = vmatprep.subr.bf16.mxu0 0
        %3112 = vmatpush1.bf16.xpose.msra.mxu0 0
        %3113 = vmatprep.subr.bf16.mxu0 0
        %3114 = vmatpush1.bf16.xpose.msra.mxu0 0
        %3115 = vmatprep.subr.bf16.mxu0 0
        %3116 = vmatpush1.bf16.xpose.msra.mxu0 0
        %3117 = vmatprep.subr.bf16.mxu0 0
        %3118 = vmatpush1.bf16.xpose.msra.mxu0 0
        %3119 = vmatprep.subr.bf16.mxu0 0
        %3120 = vmatpush1.bf16.xpose.msra.mxu0 0
        %3121 = vmatprep.subr.bf16.mxu0 0
        %3122 = vmatpush1.bf16.xpose.msra.mxu0 0
        %3123 = vmatprep.subr.bf16.mxu0 0
        %3124 = vmatpush1.bf16.xpose.msra.mxu0 0
        %3125 = vmatprep.mubr.bf16.mxu0 0
        %3126 = vmatmul.mubr.bf16.gmra.mrb[0].mxu0 %v3088
        %v3127 = vpop.f32.mrb[0].mxu0
        %v3128 = vadd.f32 %v1549, %v3127
        %v3129 = vpop.f32.mrb[0].mxu0
        %v3130 = vpop.f32.mrb[0].mxu0
        %v3131 = vpop.f32.mrb[0].mxu0
        %3132 = vdwg.mxu0
        %v3133 = vsel %vm1973, %v3128, -inf
        %3134 = vmax.xlane.f32.xlu0 %v3133
        %v3135 = vpop.xlane.xlu0 %3134
        %v3136 = vsub.f32 %v3128, %v3135
        %v3137 = vmul.f32 %v3136, 1.442695
        %v3138 = vpow.pop %v3137
        %v3139 = vsel %vm1973, %v3138, 0.0
        %3140 = vadd.xlane.f32.xlu0 %v3139
        %v3141 = vpop.xlane.xlu0 %3140
        %v3142 = vrcp.pop %v3141
        %v3143 = vmul.f32 %v3138, %v3142
        %v3144 = vpack.c.bf16 %v3143, %v3143
        %v3146 = vsel %vm1973, %v3144, 0
        %v3149 = vsel %vm1989, %v3083, 0
        %3151 = vmatprep.subr.bf16.mxu0 0
        %3152 = vmatpush1.bf16.msra.mxu0 %v3149
        %3153 = vmatprep.subr.bf16.mxu0 0
        %3154 = vmatpush1.bf16.msra.mxu0 0
        %3155 = vmatprep.subr.bf16.mxu0 0
        %3156 = vmatpush1.bf16.msra.mxu0 0
        %3157 = vmatprep.subr.bf16.mxu0 0
        %3158 = vmatpush1.bf16.msra.mxu0 0
        %3159 = vmatprep.subr.bf16.mxu0 0
        %3160 = vmatpush1.bf16.msra.mxu0 0
        %3161 = vmatprep.subr.bf16.mxu0 0
        %3162 = vmatpush1.bf16.msra.mxu0 0
        %3163 = vmatprep.subr.bf16.mxu0 0
        %3164 = vmatpush1.bf16.msra.mxu0 0
        %3165 = vmatprep.subr.bf16.mxu0 0
        %3166 = vmatpush1.bf16.msra.mxu0 0
        %3167 = vmatprep.subr.bf16.mxu0 0
        %3168 = vmatpush1.bf16.msra.mxu0 0
        %3169 = vmatprep.subr.bf16.mxu0 0
        %3170 = vmatpush1.bf16.msra.mxu0 0
        %3171 = vmatprep.subr.bf16.mxu0 0
        %3172 = vmatpush1.bf16.msra.mxu0 0
        %3173 = vmatprep.subr.bf16.mxu0 0
        %3174 = vmatpush1.bf16.msra.mxu0 0
        %3175 = vmatprep.subr.bf16.mxu0 0
        %3176 = vmatpush1.bf16.msra.mxu0 0
        %3177 = vmatprep.subr.bf16.mxu0 0
        %3178 = vmatpush1.bf16.msra.mxu0 0
        %3179 = vmatprep.subr.bf16.mxu0 0
        %3180 = vmatpush1.bf16.msra.mxu0 0
        %3181 = vmatprep.subr.bf16.mxu0 0
        %3182 = vmatpush1.bf16.msra.mxu0 0
        %3183 = vmatprep.mubr.bf16.mxu0 0
        %3184 = vmatmul.mubr.bf16.gmra.mrb[0].mxu0 %v3146
        %v3185 = vpop.f32.mrb[0].mxu0
        %v3186 = vadd.f32 0.0, %v3185
        %v3187 = vpop.f32.mrb[0].mxu0
        %v3188 = vpop.f32.mrb[0].mxu0
        %v3189 = vpop.f32.mrb[0].mxu0
        %3190 = vdwg.mxu0
        %3191 = vrot.lane.b32.xlu0 %v3082, 112
        %v3192 = vpop.permute.xlu0 %3191
        %3193 = vrot.lane.b32.xlu0 %v3082, 48
        %v3194 = vpop.permute.xlu0 %3193
        %v3196 = vsel %vm1926, %v3192, 0
        %v3199 = vsel %vm1926, %v3194, 0
        %3201 = vmatprep.subr.bf16.mxu0 0
        %3202 = vmatpush1.bf16.xpose.msra.mxu0 %v3199
        %3203 = vmatprep.subr.bf16.mxu0 0
        %3204 = vmatpush1.bf16.xpose.msra.mxu0 0
        %3205 = vmatprep.subr.bf16.mxu0 0
        %3206 = vmatpush1.bf16.xpose.msra.mxu0 0
        %3207 = vmatprep.subr.bf16.mxu0 0
        %3208 = vmatpush1.bf16.xpose.msra.mxu0 0
        %3209 = vmatprep.subr.bf16.mxu0 0
        %3210 = vmatpush1.bf16.xpose.msra.mxu0 0
        %3211 = vmatprep.subr.bf16.mxu0 0
        %3212 = vmatpush1.bf16.xpose.msra.mxu0 0
        %3213 = vmatprep.subr.bf16.mxu0 0
        %3214 = vmatpush1.bf16.xpose.msra.mxu0 0
        %3215 = vmatprep.subr.bf16.mxu0 0
        %3216 = vmatpush1.bf16.xpose.msra.mxu0 0
        %3217 = vmatprep.subr.bf16.mxu0 0
        %3218 = vmatpush1.bf16.xpose.msra.mxu0 0
        %3219 = vmatprep.subr.bf16.mxu0 0
        %3220 = vmatpush1.bf16.xpose.msra.mxu0 0
        %3221 = vmatprep.subr.bf16.mxu0 0
        %3222 = vmatpush1.bf16.xpose.msra.mxu0 0
        %3223 = vmatprep.subr.bf16.mxu0 0
        %3224 = vmatpush1.bf16.xpose.msra.mxu0 0
        %3225 = vmatprep.subr.bf16.mxu0 0
        %3226 = vmatpush1.bf16.xpose.msra.mxu0 0
        %3227 = vmatprep.subr.bf16.mxu0 0
        %3228 = vmatpush1.bf16.xpose.msra.mxu0 0
        %3229 = vmatprep.subr.bf16.mxu0 0
        %3230 = vmatpush1.bf16.xpose.msra.mxu0 0
        %3231 = vmatprep.subr.bf16.mxu0 0
        %3232 = vmatpush1.bf16.xpose.msra.mxu0 0
        %3233 = vmatprep.mubr.bf16.mxu0 0
        %3234 = vmatmul.mubr.bf16.gmra.mrb[0].mxu0 %v3196
        %v3235 = vpop.f32.mrb[0].mxu0
        %v3236 = vadd.f32 %v1549, %v3235
        %v3237 = vpop.f32.mrb[0].mxu0
        %v3238 = vpop.f32.mrb[0].mxu0
        %v3239 = vpop.f32.mrb[0].mxu0
        %3240 = vdwg.mxu0
        %v3241 = vsel %vm1973, %v3236, -inf
        %3242 = vmax.xlane.f32.xlu0 %v3241
        %v3243 = vpop.xlane.xlu0 %3242
        %v3244 = vsub.f32 %v3236, %v3243
        %v3245 = vmul.f32 %v3244, 1.442695
        %v3246 = vpow.pop %v3245
        %v3247 = vsel %vm1973, %v3246, 0.0
        %3248 = vadd.xlane.f32.xlu0 %v3247
        %v3249 = vpop.xlane.xlu0 %3248
        %v3250 = vrcp.pop %v3249
        %v3251 = vmul.f32 %v3246, %v3250
        %v3252 = vpack.c.bf16 %v3251, %v3251
        %3254 = vrot.lane.b32.xlu0 %v3083, 112
        %v3255 = vpop.permute.xlu0 %3254
        %v3257 = vsel %vm1973, %v3252, 0
        %v3260 = vsel %vm1989, %v3255, 0
        %3262 = vmatprep.subr.bf16.mxu0 0
        %3263 = vmatpush1.bf16.msra.mxu0 %v3260
        %3264 = vmatprep.subr.bf16.mxu0 0
        %3265 = vmatpush1.bf16.msra.mxu0 0
        %3266 = vmatprep.subr.bf16.mxu0 0
        %3267 = vmatpush1.bf16.msra.mxu0 0
        %3268 = vmatprep.subr.bf16.mxu0 0
        %3269 = vmatpush1.bf16.msra.mxu0 0
        %3270 = vmatprep.subr.bf16.mxu0 0
        %3271 = vmatpush1.bf16.msra.mxu0 0
        %3272 = vmatprep.subr.bf16.mxu0 0
        %3273 = vmatpush1.bf16.msra.mxu0 0
        %3274 = vmatprep.subr.bf16.mxu0 0
        %3275 = vmatpush1.bf16.msra.mxu0 0
        %3276 = vmatprep.subr.bf16.mxu0 0
        %3277 = vmatpush1.bf16.msra.mxu0 0
        %3278 = vmatprep.subr.bf16.mxu0 0
        %3279 = vmatpush1.bf16.msra.mxu0 0
        %3280 = vmatprep.subr.bf16.mxu0 0
        %3281 = vmatpush1.bf16.msra.mxu0 0
        %3282 = vmatprep.subr.bf16.mxu0 0
        %3283 = vmatpush1.bf16.msra.mxu0 0
        %3284 = vmatprep.subr.bf16.mxu0 0
        %3285 = vmatpush1.bf16.msra.mxu0 0
        %3286 = vmatprep.subr.bf16.mxu0 0
        %3287 = vmatpush1.bf16.msra.mxu0 0
        %3288 = vmatprep.subr.bf16.mxu0 0
        %3289 = vmatpush1.bf16.msra.mxu0 0
        %3290 = vmatprep.subr.bf16.mxu0 0
        %3291 = vmatpush1.bf16.msra.mxu0 0
        %3292 = vmatprep.subr.bf16.mxu0 0
        %3293 = vmatpush1.bf16.msra.mxu0 0
        %3294 = vmatprep.mubr.bf16.mxu0 0
        %3295 = vmatmul.mubr.bf16.gmra.mrb[0].mxu0 %v3257
        %v3296 = vpop.f32.mrb[0].mxu0
        %v3297 = vadd.f32 0.0, %v3296
        %v3298 = vpop.f32.mrb[0].mxu0
        %v3299 = vpop.f32.mrb[0].mxu0
        %v3300 = vpop.f32.mrb[0].mxu0
        %3301 = vdwg.mxu0
        %3302 = vrot.lane.b32.xlu0 %v3082, 96
        %v3303 = vpop.permute.xlu0 %3302
        %3304 = vrot.lane.b32.xlu0 %v3082, 32
        %v3305 = vpop.permute.xlu0 %3304
        %v3307 = vsel %vm1926, %v3303, 0
        %v3310 = vsel %vm1926, %v3305, 0
        %3312 = vmatprep.subr.bf16.mxu0 0
        %3313 = vmatpush1.bf16.xpose.msra.mxu0 %v3310
        %3314 = vmatprep.subr.bf16.mxu0 0
        %3315 = vmatpush1.bf16.xpose.msra.mxu0 0
        %3316 = vmatprep.subr.bf16.mxu0 0
        %3317 = vmatpush1.bf16.xpose.msra.mxu0 0
        %3318 = vmatprep.subr.bf16.mxu0 0
        %3319 = vmatpush1.bf16.xpose.msra.mxu0 0
        %3320 = vmatprep.subr.bf16.mxu0 0
        %3321 = vmatpush1.bf16.xpose.msra.mxu0 0
        %3322 = vmatprep.subr.bf16.mxu0 0
        %3323 = vmatpush1.bf16.xpose.msra.mxu0 0
        %3324 = vmatprep.subr.bf16.mxu0 0
        %3325 = vmatpush1.bf16.xpose.msra.mxu0 0
        %3326 = vmatprep.subr.bf16.mxu0 0
        %3327 = vmatpush1.bf16.xpose.msra.mxu0 0
        %3328 = vmatprep.subr.bf16.mxu0 0
        %3329 = vmatpush1.bf16.xpose.msra.mxu0 0
        %3330 = vmatprep.subr.bf16.mxu0 0
        %3331 = vmatpush1.bf16.xpose.msra.mxu0 0
        %3332 = vmatprep.subr.bf16.mxu0 0
        %3333 = vmatpush1.bf16.xpose.msra.mxu0 0
        %3334 = vmatprep.subr.bf16.mxu0 0
        %3335 = vmatpush1.bf16.xpose.msra.mxu0 0
        %3336 = vmatprep.subr.bf16.mxu0 0
        %3337 = vmatpush1.bf16.xpose.msra.mxu0 0
        %3338 = vmatprep.subr.bf16.mxu0 0
        %3339 = vmatpush1.bf16.xpose.msra.mxu0 0
        %3340 = vmatprep.subr.bf16.mxu0 0
        %3341 = vmatpush1.bf16.xpose.msra.mxu0 0
        %3342 = vmatprep.subr.bf16.mxu0 0
        %3343 = vmatpush1.bf16.xpose.msra.mxu0 0
        %3344 = vmatprep.mubr.bf16.mxu0 0
        %3345 = vmatmul.mubr.bf16.gmra.mrb[0].mxu0 %v3307
        %v3346 = vpop.f32.mrb[0].mxu0
        %v3347 = vadd.f32 %v1549, %v3346
        %v3348 = vpop.f32.mrb[0].mxu0
        %v3349 = vpop.f32.mrb[0].mxu0
        %v3350 = vpop.f32.mrb[0].mxu0
        %3351 = vdwg.mxu0
        %v3352 = vsel %vm1973, %v3347, -inf
        %3353 = vmax.xlane.f32.xlu0 %v3352
        %v3354 = vpop.xlane.xlu0 %3353
        %v3355 = vsub.f32 %v3347, %v3354
        %v3356 = vmul.f32 %v3355, 1.442695
        %v3357 = vpow.pop %v3356
        %v3358 = vsel %vm1973, %v3357, 0.0
        %3359 = vadd.xlane.f32.xlu0 %v3358
        %v3360 = vpop.xlane.xlu0 %3359
        %v3361 = vrcp.pop %v3360
        %v3362 = vmul.f32 %v3357, %v3361
        %v3363 = vpack.c.bf16 %v3362, %v3362
        %3364 = vrot.lane.b32.xlu0 %v3083, 96
        %v3365 = vpop.permute.xlu0 %3364
        %v3367 = vsel %vm1973, %v3363, 0
        %v3370 = vsel %vm1989, %v3365, 0
        %3372 = vmatprep.subr.bf16.mxu0 0
        %3373 = vmatpush1.bf16.msra.mxu0 %v3370
        %3374 = vmatprep.subr.bf16.mxu0 0
        %3375 = vmatpush1.bf16.msra.mxu0 0
        %3376 = vmatprep.subr.bf16.mxu0 0
        %3377 = vmatpush1.bf16.msra.mxu0 0
        %3378 = vmatprep.subr.bf16.mxu0 0
        %3379 = vmatpush1.bf16.msra.mxu0 0
        %3380 = vmatprep.subr.bf16.mxu0 0
        %3381 = vmatpush1.bf16.msra.mxu0 0
        %3382 = vmatprep.subr.bf16.mxu0 0
        %3383 = vmatpush1.bf16.msra.mxu0 0
        %3384 = vmatprep.subr.bf16.mxu0 0
        %3385 = vmatpush1.bf16.msra.mxu0 0
        %3386 = vmatprep.subr.bf16.mxu0 0
        %3387 = vmatpush1.bf16.msra.mxu0 0
        %3388 = vmatprep.subr.bf16.mxu0 0
        %3389 = vmatpush1.bf16.msra.mxu0 0
        %3390 = vmatprep.subr.bf16.mxu0 0
        %3391 = vmatpush1.bf16.msra.mxu0 0
        %3392 = vmatprep.subr.bf16.mxu0 0
        %3393 = vmatpush1.bf16.msra.mxu0 0
        %3394 = vmatprep.subr.bf16.mxu0 0
        %3395 = vmatpush1.bf16.msra.mxu0 0
        %3396 = vmatprep.subr.bf16.mxu0 0
        %3397 = vmatpush1.bf16.msra.mxu0 0
        %3398 = vmatprep.subr.bf16.mxu0 0
        %3399 = vmatpush1.bf16.msra.mxu0 0
        %3400 = vmatprep.subr.bf16.mxu0 0
        %3401 = vmatpush1.bf16.msra.mxu0 0
        %3402 = vmatprep.subr.bf16.mxu0 0
        %3403 = vmatpush1.bf16.msra.mxu0 0
        %3404 = vmatprep.mubr.bf16.mxu0 0
        %3405 = vmatmul.mubr.bf16.gmra.mrb[0].mxu0 %v3367
        %v3406 = vpop.f32.mrb[0].mxu0
        %v3407 = vadd.f32 0.0, %v3406
        %v3408 = vpop.f32.mrb[0].mxu0
        %v3409 = vpop.f32.mrb[0].mxu0
        %v3410 = vpop.f32.mrb[0].mxu0
        %3411 = vdwg.mxu0
        %3412 = vrot.lane.b32.xlu0 %v3082, 80
        %v3413 = vpop.permute.xlu0 %3412
        %3414 = vrot.lane.b32.xlu0 %v3082, 16
        %v3415 = vpop.permute.xlu0 %3414
        %v3417 = vsel %vm1926, %v3413, 0
        %v3420 = vsel %vm1926, %v3415, 0
        %3422 = vmatprep.subr.bf16.mxu0 0
        %3423 = vmatpush1.bf16.xpose.msra.mxu0 %v3420
        %3424 = vmatprep.subr.bf16.mxu0 0
        %3425 = vmatpush1.bf16.xpose.msra.mxu0 0
        %3426 = vmatprep.subr.bf16.mxu0 0
        %3427 = vmatpush1.bf16.xpose.msra.mxu0 0
        %3428 = vmatprep.subr.bf16.mxu0 0
        %3429 = vmatpush1.bf16.xpose.msra.mxu0 0
        %3430 = vmatprep.subr.bf16.mxu0 0
        %3431 = vmatpush1.bf16.xpose.msra.mxu0 0
        %3432 = vmatprep.subr.bf16.mxu0 0
        %3433 = vmatpush1.bf16.xpose.msra.mxu0 0
        %3434 = vmatprep.subr.bf16.mxu0 0
        %3435 = vmatpush1.bf16.xpose.msra.mxu0 0
        %3436 = vmatprep.subr.bf16.mxu0 0
        %3437 = vmatpush1.bf16.xpose.msra.mxu0 0
        %3438 = vmatprep.subr.bf16.mxu0 0
        %3439 = vmatpush1.bf16.xpose.msra.mxu0 0
        %3440 = vmatprep.subr.bf16.mxu0 0
        %3441 = vmatpush1.bf16.xpose.msra.mxu0 0
        %3442 = vmatprep.subr.bf16.mxu0 0
        %3443 = vmatpush1.bf16.xpose.msra.mxu0 0
        %3444 = vmatprep.subr.bf16.mxu0 0
        %3445 = vmatpush1.bf16.xpose.msra.mxu0 0
        %3446 = vmatprep.subr.bf16.mxu0 0
        %3447 = vmatpush1.bf16.xpose.msra.mxu0 0
        %3448 = vmatprep.subr.bf16.mxu0 0
        %3449 = vmatpush1.bf16.xpose.msra.mxu0 0
        %3450 = vmatprep.subr.bf16.mxu0 0
        %3451 = vmatpush1.bf16.xpose.msra.mxu0 0
        %3452 = vmatprep.subr.bf16.mxu0 0
        %3453 = vmatpush1.bf16.xpose.msra.mxu0 0
        %3454 = vmatprep.mubr.bf16.mxu0 0
        %3455 = vmatmul.mubr.bf16.gmra.mrb[0].mxu0 %v3417
        %v3456 = vpop.f32.mrb[0].mxu0
        %v3457 = vadd.f32 %v1549, %v3456
        %v3458 = vpop.f32.mrb[0].mxu0
        %v3459 = vpop.f32.mrb[0].mxu0
        %v3460 = vpop.f32.mrb[0].mxu0
        %3461 = vdwg.mxu0
        %v3462 = vsel %vm1973, %v3457, -inf
        %3463 = vmax.xlane.f32.xlu0 %v3462
        %v3464 = vpop.xlane.xlu0 %3463
        %v3465 = vsub.f32 %v3457, %v3464
        %v3466 = vmul.f32 %v3465, 1.442695
        %v3467 = vpow.pop %v3466
        %v3468 = vsel %vm1973, %v3467, 0.0
        %3469 = vadd.xlane.f32.xlu0 %v3468
        %v3470 = vpop.xlane.xlu0 %3469
        %v3471 = vrcp.pop %v3470
        %v3472 = vmul.f32 %v3467, %v3471
        %v3473 = vpack.c.bf16 %v3472, %v3472
        %3474 = vrot.lane.b32.xlu0 %v3083, 80
        %v3475 = vpop.permute.xlu0 %3474
        %v3477 = vsel %vm1973, %v3473, 0
        %v3480 = vsel %vm1989, %v3475, 0
        %3482 = vmatprep.subr.bf16.mxu0 0
        %3483 = vmatpush1.bf16.msra.mxu0 %v3480
        %3484 = vmatprep.subr.bf16.mxu0 0
        %3485 = vmatpush1.bf16.msra.mxu0 0
        %3486 = vmatprep.subr.bf16.mxu0 0
        %3487 = vmatpush1.bf16.msra.mxu0 0
        %3488 = vmatprep.subr.bf16.mxu0 0
        %3489 = vmatpush1.bf16.msra.mxu0 0
        %3490 = vmatprep.subr.bf16.mxu0 0
        %3491 = vmatpush1.bf16.msra.mxu0 0
        %3492 = vmatprep.subr.bf16.mxu0 0
        %3493 = vmatpush1.bf16.msra.mxu0 0
        %3494 = vmatprep.subr.bf16.mxu0 0
        %3495 = vmatpush1.bf16.msra.mxu0 0
        %3496 = vmatprep.subr.bf16.mxu0 0
        %3497 = vmatpush1.bf16.msra.mxu0 0
        %3498 = vmatprep.subr.bf16.mxu0 0
        %3499 = vmatpush1.bf16.msra.mxu0 0
        %3500 = vmatprep.subr.bf16.mxu0 0
        %3501 = vmatpush1.bf16.msra.mxu0 0
        %3502 = vmatprep.subr.bf16.mxu0 0
        %3503 = vmatpush1.bf16.msra.mxu0 0
        %3504 = vmatprep.subr.bf16.mxu0 0
        %3505 = vmatpush1.bf16.msra.mxu0 0
        %3506 = vmatprep.subr.bf16.mxu0 0
        %3507 = vmatpush1.bf16.msra.mxu0 0
        %3508 = vmatprep.subr.bf16.mxu0 0
        %3509 = vmatpush1.bf16.msra.mxu0 0
        %3510 = vmatprep.subr.bf16.mxu0 0
        %3511 = vmatpush1.bf16.msra.mxu0 0
        %3512 = vmatprep.subr.bf16.mxu0 0
        %3513 = vmatpush1.bf16.msra.mxu0 0
        %3514 = vmatprep.mubr.bf16.mxu0 0
        %3515 = vmatmul.mubr.bf16.gmra.mrb[0].mxu0 %v3477
        %v3516 = vpop.f32.mrb[0].mxu0
        %v3517 = vadd.f32 0.0, %v3516
        %v3518 = vpop.f32.mrb[0].mxu0
        %v3519 = vpop.f32.mrb[0].mxu0
        %v3520 = vpop.f32.mrb[0].mxu0
        %3521 = vdwg.mxu0
        %3523 = vrot.lane.b32.xlu0 %v3297, 16
        %v3524 = vpop.permute.xlu0 %3523
        %3527 = vrot.lane.b32.xlu0 %v3407, 32
        %v3528 = vpop.permute.xlu0 %3527
        %3531 = vrot.lane.b32.xlu0 %v3517, 48
        %v3532 = vpop.permute.xlu0 %3531
        %v3534 = vsel %vm1926, %v3186, %v3524
        %v3535 = vsel %vm2377, %v3534, %v3528
        %v3536 = vsel %vm2379, %v3535, %v3532
        %s3537 = scalar_lea.vmem [#allocation4], 32
        %v3538 = vld [vmem:[%s3537] sm:$0xf]
        %v3539 = vld [vmem:[%s3537 + $0x4] sm:$0xf]
        %v3540 = vld [vmem:[%s3537 + $0x8] sm:$0xf]
        %v3541 = vld [vmem:[%s3537 + $0xc] sm:$0xf]
        %v3542 = vld [vmem:[%s3537 + $0x10] sm:$0xf]
        %v3543 = vld [vmem:[%s3537 + $0x14] sm:$0xf]
        %v3544 = vld [vmem:[%s3537 + $0x18] sm:$0xf]
        %v3545 = vld [vmem:[%s3537 + $0x1c] sm:$0xf]
        %v3546 = vpack.c.bf16 %v3536, %v3536
        %v3555 = vunpack.c.l.b16 %v3538
        %v3556 = vunpack.c.l.b16 %v3539
        %v3557 = vunpack.c.l.b16 %v3540
        %v3558 = vunpack.c.l.b16 %v3541
        %v3559 = vunpack.c.l.b16 %v3542
        %v3560 = vunpack.c.l.b16 %v3543
        %v3561 = vunpack.c.l.b16 %v3544
        %v3562 = vunpack.c.l.b16 %v3545
        %v3563 = vpack.c.b16 %v3556, %v3555
        %v3564 = vpack.c.b16 %v3558, %v3557
        %v3565 = vpack.c.b16 %v3560, %v3559
        %v3566 = vpack.c.b16 %v3562, %v3561
        %v3572 = vsel %vm1552, %v3546, 0
        %3574 = vmatprep.subr.bf16.mxu0 0
        %3575 = vmatpush1.bf16.msra.mxu0 %v3563
        %3576 = vmatprep.subr.bf16.mxu0 0
        %3577 = vmatpush1.bf16.msra.mxu0 %v3564
        %3578 = vmatprep.subr.bf16.mxu0 0
        %3579 = vmatpush1.bf16.msra.mxu0 %v3565
        %3580 = vmatprep.subr.bf16.mxu0 0
        %3581 = vmatpush1.bf16.msra.mxu0 %v3566
        %3582 = vmatprep.subr.bf16.mxu0 0
        %3583 = vmatpush1.bf16.msra.mxu0 0
        %3584 = vmatprep.subr.bf16.mxu0 0
        %3585 = vmatpush1.bf16.msra.mxu0 0
        %3586 = vmatprep.subr.bf16.mxu0 0
        %3587 = vmatpush1.bf16.msra.mxu0 0
        %3588 = vmatprep.subr.bf16.mxu0 0
        %3589 = vmatpush1.bf16.msra.mxu0 0
        %3590 = vmatprep.subr.bf16.mxu0 0
        %3591 = vmatpush1.bf16.msra.mxu0 0
        %3592 = vmatprep.subr.bf16.mxu0 0
        %3593 = vmatpush1.bf16.msra.mxu0 0
        %3594 = vmatprep.subr.bf16.mxu0 0
        %3595 = vmatpush1.bf16.msra.mxu0 0
        %3596 = vmatprep.subr.bf16.mxu0 0
        %3597 = vmatpush1.bf16.msra.mxu0 0
        %3598 = vmatprep.subr.bf16.mxu0 0
        %3599 = vmatpush1.bf16.msra.mxu0 0
        %3600 = vmatprep.subr.bf16.mxu0 0
        %3601 = vmatpush1.bf16.msra.mxu0 0
        %3602 = vmatprep.subr.bf16.mxu0 0
        %3603 = vmatpush1.bf16.msra.mxu0 0
        %3604 = vmatprep.subr.bf16.mxu0 0
        %3605 = vmatpush1.bf16.msra.mxu0 0
        %3606 = vmatprep.mubr.bf16.mxu0 0
        %3607 = vmatmul.mubr.bf16.gmra.mrb[0].mxu0 %v3572
        %v3608 = vpop.f32.mrb[0].mxu0
        %v3609 = vadd.f32 0.0, %v3608
        %v3610 = vpop.f32.mrb[0].mxu0
        %v3611 = vpop.f32.mrb[0].mxu0
        %v3612 = vpop.f32.mrb[0].mxu0
        %3613 = vdwg.mxu0
        %v3614 = vadd.f32 %v2943, %v3609
        %s3615 = scalar_lea.vmem [#allocation6], 1
        %v3616 = vld [vmem:[%s3615] sm:$0x1]
        %v3618 = vlaneseq
        %v3619 = vshrl.u32 %v3618, 7
        %v3620 = vsub.s32 0, %v3619
        %v3621 = vrot.slane %v3616, %v3620
        %v3623 = vadd.f32 %v3614, %v3621
        %s3624 = scalar_lea.vmem %s5, 5
        %v3625 = vld [vmem:[%s3624] sm:$0x1]
        %s3626 = scalar_lea.vmem [#allocation2], 5
        %v3627 = vld [vmem:[%s3626] sm:$0x1]
        %v3628 = vsel %vm1552, %v3623, 0.0
        %3629 = vadd.xlane.f32.xlu0 %v3628
        %v3630 = vpop.xlane.xlu0 %3629
        %v3631 = vmul.f32 %v3630, %v1556
        %v3632 = vsub.f32 %v3623, %v3631
        %v3633 = vmul.f32 %v3632, %v3632
        %v3634 = vsel %vm1552, %v3633, 0.0
        %3635 = vadd.xlane.f32.xlu0 %v3634
        %v3636 = vpop.xlane.xlu0 %3635
        %v3637 = vmul.f32 %v3636, %v1556
        %v3638 = vadd.f32 %v3637, 1e-05
        %v3639 = vrsqrt.pop %v3638
        %v3640 = vmul.f32 %v3632, %v3639
        %v3642 = vlaneseq
        %v3643 = vshrl.u32 %v3642, 7
        %v3644 = vsub.s32 0, %v3643
        %v3645 = vrot.slane %v3625, %v3644
        %v3647 = vmul.f32 %v3640, %v3645
        %v3649 = vlaneseq
        %v3650 = vshrl.u32 %v3649, 7
        %v3651 = vsub.s32 0, %v3650
        %v3652 = vrot.slane %v3627, %v3651
        %v3654 = vadd.f32 %v3647, %v3652
        %s3655 = scalar_lea.vmem [#allocation7], 96
        %v3656 = vld [vmem:[%s3655] sm:$0xf]
        %v3657 = vld [vmem:[%s3655 + $0x4] sm:$0xf]
        %v3658 = vld [vmem:[%s3655 + $0x8] sm:$0xf]
        %v3659 = vld [vmem:[%s3655 + $0xc] sm:$0xf]
        %v3660 = vld [vmem:[%s3655 + $0x10] sm:$0xf]
        %v3661 = vld [vmem:[%s3655 + $0x14] sm:$0xf]
        %v3662 = vld [vmem:[%s3655 + $0x18] sm:$0xf]
        %v3663 = vld [vmem:[%s3655 + $0x1c] sm:$0xf]
        %v3664 = vpack.c.bf16 %v3654, %v3654
        %s3665 = scalar_lea.vmem [#allocation9], 3
        %v3666 = vld [vmem:[%s3665] sm:$0x1]
        %v3668 = vlaneseq
        %v3669 = vshrl.u32 %v3668, 7
        %v3670 = vsub.s32 0, %v3669
        %v3671 = vrot.slane %v3666, %v3670
        %v3681 = vunpack.c.l.b16 %v3656
        %v3682 = vunpack.c.l.b16 %v3657
        %v3683 = vunpack.c.l.b16 %v3658
        %v3684 = vunpack.c.l.b16 %v3659
        %v3685 = vunpack.c.l.b16 %v3660
        %v3686 = vunpack.c.l.b16 %v3661
        %v3687 = vunpack.c.l.b16 %v3662
        %v3688 = vunpack.c.l.b16 %v3663
        %v3689 = vpack.c.b16 %v3682, %v3681
        %v3690 = vpack.c.b16 %v3684, %v3683
        %v3691 = vpack.c.b16 %v3686, %v3685
        %v3692 = vpack.c.b16 %v3688, %v3687
        %v3698 = vsel %vm1552, %v3664, 0
        %3700 = vmatprep.subr.bf16.mxu0 0
        %3701 = vmatpush1.bf16.msra.mxu0 %v3689
        %3702 = vmatprep.subr.bf16.mxu0 0
        %3703 = vmatpush1.bf16.msra.mxu0 %v3690
        %3704 = vmatprep.subr.bf16.mxu0 0
        %3705 = vmatpush1.bf16.msra.mxu0 %v3691
        %3706 = vmatprep.subr.bf16.mxu0 0
        %3707 = vmatpush1.bf16.msra.mxu0 %v3692
        %3708 = vmatprep.subr.bf16.mxu0 0
        %3709 = vmatpush1.bf16.msra.mxu0 0
        %3710 = vmatprep.subr.bf16.mxu0 0
        %3711 = vmatpush1.bf16.msra.mxu0 0
        %3712 = vmatprep.subr.bf16.mxu0 0
        %3713 = vmatpush1.bf16.msra.mxu0 0
        %3714 = vmatprep.subr.bf16.mxu0 0
        %3715 = vmatpush1.bf16.msra.mxu0 0
        %3716 = vmatprep.subr.bf16.mxu0 0
        %3717 = vmatpush1.bf16.msra.mxu0 0
        %3718 = vmatprep.subr.bf16.mxu0 0
        %3719 = vmatpush1.bf16.msra.mxu0 0
        %3720 = vmatprep.subr.bf16.mxu0 0
        %3721 = vmatpush1.bf16.msra.mxu0 0
        %3722 = vmatprep.subr.bf16.mxu0 0
        %3723 = vmatpush1.bf16.msra.mxu0 0
        %3724 = vmatprep.subr.bf16.mxu0 0
        %3725 = vmatpush1.bf16.msra.mxu0 0
        %3726 = vmatprep.subr.bf16.mxu0 0
        %3727 = vmatpush1.bf16.msra.mxu0 0
        %3728 = vmatprep.subr.bf16.mxu0 0
        %3729 = vmatpush1.bf16.msra.mxu0 0
        %3730 = vmatprep.subr.bf16.mxu0 0
        %3731 = vmatpush1.bf16.msra.mxu0 0
        %3732 = vmatprep.mubr.bf16.mxu0 0
        %3733 = vmatmul.mubr.bf16.gmra.mrb[0].mxu0 %v3698
        %v3734 = vpop.f32.mrb[0].mxu0
        %v3735 = vadd.f32 %v3671, %v3734
        %v3736 = vpop.f32.mrb[0].mxu0
        %v3737 = vpop.f32.mrb[0].mxu0
        %v3738 = vpop.f32.mrb[0].mxu0
        %3739 = vdwg.mxu0
        %v3740 = vxor.u32 %v3735, 2147483648
        %v3741 = vmul.f32 %v3740, 1.442695
        %v3742 = vpow.pop %v3741
        %v3743 = vadd.f32 %v3742, 1.0
        %v3744 = vrcp.pop %v3743
        %v3745 = vmul.f32 1.0, %v3744
        %v3746 = vmul.f32 %v3735, %v3745
        %s3747 = scalar_lea.vmem %s13, 192
        %v3748 = vld [vmem:[%s3747] sm:$0xf]
        %v3749 = vld [vmem:[%s3747 + $0x4] sm:$0xf]
        %v3750 = vld [vmem:[%s3747 + $0x8] sm:$0xf]
        %v3751 = vld [vmem:[%s3747 + $0xc] sm:$0xf]
        %v3752 = vld [vmem:[%s3747 + $0x10] sm:$0xf]
        %v3753 = vld [vmem:[%s3747 + $0x14] sm:$0xf]
        %v3754 = vld [vmem:[%s3747 + $0x18] sm:$0xf]
        %v3755 = vld [vmem:[%s3747 + $0x1c] sm:$0xf]
        %v3756 = vld [vmem:[%s3747 + $0x20] sm:$0xf]
        %v3757 = vld [vmem:[%s3747 + $0x24] sm:$0xf]
        %v3758 = vld [vmem:[%s3747 + $0x28] sm:$0xf]
        %v3759 = vld [vmem:[%s3747 + $0x2c] sm:$0xf]
        %v3760 = vld [vmem:[%s3747 + $0x30] sm:$0xf]
        %v3761 = vld [vmem:[%s3747 + $0x34] sm:$0xf]
        %v3762 = vld [vmem:[%s3747 + $0x38] sm:$0xf]
        %v3763 = vld [vmem:[%s3747 + $0x3c] sm:$0xf]
        %v3764 = vpack.c.bf16 %v3746, %v3746
        %s3765 = scalar_lea.vmem [#allocation10], 3
        %v3766 = vld [vmem:[%s3765] sm:$0x1]
        %v3768 = vlaneseq
        %v3769 = vshrl.u32 %v3768, 7
        %v3770 = vsub.s32 0, %v3769
        %v3771 = vrot.slane %v3766, %v3770
        %v3789 = vunpack.c.l.b16 %v3748
        %v3790 = vunpack.c.l.b16 %v3749
        %v3791 = vunpack.c.l.b16 %v3750
        %v3792 = vunpack.c.l.b16 %v3751
        %v3793 = vunpack.c.l.b16 %v3752
        %v3794 = vunpack.c.l.b16 %v3753
        %v3795 = vunpack.c.l.b16 %v3754
        %v3796 = vunpack.c.l.b16 %v3755
        %v3797 = vunpack.c.l.b16 %v3756
        %v3798 = vunpack.c.l.b16 %v3757
        %v3799 = vunpack.c.l.b16 %v3758
        %v3800 = vunpack.c.l.b16 %v3759
        %v3801 = vunpack.c.l.b16 %v3760
        %v3802 = vunpack.c.l.b16 %v3761
        %v3803 = vunpack.c.l.b16 %v3762
        %v3804 = vunpack.c.l.b16 %v3763
        %v3805 = vpack.c.b16 %v3790, %v3789
        %v3806 = vpack.c.b16 %v3792, %v3791
        %v3807 = vpack.c.b16 %v3794, %v3793
        %v3808 = vpack.c.b16 %v3796, %v3795
        %v3809 = vpack.c.b16 %v3798, %v3797
        %v3810 = vpack.c.b16 %v3800, %v3799
        %v3811 = vpack.c.b16 %v3802, %v3801
        %v3812 = vpack.c.b16 %v3804, %v3803
        %3821 = vmatprep.subr.bf16.mxu0 0
        %3822 = vmatpush1.bf16.msra.mxu0 %v3805
        %3823 = vmatprep.subr.bf16.mxu0 0
        %3824 = vmatpush1.bf16.msra.mxu0 %v3806
        %3825 = vmatprep.subr.bf16.mxu0 0
        %3826 = vmatpush1.bf16.msra.mxu0 %v3807
        %3827 = vmatprep.subr.bf16.mxu0 0
        %3828 = vmatpush1.bf16.msra.mxu0 %v3808
        %3829 = vmatprep.subr.bf16.mxu0 0
        %3830 = vmatpush1.bf16.msra.mxu0 %v3809
        %3831 = vmatprep.subr.bf16.mxu0 0
        %3832 = vmatpush1.bf16.msra.mxu0 %v3810
        %3833 = vmatprep.subr.bf16.mxu0 0
        %3834 = vmatpush1.bf16.msra.mxu0 %v3811
        %3835 = vmatprep.subr.bf16.mxu0 0
        %3836 = vmatpush1.bf16.msra.mxu0 %v3812
        %3837 = vmatprep.subr.bf16.mxu0 0
        %3838 = vmatpush1.bf16.msra.mxu0 0
        %3839 = vmatprep.subr.bf16.mxu0 0
        %3840 = vmatpush1.bf16.msra.mxu0 0
        %3841 = vmatprep.subr.bf16.mxu0 0
        %3842 = vmatpush1.bf16.msra.mxu0 0
        %3843 = vmatprep.subr.bf16.mxu0 0
        %3844 = vmatpush1.bf16.msra.mxu0 0
        %3845 = vmatprep.subr.bf16.mxu0 0
        %3846 = vmatpush1.bf16.msra.mxu0 0
        %3847 = vmatprep.subr.bf16.mxu0 0
        %3848 = vmatpush1.bf16.msra.mxu0 0
        %3849 = vmatprep.subr.bf16.mxu0 0
        %3850 = vmatpush1.bf16.msra.mxu0 0
        %3851 = vmatprep.subr.bf16.mxu0 0
        %3852 = vmatpush1.bf16.msra.mxu0 0
        %3853 = vmatprep.mubr.bf16.mxu0 0
        %3854 = vmatmul.mubr.bf16.gmra.mrb[0].mxu0 %v3764
        %v3855 = vpop.f32.mrb[0].mxu0
        %v3856 = vadd.f32 %v3771, %v3855
        %v3857 = vpop.f32.mrb[0].mxu0
        %v3858 = vpop.f32.mrb[0].mxu0
        %v3859 = vpop.f32.mrb[0].mxu0
        %3860 = vdwg.mxu0
        %v3861 = vmul.f32 %v3856, 0.5
        %v3862 = vadd.f32 %v3623, %v3861
        %v3863 = vld [vmem:[#allocation12] sm:$0x1]
        %v3864 = vld [vmem:[#allocation13] sm:$0x1]
        %v3865 = vsel %vm1552, %v3862, 0.0
        %3866 = vadd.xlane.f32.xlu0 %v3865
        %v3867 = vpop.xlane.xlu0 %3866
        %v3868 = vmul.f32 %v3867, %v1556
        %v3869 = vsub.f32 %v3862, %v3868
        %v3870 = vmul.f32 %v3869, %v3869
        %v3871 = vsel %vm1552, %v3870, 0.0
        %3872 = vadd.xlane.f32.xlu0 %v3871
        %v3873 = vpop.xlane.xlu0 %3872
        %v3874 = vmul.f32 %v3873, %v1556
        %v3875 = vadd.f32 %v3874, 1e-05
        %v3876 = vrsqrt.pop %v3875
        %v3877 = vmul.f32 %v3869, %v3876
        %v3879 = vlaneseq
        %v3880 = vshrl.u32 %v3879, 7
        %v3881 = vsub.s32 0, %v3880
        %v3882 = vrot.slane %v3863, %v3881
        %v3884 = vmul.f32 %v3877, %v3882
        %v3886 = vlaneseq
        %v3887 = vshrl.u32 %v3886, 7
        %v3888 = vsub.s32 0, %v3887
        %v3889 = vrot.slane %v3864, %v3888
        %v3891 = vadd.f32 %v3884, %v3889
        %vm3892 = vcmask 522240
        %3893 = vst.msk [vmem:[%s659] sm:$0x7f] %vm3892, %v3891
        %p3894 = scmp.lt.s32.totalorder %s33, 1
        %s3895 = scalar_select %p3894, %s33, 1
        %s3896 = smul.addr %s3895, 8
        %s3897 = scalar_lea.vmem %s17, %s3896
        // Predicated region
        $region121: #{nemo_encoder_forward.1} parent=87 // pred_check
          %p3898 = pneg %p413
        $region122: #{nemo_encoder_forward.1} parent=87 // pred_check_branch
          %3900 = sbr.rel (%p3898) target = $region124
        $region123: #{nemo_encoder_forward.1} parent=87 // pred_region
          _
        $region124: #{nemo_encoder_forward.1} parent=87 // pred_fallthru
          _
      $region88: #{nemo_encoder_forward.1} parent=5 // pred_fallthru
        _
      %p3901 = scmp.le.s32.totalorder 2, %s28
      // Predicated region
      $region125: #{nemo_encoder_forward.1} parent=5 // pred_check
        %p3902 = pneg %p3901
      $region126: #{nemo_encoder_forward.1} parent=5 // pred_check_branch
        %3904 = sbr.rel (%p3902) target = $region128
      $region127: #{nemo_encoder_forward.1} parent=5 // pred_region
        %s3905 = ssub.s32 %s28, 2
        // Predicated region
        $region129: #{nemo_encoder_forward.1} parent=127 // pred_check
          %p3906 = pneg %p419
        $region130: #{nemo_encoder_forward.1} parent=127 // pred_check_branch
          %3908 = sbr.rel (%p3906) target = $region132
        $region131: #{nemo_encoder_forward.1} parent=127 // pred_region
          %p3909 = scmp.lt.s32.totalorder %s34, 1
          %s3910 = scalar_select %p3909, %s34, 1
          %s3911 = smul.addr %s3910, 8
          %s3912 = scalar_lea.vmem %s17, %s3911
        $region132: #{nemo_encoder_forward.1} parent=127 // pred_fallthru
          _
      $region128: #{nemo_encoder_forward.1} parent=5 // pred_fallthru
        _
    $region6: #{nemo_encoder_forward.1} parent=1 // loop_footer
      %s32 = sadd.s32 1, %s28
    $region7: #{nemo_encoder_forward.1} parent=1 // loop_footer_branch
      %27 = sbr.rel target = $region3
    $region8: #{nemo_encoder_forward.1} parent=1 // loop_exit
      _
    %3913 = vsyncpa [#allocation3], 1
    %s3914 = scalar_lea.sflag [#allocation3], 1
    %3915 = vsyncpa %s3914, 1
    %3916 = vsyncpa [#allocation5], 1
    %3917 = vsyncpa [#allocation8], 1
    %3918 = vsyncpa [#allocation11], 1
    %3919 = vsyncpa [#allocation14], 1

</llo_original>
